<compile_context>
chip_gen: v7x
topology: tpu7x:2x2x1
jax: 0.10.0
libtpu: 0.0.40
codegen_flags: <defaults>
</compile_context>

<pallas_src>
import functools

import jax
import jax.numpy as jnp
from jax.experimental import pallas as pl
from jax.experimental.pallas import tpu as pltpu

# Run the pure-JAX reference / offline weight composition at full f32 matmul
# precision so the f32-accumulating kernel matches to tight tolerance.
jax.config.update("jax_default_matmul_precision", "highest")

_LANE = 128


def _round_up(x, m):
    return ((x + m - 1) // m) * m


# ----------------------------------------------------------------------------
# Kernels
# ----------------------------------------------------------------------------
def _flnssm_step_kernel(n_hid_layers, lin_pad, *refs):
    """One forward step on VMEM-resident tiles.

    refs = (z_ref, ud_ref, Wz_ref, Wud_ref, bias_ref,
            [Whid_ref, bhid_ref,] Wlast_ref, out_ref)

    z    : (bt, S)                 ud : (bt, I+nd)
    Wz   : (S, lin_pad+hid_pad)    Wud: (I+nd, lin_pad+hid_pad)
    bias : (1, lin_pad+hid_pad)    Whid: (nh-1, hid_pad, hid_pad)
    bhid : (nh-1, 1, hid_pad)      Wlast: (hid_pad, lin_pad)
    out  : (bt, lin_pad)  columns = [dz (S) | y (O) | zero pad]  (lane-dense)
    """
    if n_hid_layers > 1:
        (z_ref, ud_ref, Wz_ref, Wud_ref, b_ref, Whid_ref, bhid_ref,
         Wl_ref, out_ref) = refs
    else:
        z_ref, ud_ref, Wz_ref, Wud_ref, b_ref, Wl_ref, out_ref = refs
        Whid_ref = bhid_ref = None

    front = (jnp.dot(z_ref[...], Wz_ref[...], preferred_element_type=jnp.float32)
             + jnp.dot(ud_ref[...], Wud_ref[...],
                       preferred_element_type=jnp.float32)
             + b_ref[...])                        # VPU broadcast add of bias row

    lin = front[:, :lin_pad]                      # [dz_lin | y | 0]  (128-aligned)
    alpha = jnp.tanh(front[:, lin_pad:])          # (bt, hid_pad)

    for k in range(n_hid_layers - 1):             # static trip count -> unrolled
        alpha = jnp.tanh(
            jnp.dot(alpha, Whid_ref[k], preferred_element_type=jnp.float32)
            + bhid_ref[k])

    out_ref[...] = (lin + jnp.dot(alpha, Wl_ref[...],
                                  preferred_element_type=jnp.float32)
                    ).astype(out_ref.dtype)


def _flnssm_seq_kernel(n_hid_layers, lin_pad, *refs):
    """Full time recurrence (z_{t+1} = dz_t); grid axis 0 == time (sequential).

    refs = (z0_ref, ud_ref, Wz_ref, Wud_ref, bias_ref,
            [Whid_ref, bhid_ref,] Wlast_ref, out_ref, z_scr)

    z0  : (B, lin_pad)        initial state padded into the [dz|y|0] lane slab
    ud  : (1, B, I+nd)        this step's [u, d]
    Wz  : (lin_pad, tot)      zero rows for the y / padding lanes of the slab
    out : (1, B, lin_pad)     this step's [dz | y | 0]
    z_scr: (B, lin_pad) f32   VMEM scratch carrying the state across steps
    """
    if n_hid_layers > 1:
        (z0_ref, ud_ref, Wz_ref, Wud_ref, b_ref, Whid_ref, bhid_ref, Wl_ref,
         out_ref, z_scr) = refs
    else:
        (z0_ref, ud_ref, Wz_ref, Wud_ref, b_ref, Wl_ref, out_ref, z_scr) = refs
        Whid_ref = bhid_ref = None

    @pl.when(pl.program_id(0) == 0)
    def _():
        z_scr[...] = z0_ref[...].astype(jnp.float32)

    z = z_scr[...]
    ud = ud_ref[0]

    front = (jnp.dot(z, Wz_ref[...], preferred_element_type=jnp.float32)
             + jnp.dot(ud, Wud_ref[...], preferred_element_type=jnp.float32)
             + b_ref[...])

    lin = front[:, :lin_pad]
    alpha = jnp.tanh(front[:, lin_pad:])
    for k in range(n_hid_layers - 1):
        alpha = jnp.tanh(
            jnp.dot(alpha, Whid_ref[k], preferred_element_type=jnp.float32)
            + bhid_ref[k])

    step_out = lin + jnp.dot(alpha, Wl_ref[...],
                             preferred_element_type=jnp.float32)
    out_ref[0] = step_out.astype(out_ref.dtype)
    # Carry the whole lane slab as the next state: its y / pad lanes hit zero
    # rows of Wz next step, so no sub-lane slice is needed per step.
    z_scr[...] = step_out


# ----------------------------------------------------------------------------
# One-time weight packing / composition (hoisted out of the forward path)
# ----------------------------------------------------------------------------
def pack_params(params, input_dim, dist_dim, n_hid_layers):
    A, B, C = params["A"], params["B"], params["C"]
    S = A.shape[0]
    O = C.shape[0]
    H = params["Wy"].shape[0]
    I, nd = input_dim, dist_dim

    lin_pad = _round_up(S + O, _LANE)   # lanes for [dz | y | 0]
    hid_pad = _round_up(H, _LANE)       # lanes for alpha
    tot = lin_pad + hid_pad

    A_t = A.T                           # (S, S)
    B_t = B.T                           # (I+nd, S)
    Bu_t = B_t[:I]                      # (I, S)
    Bd_t = B_t[I:]                      # (nd, S)
    C_t = C.T                           # (S, O)
    Wy_t = params["Wy"].T               # (O, H)
    Wd_t = params["Wd"].T               # (nd, H)
    Wout_t = params["Wout"].T           # (H, I)
    b_in = params["b_in"]               # (H,)
    b_out = params["b_out"]             # (I,)

    # Offline compositions (exact linear-algebra identities).
    CWy = C_t @ Wy_t                    # (S, H):  z @ CWy == (z@C.T) @ Wy.T
    W_last = Wout_t @ Bu_t              # (H, S):  alpha contribution to dz
    b_last = b_out[None, :] @ Bu_t      # (1, S):  b_out contribution to dz

    def front_rows(rows, dz_blk, y_blk, hid_blk):
        """Assemble (rows, tot) = [dz cols | y cols | pad || alpha_pre cols | pad]."""
        w = jnp.zeros((rows, tot), jnp.float32)
        if dz_blk is not None:
            w = w.at[:, :S].set(dz_blk)
        if y_blk is not None:
            w = w.at[:, S:S + O].set(y_blk)
        if hid_blk is not None:
            w = w.at[:, lin_pad:lin_pad + H].set(hid_blk)
        return w

    W_z = front_rows(S, A_t, C_t, CWy)                      # (S, tot)
    W_u = front_rows(I, Bu_t, None, None)                   # (I, tot)
    W_d = front_rows(nd, Bd_t, None, Wd_t)                  # (nd, tot)
    W_ud = jnp.concatenate([W_u, W_d], axis=0)              # (I+nd, tot)
    bias = front_rows(1, b_last, None, b_in[None, :])       # (1, tot)

    # Sequence kernel carries the full [dz | y | 0] lane slab as its state, so
    # its z-weight is padded to lin_pad rows (zero rows for the y / pad lanes).
    W_z_state = jnp.zeros((lin_pad, tot), jnp.float32).at[:S].set(W_z)

    W_last_pad = (jnp.zeros((hid_pad, lin_pad), jnp.float32)
                  .at[:H, :S].set(W_last))

    packed = {"W_z": W_z, "W_z_state": W_z_state, "W_ud": W_ud,
              "bias": bias, "W_last": W_last_pad}
    if n_hid_layers > 1:
        packed["Whid"] = jnp.stack(
            [jnp.zeros((hid_pad, hid_pad), jnp.float32).at[:H, :H].set(w.T)
             for w in params["Whid"]], axis=0)
        packed["bhid"] = jnp.stack(
            [jnp.zeros((1, hid_pad), jnp.float32).at[0, :H].set(b)
             for b in params["bhid"]], axis=0)
    return packed


# ----------------------------------------------------------------------------
# Cost hint
# ----------------------------------------------------------------------------
def _cost_estimate(batch, steps, k_state, k_ud, tot, hid_pad, lin_pad,
                   n_hid_layers, operands, out_bytes):
    flops = 2 * batch * steps * (
        k_state * tot + k_ud * tot
        + (n_hid_layers - 1) * hid_pad * hid_pad + hid_pad * lin_pad)
    trans = batch * steps * hid_pad * n_hid_layers
    bytes_accessed = int(sum(int(op.size) * op.dtype.itemsize
                             for op in operands)) + int(out_bytes)
    return pl.CostEstimate(flops=int(flops), transcendentals=int(trans),
                           bytes_accessed=bytes_accessed)


# ----------------------------------------------------------------------------
# Wrappers
# ----------------------------------------------------------------------------
@functools.partial(jax.jit, static_argnames=("n_hid_layers", "state_dim",
                                             "output_dim", "batch_tile"))
def flnssm_forward(inp, state, packed, *, n_hid_layers, state_dim, output_dim,
                   batch_tile=None):
    """Single forward step.  inp: (batch, I+nd) = [u, d]; state: (batch, S)."""
    batch = inp.shape[0]
    dtype = inp.dtype
    state = state.astype(dtype)

    Wz, Wud, bias, Wl = (packed["W_z"], packed["W_ud"], packed["bias"],
                         packed["W_last"])
    hid_pad, lin_pad = Wl.shape
    tot = Wz.shape[1]

    if n_hid_layers > 1:
        operands = (state, inp, Wz, Wud, bias, packed["Whid"], packed["bhid"], Wl)
    else:
        operands = (state, inp, Wz, Wud, bias, Wl)

    kernel = functools.partial(_flnssm_step_kernel, n_hid_layers, lin_pad)
    out_shape = jax.ShapeDtypeStruct((batch, lin_pad), dtype)
    cost = _cost_estimate(batch, 1, state_dim, inp.shape[1], tot, hid_pad,
                          lin_pad, n_hid_layers, operands,
                          batch * lin_pad * dtype.itemsize)

    if batch_tile is None or batch_tile >= batch:
        # Default path (v5e / v6e single TensorCore): grid-less, everything
        # VMEM-resident, one lane-dense store.
        vmem = pl.BlockSpec(memory_space=pltpu.MemorySpace.VMEM)
        out = pl.pallas_call(
            kernel,
            out_shape=out_shape,
            in_specs=[vmem] * len(operands),
            out_specs=vmem,
            cost_estimate=cost,
        )(*operands)
    else:
        # v7x (2 TensorCores): pass batch_tile = round_up(batch // 2, 8) so the
        # grid is exactly (2,) "parallel" tiles.  Weights stay resident via
        # constant index_maps.  VMEM capacity is not a concern at these sizes.
        assert batch % batch_tile == 0, "batch must divide evenly into tiles"
        assert batch_tile % 8 == 0, "batch_tile must be a multiple of 8"
        grid = (batch // batch_tile,)

        def resident(arr):
            nd = arr.ndim
            return pl.BlockSpec(arr.shape, lambda i, _nd=nd: (0,) * _nd)

        in_specs = [pl.BlockSpec((batch_tile, state.shape[1]), lambda i: (i, 0)),
                    pl.BlockSpec((batch_tile, inp.shape[1]), lambda i: (i, 0))]
        in_specs += [resident(op) for op in operands[2:]]

        out = pl.pallas_call(
            kernel,
            grid=grid,
            out_shape=out_shape,
            in_specs=in_specs,
            out_specs=pl.BlockSpec((batch_tile, lin_pad), lambda i: (i, 0)),
            compiler_params=pltpu.CompilerParams(
                dimension_semantics=("parallel",)),
            cost_estimate=cost,
        )(*operands)

    return out[:, :state_dim], out[:, state_dim:state_dim + output_dim]


@functools.partial(jax.jit, static_argnames=("n_hid_layers", "state_dim",
                                             "output_dim"))
def flnssm_forward_seq(inp_seq, state0, packed, *, n_hid_layers, state_dim,
                       output_dim):
    """Run the whole time recurrence (z_{t+1} = dz_t) in ONE kernel.

    inp_seq: (T, batch, I+nd); state0: (batch, S).
    Returns (dz_traj, y_traj) of shapes (T, batch, S) and (T, batch, O).
    """
    T, batch, ud_dim = inp_seq.shape
    dtype = inp_seq.dtype

    Wzs, Wud, bias, Wl = (packed["W_z_state"], packed["W_ud"], packed["bias"],
                          packed["W_last"])
    hid_pad, lin_pad = Wl.shape
    tot = Wzs.shape[1]

    # One-time pad of the initial state into the [dz | y | 0] lane slab carried
    # by the kernel (padded lanes only ever hit zero rows of W_z_state).
    z0 = jnp.zeros((batch, lin_pad), dtype).at[:, :state_dim].set(
        state0.astype(dtype))

    if n_hid_layers > 1:
        operands = (z0, inp_seq, Wzs, Wud, bias, packed["Whid"],
                    packed["bhid"], Wl)
    else:
        operands = (z0, inp_seq, Wzs, Wud, bias, Wl)

    def resident(arr):
        nd = arr.ndim
        return pl.BlockSpec(arr.shape, lambda t, _nd=nd: (0,) * _nd)

    in_specs = [resident(z0),
                pl.BlockSpec((1, batch, ud_dim), lambda t: (t, 0, 0))]
    in_specs += [resident(op) for op in operands[2:]]

    kernel = functools.partial(_flnssm_seq_kernel, n_hid_layers, lin_pad)
    cost = _cost_estimate(batch, T, lin_pad, ud_dim, tot, hid_pad, lin_pad,
                          n_hid_layers, operands,
                          T * batch * lin_pad * dtype.itemsize)

    out = pl.pallas_call(
        kernel,
        grid=(T,),
        out_shape=jax.ShapeDtypeStruct((T, batch, lin_pad), dtype),
        in_specs=in_specs,
        out_specs=pl.BlockSpec((1, batch, lin_pad), lambda t: (t, 0, 0)),
        scratch_shapes=[pltpu.VMEM((batch, lin_pad), jnp.float32)],
        compiler_params=pltpu.CompilerParams(
            dimension_semantics=("arbitrary",)),
        cost_estimate=cost,
    )(*operands)

    return out[..., :state_dim], out[..., state_dim:state_dim + output_dim]


# ----------------------------------------------------------------------------
# Pure-JAX references + PyTorch-like init
# ----------------------------------------------------------------------------
def flnssm_reference(inp, state, params, n_hid_layers, input_dim, dist_dim):
    u = inp[:, :input_dim]
    d = inp[:, input_dim:input_dim + dist_dim]
    z = state
    y = z @ params["C"].T
    alpha = jnp.tanh(y @ params["Wy"].T + params["b_in"] + d @ params["Wd"].T)
    if n_hid_layers > 1:
        for W, b in zip(params["Whid"], params["bhid"]):
            alpha = jnp.tanh(alpha @ W.T + b)
    alpha = alpha @ params["Wout"].T + params["b_out"]
    dz = z @ params["A"].T + jnp.concatenate([u + alpha, d], axis=1) @ params["B"].T
    return dz, y


def flnssm_reference_seq(inp_seq, state0, params, n_hid_layers, input_dim,
                         dist_dim):
    z = state0
    dzs, ys = [], []
    for t in range(inp_seq.shape[0]):
        dz, y = flnssm_reference(inp_seq[t], z, params, n_hid_layers,
                                 input_dim, dist_dim)
        dzs.append(dz)
        ys.append(y)
        z = dz
    return jnp.stack(dzs), jnp.stack(ys)


def _init_params(key, input_dim, hidden_dim, state_dim, output_dim,
                 n_hid_layers, dist_dim):
    """Deterministic PyTorch-like init: U(-1/sqrt(fan_in), 1/sqrt(fan_in))."""
    def lin_w(k, out_dim, in_dim):
        bound = float(in_dim) ** -0.5
        return jax.random.uniform(k, (out_dim, in_dim), jnp.float32, -bound, bound)

    def lin_b(k, out_dim, in_dim):
        bound = float(in_dim) ** -0.5
        return jax.random.uniform(k, (out_dim,), jnp.float32, -bound, bound)

    n_hid = max(n_hid_layers - 1, 0)
    keys = jax.random.split(key, 8 + 2 * max(n_hid, 1))
    return {
        "A": lin_w(keys[0], state_dim, state_dim),
        "B": lin_w(keys[1], state_dim, input_dim + dist_dim),
        "C": lin_w(keys[2], output_dim, state_dim),
        "Wy": lin_w(keys[3], hidden_dim, output_dim),       # alpha_in_y.weight
        "b_in": lin_b(keys[4], hidden_dim, output_dim),     # alpha_in_y.bias
        "Wd": lin_w(keys[5], hidden_dim, dist_dim),         # alpha_in_d.weight
        "Wout": lin_w(keys[6], input_dim, hidden_dim),      # alpha_out.weight
        "b_out": lin_b(keys[7], input_dim, hidden_dim),     # alpha_out.bias
        "Whid": [lin_w(keys[8 + 2 * k], hidden_dim, hidden_dim)
                 for k in range(n_hid)],
        "bhid": [lin_b(keys[9 + 2 * k], hidden_dim, hidden_dim)
                 for k in range(n_hid)],
    }


# ----------------------------------------------------------------------------
# Demo / validation
# ----------------------------------------------------------------------------
if __name__ == "__main__":
    batch = 8
    input_dim = 3
    dist_dim = 2
    state_dim = 8
    hidden_dim = 32
    output_dim = 2
    n_hid_layers = 3          # -> 2 extra tanh(Linear(hidden, hidden)) layers
    seq_len = 32

    key = jax.random.PRNGKey(0)
    k_in, k_x, k_p, k_seq, k_in2, k_x2 = jax.random.split(key, 6)
    inp = jax.random.normal(k_in, (batch, input_dim + dist_dim), jnp.float32)
    state = jax.random.normal(k_x, (batch, state_dim), jnp.float32)
    params = _init_params(k_p, input_dim, hidden_dim, state_dim, output_dim,
                          n_hid_layers, dist_dim)

    packed = pack_params(params, input_dim, dist_dim, n_hid_layers)
    packed = jax.block_until_ready(packed)

    # (1) Single-step kernel.
    dz, y = flnssm_forward(inp, state, packed, n_hid_layers=n_hid_layers,
                           state_dim=state_dim, output_dim=output_dim)
    jax.block_until_ready((dz, y))
    dz_ref, y_ref = flnssm_reference(inp, state, params, n_hid_layers,
                                     input_dim, dist_dim)
    assert dz.shape == (batch, state_dim) and y.shape == (batch, output_dim)
    assert jnp.allclose(dz, dz_ref, atol=2e-5, rtol=2e-5)
    assert jnp.allclose(y, y_ref, atol=2e-5, rtol=2e-5)

    # (2) Whole time recurrence in one kernel (z_{t+1} = dz_t).
    inp_seq = jax.random.normal(k_seq, (seq_len, batch, input_dim + dist_dim),
                                jnp.float32)
    dz_traj, y_traj = flnssm_forward_seq(
        inp_seq, state, packed, n_hid_layers=n_hid_layers,
        state_dim=state_dim, output_dim=output_dim)
    jax.block_until_ready((dz_traj, y_traj))
    dz_traj_ref, y_traj_ref = flnssm_reference_seq(
        inp_seq, state, params, n_hid_layers, input_dim, dist_dim)
    assert dz_traj.shape == (seq_len, batch, state_dim)
    assert y_traj.shape == (seq_len, batch, output_dim)
    assert jnp.allclose(dz_traj, dz_traj_ref, atol=2e-4, rtol=2e-4)
    assert jnp.allclose(y_traj, y_traj_ref, atol=2e-4, rtol=2e-4)

    # (3) v7x-style batch-tiled single-step path: exactly two "parallel" tiles.
    big_batch = 256
    inp2 = jax.random.normal(k_in2, (big_batch, input_dim + dist_dim),
                             jnp.float32)
    state2 = jax.random.normal(k_x2, (big_batch, state_dim), jnp.float32)
    dz2, y2 = flnssm_forward(inp2, state2, packed, n_hid_layers=n_hid_layers,
                             state_dim=state_dim, output_dim=output_dim,
                             batch_tile=big_batch // 2)
    jax.block_until_ready((dz2, y2))
    dz2_ref, y2_ref = flnssm_reference(inp2, state2, params, n_hid_layers,
                                       input_dim, dist_dim)
    assert jnp.allclose(dz2, dz2_ref, atol=2e-5, rtol=2e-5)
    assert jnp.allclose(y2, y2_ref, atol=2e-5, rtol=2e-5)

    # (4) n_hid_layers == 1 configuration (no hidden stack, fewer operands).
    params1 = _init_params(k_p, input_dim, hidden_dim, state_dim, output_dim,
                           1, dist_dim)
    packed1 = pack_params(params1, input_dim, dist_dim, 1)
    packed1 = jax.block_until_ready(packed1)
    dz1, y1 = flnssm_forward(inp, state, packed1, n_hid_layers=1,
                             state_dim=state_dim, output_dim=output_dim)
    jax.block_until_ready((dz1, y1))
    dz1_ref, y1_ref = flnssm_reference(inp, state, params1, 1, input_dim,
                                       dist_dim)
    assert jnp.allclose(dz1, dz1_ref, atol=2e-5, rtol=2e-5)
    assert jnp.allclose(y1, y1_ref, atol=2e-5, rtol=2e-5)

    dz1s, y1s = flnssm_forward_seq(inp_seq, state, packed1, n_hid_layers=1,
                                   state_dim=state_dim, output_dim=output_dim)
    jax.block_until_ready((dz1s, y1s))
    dz1s_ref, y1s_ref = flnssm_reference_seq(inp_seq, state, params1, 1,
                                             input_dim, dist_dim)
    assert jnp.allclose(dz1s, dz1s_ref, atol=2e-4, rtol=2e-4)
    assert jnp.allclose(y1s, y1s_ref, atol=2e-4, rtol=2e-4)

    print("KERNEL_OK")
</pallas_src>

<mosaic_0001>
module attributes {stable_mosaic.version = 11 : i64} {
  func.func @_flnssm_step_kernel(%arg0: memref<8x8xf32, #tpu.memory_space<vmem>>, %arg1: memref<8x5xf32, #tpu.memory_space<vmem>>, %arg2: memref<8x256xf32, #tpu.memory_space<vmem>>, %arg3: memref<5x256xf32, #tpu.memory_space<vmem>>, %arg4: memref<1x256xf32, #tpu.memory_space<vmem>>, %arg5: memref<2x128x128xf32, #tpu.memory_space<vmem>>, %arg6: memref<2x1x128xf32, #tpu.memory_space<vmem>>, %arg7: memref<128x128xf32, #tpu.memory_space<vmem>>, %arg8: memref<8x128xf32, #tpu.memory_space<vmem>>) attributes {dimension_semantics = [], scalar_prefetch = 0 : i64, scratch_operands = 0 : i64, tpu.core_type = #tpu.core_type<tc>} {
    %c0 = arith.constant 0 : index
    %c0_0 = arith.constant 0 : index
    %0 = vector.load %arg0[%c0, %c0_0] : memref<8x8xf32, #tpu.memory_space<vmem>>, vector<8x8xf32>
    %c0_1 = arith.constant 0 : index
    %c0_2 = arith.constant 0 : index
    %1 = vector.load %arg2[%c0_1, %c0_2] : memref<8x256xf32, #tpu.memory_space<vmem>>, vector<8x256xf32>
    %cst = arith.constant dense<0.000000e+00> : vector<8x256xf32>
    %2 = tpu.matmul %0, %1, %cst {dimension_numbers = #tpu.dot_dimension_numbers<[1], [0], [0], [1], [0, 0, 1, 1], [], []>, precision = #tpu.contract_precision<fp32>} : vector<8x8xf32>, vector<8x256xf32>, vector<8x256xf32> -> vector<8x256xf32>
    %c0_3 = arith.constant 0 : index
    %c0_4 = arith.constant 0 : index
    %3 = vector.load %arg1[%c0_3, %c0_4] : memref<8x5xf32, #tpu.memory_space<vmem>>, vector<8x5xf32>
    %c0_5 = arith.constant 0 : index
    %c0_6 = arith.constant 0 : index
    %4 = vector.load %arg3[%c0_5, %c0_6] : memref<5x256xf32, #tpu.memory_space<vmem>>, vector<5x256xf32>
    %cst_7 = arith.constant dense<0.000000e+00> : vector<8x256xf32>
    %5 = tpu.matmul %3, %4, %cst_7 {dimension_numbers = #tpu.dot_dimension_numbers<[1], [0], [0], [1], [0, 0, 1, 1], [], []>, precision = #tpu.contract_precision<fp32>} : vector<8x5xf32>, vector<5x256xf32>, vector<8x256xf32> -> vector<8x256xf32>
    %6 = arith.addf %2, %5 : vector<8x256xf32>
    %c0_8 = arith.constant 0 : index
    %c0_9 = arith.constant 0 : index
    %7 = vector.load %arg4[%c0_8, %c0_9] : memref<1x256xf32, #tpu.memory_space<vmem>>, vector<1x256xf32>
    %8 = vector.broadcast %7 : vector<1x256xf32> to vector<8x256xf32>
    %9 = arith.addf %6, %8 : vector<8x256xf32>
    %10 = vector.extract_strided_slice %9 {offsets = [0, 0], sizes = [8, 128], strides = [1, 1]} : vector<8x256xf32> to vector<8x128xf32>
    %11 = vector.extract_strided_slice %9 {offsets = [0, 128], sizes = [8, 128], strides = [1, 1]} : vector<8x256xf32> to vector<8x128xf32>
    %12 = math.tanh %11 : vector<8x128xf32>
    %c0_10 = arith.constant 0 : index
    %c0_11 = arith.constant 0 : index
    %c0_12 = arith.constant 0 : index
    %13 = vector.load %arg5[%c0_10, %c0_11, %c0_12] : memref<2x128x128xf32, #tpu.memory_space<vmem>>, vector<1x128x128xf32>
    %14 = vector.shape_cast %13 : vector<1x128x128xf32> to vector<128x128xf32>
    %cst_13 = arith.constant dense<0.000000e+00> : vector<8x128xf32>
    %15 = tpu.matmul %12, %14, %cst_13 {dimension_numbers = #tpu.dot_dimension_numbers<[1], [0], [0], [1], [0, 0, 1, 1], [], []>, precision = #tpu.contract_precision<fp32>} : vector<8x128xf32>, vector<128x128xf32>, vector<8x128xf32> -> vector<8x128xf32>
    %c0_14 = arith.constant 0 : index
    %c0_15 = arith.constant 0 : index
    %c0_16 = arith.constant 0 : index
    %16 = vector.load %arg6[%c0_14, %c0_15, %c0_16] : memref<2x1x128xf32, #tpu.memory_space<vmem>>, vector<1x1x128xf32>
    %17 = vector.shape_cast %16 : vector<1x1x128xf32> to vector<1x128xf32>
    %18 = vector.broadcast %17 : vector<1x128xf32> to vector<8x128xf32>
    %19 = arith.addf %15, %18 : vector<8x128xf32>
    %20 = math.tanh %19 : vector<8x128xf32>
    %c1 = arith.constant 1 : index
    %c0_17 = arith.constant 0 : index
    %c0_18 = arith.constant 0 : index
    %21 = vector.load %arg5[%c1, %c0_17, %c0_18] : memref<2x128x128xf32, #tpu.memory_space<vmem>>, vector<1x128x128xf32>
    %22 = vector.shape_cast %21 : vector<1x128x128xf32> to vector<128x128xf32>
    %cst_19 = arith.constant dense<0.000000e+00> : vector<8x128xf32>
    %23 = tpu.matmul %20, %22, %cst_19 {dimension_numbers = #tpu.dot_dimension_numbers<[1], [0], [0], [1], [0, 0, 1, 1], [], []>, precision = #tpu.contract_precision<fp32>} : vector<8x128xf32>, vector<128x128xf32>, vector<8x128xf32> -> vector<8x128xf32>
    %c1_20 = arith.constant 1 : index
    %c0_21 = arith.constant 0 : index
    %c0_22 = arith.constant 0 : index
    %24 = vector.load %arg6[%c1_20, %c0_21, %c0_22] : memref<2x1x128xf32, #tpu.memory_space<vmem>>, vector<1x1x128xf32>
    %25 = vector.shape_cast %24 : vector<1x1x128xf32> to vector<1x128xf32>
    %26 = vector.broadcast %25 : vector<1x128xf32> to vector<8x128xf32>
    %27 = arith.addf %23, %26 : vector<8x128xf32>
    %28 = math.tanh %27 : vector<8x128xf32>
    %c0_23 = arith.constant 0 : index
    %c0_24 = arith.constant 0 : index
    %29 = vector.load %arg7[%c0_23, %c0_24] : memref<128x128xf32, #tpu.memory_space<vmem>>, vector<128x128xf32>
    %cst_25 = arith.constant dense<0.000000e+00> : vector<8x128xf32>
    %30 = tpu.matmul %28, %29, %cst_25 {dimension_numbers = #tpu.dot_dimension_numbers<[1], [0], [0], [1], [0, 0, 1, 1], [], []>, precision = #tpu.contract_precision<fp32>} : vector<8x128xf32>, vector<128x128xf32>, vector<8x128xf32> -> vector<8x128xf32>
    %31 = arith.addf %10, %30 : vector<8x128xf32>
    %c0_26 = arith.constant 0 : index
    %c0_27 = arith.constant 0 : index
    %32 = vector.load %arg8[%c0_26, %c0_27] : memref<8x128xf32, #tpu.memory_space<vmem>>, vector<8x128xf32>
    tpu.vector_store %arg8[%c0_26, %c0_27], %31 {strides = array<i32>} : memref<8x128xf32, #tpu.memory_space<vmem>>, vector<8x128xf32>,
    return
  }
}

</mosaic_0001>

<llo_original>
// kernel: flnssm_forward.1
$region0: #{flnssm_forward.1}
  #allocation0 [shape = 'u32[]', space=smem, size = 0x4, offset = 0x4, fixed_abs, tag = 'smem constant byte address 0x4 - core index']
  #allocation1 [shape = 'u32[144,128]{1,0:T(1,128)}', space=vmem, size = 0x12000, scoped, tag = 'internal scratch']
  %s0 = inlined_call_operand.hbm [shape: f32[8,8], index: 0, kind: input, shape index: {}]
  %s1 = inlined_call_operand.hbm [shape: f32[8,5], index: 1, kind: input, shape index: {}]
  %s2 = inlined_call_operand.hbm [shape: f32[8,256], index: 2, kind: input, shape index: {}]
  %s3 = inlined_call_operand.hbm [shape: f32[5,256], index: 3, kind: input, shape index: {}]
  %s4 = inlined_call_operand.vmem [shape: f32[1,256], index: 4, kind: input, shape index: {}]
  %s5 = inlined_call_operand.hbm [shape: f32[2,128,128], index: 5, kind: input, shape index: {}]
  %s6 = inlined_call_operand.vmem [shape: f32[2,1,128], index: 6, kind: input, shape index: {}]
  %s7 = inlined_call_operand.hbm [shape: f32[128,128], index: 7, kind: input, shape index: {}]
  %s8 = inlined_call_operand.vmem [shape: f32[8,128], index: 8, kind: output, shape index: {}]
  %s9 = sld [smem:[#allocation0]]
  $region66: #{flnssm_forward.1} parent=0
    _
  %s11 = ssub.s32 1, %s9
  %s12 = scalar_select 0, %s11, %s9
  $region1: #{flnssm_forward.1} parent=0
    #allocation2 [shape = 'u8[4096]{0}', space=vmem, size = 0x1000, scoped, tag = 'input window, operand 0, single buffered']
    #allocation3 [shape = 's32[1]{0}', space=sflag, size = 0x4, scoped, tag = 'scoped memory for flnssm_forward.1']
    #allocation4 [shape = 'u8[4096]{0}', space=vmem, size = 0x1000, scoped, tag = 'input window, operand 1, single buffered']
    #allocation5 [shape = 's32[1]{0}', space=sflag, size = 0x4, scoped, tag = 'scoped memory for flnssm_forward.1']
    #allocation6 [shape = 'u8[8192]{0}', space=vmem, size = 0x2000, scoped, tag = 'input window, operand 2, single buffered']
    #allocation7 [shape = 'u8[8192]{0}', space=vmem, size = 0x2000, scoped, tag = 'input window, operand 3, single buffered']
    #allocation8 [shape = 's32[1]{0}', space=sflag, size = 0x4, scoped, tag = 'scoped memory for flnssm_forward.1']
    #allocation9 [shape = 'u8[131072]{0}', space=vmem, size = 0x20000, scoped, tag = 'input window, operand 5, single buffered']
    #allocation10 [shape = 'u8[65536]{0}', space=vmem, size = 0x10000, scoped, tag = 'input window, operand 7, single buffered']
    #allocation11 [shape = 's32[1]{0}', space=sflag, size = 0x4, scoped, tag = 'scoped memory for flnssm_forward.1']
    %13 = vsyncpa [#allocation3], 0
    %14 = vsyncpa [#allocation5], 0
    %15 = vsyncpa [#allocation8], 0
    %16 = vsyncpa [#allocation11], 0
    // Predicated region
    $region2: #{flnssm_forward.1} parent=1 // pred_check
      _
    $region3: #{flnssm_forward.1} parent=1 // pred_check_branch
      %18 = sbr.rel (0) target = $region5
    $region4: #{flnssm_forward.1} parent=1 // pred_region
      %s20 = ssub.s32 128, 128
      %21 = vsyncadd [#allocation3], %s20
      %s23 = sshll.u32 [#allocation2], 4
      %s24 = int_to_ptr.vmem [resolvable:$true] %s23
      %26 = dma.hbm_to_vmem [thread:$0]  %s0, 128, %s24, [#allocation3]
    $region5: #{flnssm_forward.1} parent=1 // pred_fallthru
      _
    // Predicated region
    $region6: #{flnssm_forward.1} parent=1 // pred_check
      _
    $region7: #{flnssm_forward.1} parent=1 // pred_check_branch
      %28 = sbr.rel (0) target = $region9
    $region8: #{flnssm_forward.1} parent=1 // pred_region
      %s30 = ssub.s32 128, 128
      %31 = vsyncadd [#allocation5], %s30
      %s33 = sshll.u32 [#allocation4], 4
      %s34 = int_to_ptr.vmem [resolvable:$true] %s33
      %36 = dma.hbm_to_vmem [thread:$0]  %s1, 128, %s34, [#allocation5]
    $region9: #{flnssm_forward.1} parent=1 // pred_fallthru
      _
    // Predicated region
    $region10: #{flnssm_forward.1} parent=1 // pred_check
      _
    $region11: #{flnssm_forward.1} parent=1 // pred_check_branch
      %38 = sbr.rel (0) target = $region13
    $region12: #{flnssm_forward.1} parent=1 // pred_region
      %s40 = ssub.s32 256, 256
      %41 = vsyncadd [#allocation5], %s40
      %s43 = sshll.u32 [#allocation6], 4
      %s44 = int_to_ptr.vmem [resolvable:$true] %s43
      %46 = dma.hbm_to_vmem [thread:$0]  %s2, 256, %s44, [#allocation5]
    $region13: #{flnssm_forward.1} parent=1 // pred_fallthru
      _
    // Predicated region
    $region14: #{flnssm_forward.1} parent=1 // pred_check
      _
    $region15: #{flnssm_forward.1} parent=1 // pred_check_branch
      %48 = sbr.rel (0) target = $region17
    $region16: #{flnssm_forward.1} parent=1 // pred_region
      %s50 = ssub.s32 256, 256
      %51 = vsyncadd [#allocation8], %s50
      %s53 = sshll.u32 [#allocation7], 4
      %s54 = int_to_ptr.vmem [resolvable:$true] %s53
      %56 = dma.hbm_to_vmem [thread:$0]  %s3, 256, %s54, [#allocation8]
    $region17: #{flnssm_forward.1} parent=1 // pred_fallthru
      _
    // Predicated region
    $region18: #{flnssm_forward.1} parent=1 // pred_check
      _
    $region19: #{flnssm_forward.1} parent=1 // pred_check_branch
      %58 = sbr.rel (0) target = $region21
    $region20: #{flnssm_forward.1} parent=1 // pred_region
      _
    $region21: #{flnssm_forward.1} parent=1 // pred_fallthru
      _
    // Predicated region
    $region22: #{flnssm_forward.1} parent=1 // pred_check
      _
    $region23: #{flnssm_forward.1} parent=1 // pred_check_branch
      %60 = sbr.rel (0) target = $region25
    $region24: #{flnssm_forward.1} parent=1 // pred_region
      %s62 = ssub.s32 4096, 4096
      %63 = vsyncadd [#allocation8], %s62
      %s64 = sshll.u32 [#allocation9], 4
      %s65 = int_to_ptr.vmem [resolvable:$true] %s64
      %70 = dma.hbm_to_vmem [thread:$0]  %s5, 4096, %s65, [#allocation8], 128, 128, 8
    $region25: #{flnssm_forward.1} parent=1 // pred_fallthru
      _
    // Predicated region
    $region26: #{flnssm_forward.1} parent=1 // pred_check
      _
    $region27: #{flnssm_forward.1} parent=1 // pred_check_branch
      %72 = sbr.rel (0) target = $region29
    $region28: #{flnssm_forward.1} parent=1 // pred_region
      _
    $region29: #{flnssm_forward.1} parent=1 // pred_fallthru
      _
    // Predicated region
    $region30: #{flnssm_forward.1} parent=1 // pred_check
      _
    $region31: #{flnssm_forward.1} parent=1 // pred_check_branch
      %74 = sbr.rel (0) target = $region33
    $region32: #{flnssm_forward.1} parent=1 // pred_region
      %s76 = ssub.s32 2048, 2048
      %77 = vsyncadd [#allocation11], %s76
      %s78 = sshll.u32 [#allocation10], 4
      %s79 = int_to_ptr.vmem [resolvable:$true] %s78
      %84 = dma.hbm_to_vmem [thread:$0]  %s7, 2048, %s79, [#allocation11], 128, 128, 8
    $region33: #{flnssm_forward.1} parent=1 // pred_fallthru
      _
    // Predicated region
    $region34: #{flnssm_forward.1} parent=1 // pred_check
      _
    $region35: #{flnssm_forward.1} parent=1 // pred_check_branch
      %86 = sbr.rel (0) target = $region37
    $region36: #{flnssm_forward.1} parent=1 // pred_region
      %87 = dma.done [#allocation3], 128
    $region37: #{flnssm_forward.1} parent=1 // pred_fallthru
      _
    // Predicated region
    $region38: #{flnssm_forward.1} parent=1 // pred_check
      _
    $region39: #{flnssm_forward.1} parent=1 // pred_check_branch
      %89 = sbr.rel (0) target = $region41
    $region40: #{flnssm_forward.1} parent=1 // pred_region
      %90 = dma.done [#allocation5], 128
    $region41: #{flnssm_forward.1} parent=1 // pred_fallthru
      _
    // Predicated region
    $region42: #{flnssm_forward.1} parent=1 // pred_check
      _
    $region43: #{flnssm_forward.1} parent=1 // pred_check_branch
      %92 = sbr.rel (0) target = $region45
    $region44: #{flnssm_forward.1} parent=1 // pred_region
      %93 = dma.done [#allocation5], 256
    $region45: #{flnssm_forward.1} parent=1 // pred_fallthru
      _
    // Predicated region
    $region46: #{flnssm_forward.1} parent=1 // pred_check
      _
    $region47: #{flnssm_forward.1} parent=1 // pred_check_branch
      %95 = sbr.rel (0) target = $region49
    $region48: #{flnssm_forward.1} parent=1 // pred_region
      %96 = dma.done [#allocation8], 256
    $region49: #{flnssm_forward.1} parent=1 // pred_fallthru
      _
    // Predicated region
    $region50: #{flnssm_forward.1} parent=1 // pred_check
      _
    $region51: #{flnssm_forward.1} parent=1 // pred_check_branch
      %98 = sbr.rel (0) target = $region53
    $region52: #{flnssm_forward.1} parent=1 // pred_region
      %99 = dma.done [#allocation8], 4096
    $region53: #{flnssm_forward.1} parent=1 // pred_fallthru
      _
    // Predicated region
    $region54: #{flnssm_forward.1} parent=1 // pred_check
      _
    $region55: #{flnssm_forward.1} parent=1 // pred_check_branch
      %101 = sbr.rel (0) target = $region57
    $region56: #{flnssm_forward.1} parent=1 // pred_region
      %102 = dma.done [#allocation11], 2048
    $region57: #{flnssm_forward.1} parent=1 // pred_fallthru
      _
    %v103 = vld [vmem:[#allocation2] sm:$0xff]
    %v104 = vld [vmem:[#allocation6] sm:$0xff]
    %v105 = vld [vmem:[#allocation6 + $0x8] sm:$0xff]
    %v106 = vld [vmem:[#allocation4] sm:$0xff]
    %v107 = vld [vmem:[#allocation7] sm:$0x1f]
    %v108 = vld [vmem:[#allocation7 + $0x8] sm:$0x1f]
    %vm109 = vcmask 39936
    %v111 = vsel %vm109, %v106, 0
    %vm113 = vcmask 1044480
    %v115 = vsel %vm113, %v107, 0
    %v118 = vsel %vm113, %v108, 0
    %v120 = vand.u32 %v118, 4294901760
    %121 = vmatprep.subr.mxu0 %v120
    %v122 = vand.u32 %v115, 4294901760
    %123 = vmatpush1.msra.mxu0 %v122
    %124 = vmatprep.subr.mxu0 0.0
    %125 = vmatpush1.msra.mxu0 0.0
    %126 = vmatprep.subr.mxu0 0.0
    %127 = vmatpush1.msra.mxu0 0.0
    %128 = vmatprep.subr.mxu0 0.0
    %129 = vmatpush1.msra.mxu0 0.0
    %130 = vmatprep.subr.mxu0 0.0
    %131 = vmatpush1.msra.mxu0 0.0
    %132 = vmatprep.subr.mxu0 0.0
    %133 = vmatpush1.msra.mxu0 0.0
    %134 = vmatprep.subr.mxu0 0.0
    %135 = vmatpush1.msra.mxu0 0.0
    %136 = vmatprep.subr.mxu0 0.0
    %137 = vmatpush1.msra.mxu0 0.0
    %138 = vmatprep.subr.mxu0 0.0
    %139 = vmatpush1.msra.mxu0 0.0
    %140 = vmatprep.subr.mxu0 0.0
    %141 = vmatpush1.msra.mxu0 0.0
    %142 = vmatprep.subr.mxu0 0.0
    %143 = vmatpush1.msra.mxu0 0.0
    %144 = vmatprep.subr.mxu0 0.0
    %145 = vmatpush1.msra.mxu0 0.0
    %146 = vmatprep.subr.mxu0 0.0
    %147 = vmatpush1.msra.mxu0 0.0
    %148 = vmatprep.subr.mxu0 0.0
    %149 = vmatpush1.msra.mxu0 0.0
    %150 = vmatprep.subr.mxu0 0.0
    %151 = vmatpush1.msra.mxu0 0.0
    %152 = vmatprep.subr.mxu0 0.0
    %153 = vmatpush1.msra.mxu0 0.0
    %154 = vmatprep.subr.mxu0 0.0
    %155 = vmatpush1.msra.mxu0 0.0
    %156 = vmatprep.subr.mxu0 0.0
    %157 = vmatpush1.msra.mxu0 0.0
    %158 = vmatprep.subr.mxu0 0.0
    %159 = vmatpush1.msra.mxu0 0.0
    %160 = vmatprep.subr.mxu0 0.0
    %161 = vmatpush1.msra.mxu0 0.0
    %162 = vmatprep.subr.mxu0 0.0
    %163 = vmatpush1.msra.mxu0 0.0
    %164 = vmatprep.subr.mxu0 0.0
    %165 = vmatpush1.msra.mxu0 0.0
    %166 = vmatprep.subr.mxu0 0.0
    %167 = vmatpush1.msra.mxu0 0.0
    %168 = vmatprep.subr.mxu0 0.0
    %169 = vmatpush1.msra.mxu0 0.0
    %170 = vmatprep.subr.mxu0 0.0
    %171 = vmatpush1.msra.mxu0 0.0
    %172 = vmatprep.subr.mxu0 0.0
    %173 = vmatpush1.msra.mxu0 0.0
    %174 = vmatprep.subr.mxu0 0.0
    %175 = vmatpush1.msra.mxu0 0.0
    %176 = vmatprep.subr.mxu0 0.0
    %177 = vmatpush1.msra.mxu0 0.0
    %178 = vmatprep.subr.mxu0 0.0
    %179 = vmatpush1.msra.mxu0 0.0
    %180 = vmatprep.subr.mxu0 0.0
    %181 = vmatpush1.msra.mxu0 0.0
    %182 = vmatprep.subr.mxu0 0.0
    %183 = vmatpush1.msra.mxu0 0.0
    %184 = vmatprep.subr.mxu0 0.0
    %185 = vmatpush1.msra.mxu0 0.0
    %186 = vmatprep.mubr.f32.mxu0 0.0
    %v187 = vand.u32 %v111, 4294901760
    %v188 = vsub.f32 %v111, %v187
    %v189 = vand.u32 %v188, 4294901760
    %v190 = vsub.f32 %v188, %v189
    %v191 = vand.u32 %v190, 4294901760
    %192 = vmatmul.mubr.f32.gmra.mrb[0].mxu0 %v191
    %v193 = vpop.f32.mrb[0].mxu0
    %v194 = vadd.f32 0.0, %v193
    %v195 = vpop.f32.mrb[0].mxu0
    %v196 = vadd.f32 0.0, %v195
    %197 = vdwg.mxu0
    %v198 = vand.u32 %v118, 4294901760
    %v199 = vsub.f32 %v118, %v198
    %v200 = vand.u32 %v199, 4294901760
    %v201 = vsub.f32 %v199, %v200
    %v202 = vand.u32 %v201, 4294901760
    %203 = vmatprep.subr.mxu0 %v202
    %v204 = vand.u32 %v115, 4294901760
    %v205 = vsub.f32 %v115, %v204
    %v206 = vand.u32 %v205, 4294901760
    %v207 = vsub.f32 %v205, %v206
    %v208 = vand.u32 %v207, 4294901760
    %209 = vmatpush1.msra.mxu0 %v208
    %210 = vmatprep.subr.mxu0 0.0
    %211 = vmatpush1.msra.mxu0 0.0
    %212 = vmatprep.subr.mxu0 0.0
    %213 = vmatpush1.msra.mxu0 0.0
    %214 = vmatprep.subr.mxu0 0.0
    %215 = vmatpush1.msra.mxu0 0.0
    %216 = vmatprep.subr.mxu0 0.0
    %217 = vmatpush1.msra.mxu0 0.0
    %218 = vmatprep.subr.mxu0 0.0
    %219 = vmatpush1.msra.mxu0 0.0
    %220 = vmatprep.subr.mxu0 0.0
    %221 = vmatpush1.msra.mxu0 0.0
    %222 = vmatprep.subr.mxu0 0.0
    %223 = vmatpush1.msra.mxu0 0.0
    %224 = vmatprep.subr.mxu0 0.0
    %225 = vmatpush1.msra.mxu0 0.0
    %226 = vmatprep.subr.mxu0 0.0
    %227 = vmatpush1.msra.mxu0 0.0
    %228 = vmatprep.subr.mxu0 0.0
    %229 = vmatpush1.msra.mxu0 0.0
    %230 = vmatprep.subr.mxu0 0.0
    %231 = vmatpush1.msra.mxu0 0.0
    %232 = vmatprep.subr.mxu0 0.0
    %233 = vmatpush1.msra.mxu0 0.0
    %234 = vmatprep.subr.mxu0 0.0
    %235 = vmatpush1.msra.mxu0 0.0
    %236 = vmatprep.subr.mxu0 0.0
    %237 = vmatpush1.msra.mxu0 0.0
    %238 = vmatprep.subr.mxu0 0.0
    %239 = vmatpush1.msra.mxu0 0.0
    %240 = vmatprep.subr.mxu0 0.0
    %241 = vmatpush1.msra.mxu0 0.0
    %242 = vmatprep.subr.mxu0 0.0
    %243 = vmatpush1.msra.mxu0 0.0
    %244 = vmatprep.subr.mxu0 0.0
    %245 = vmatpush1.msra.mxu0 0.0
    %246 = vmatprep.subr.mxu0 0.0
    %247 = vmatpush1.msra.mxu0 0.0
    %248 = vmatprep.subr.mxu0 0.0
    %249 = vmatpush1.msra.mxu0 0.0
    %250 = vmatprep.subr.mxu0 0.0
    %251 = vmatpush1.msra.mxu0 0.0
    %252 = vmatprep.subr.mxu0 0.0
    %253 = vmatpush1.msra.mxu0 0.0
    %254 = vmatprep.subr.mxu0 0.0
    %255 = vmatpush1.msra.mxu0 0.0
    %256 = vmatprep.subr.mxu0 0.0
    %257 = vmatpush1.msra.mxu0 0.0
    %258 = vmatprep.subr.mxu0 0.0
    %259 = vmatpush1.msra.mxu0 0.0
    %260 = vmatprep.subr.mxu0 0.0
    %261 = vmatpush1.msra.mxu0 0.0
    %262 = vmatprep.subr.mxu0 0.0
    %263 = vmatpush1.msra.mxu0 0.0
    %264 = vmatprep.subr.mxu0 0.0
    %265 = vmatpush1.msra.mxu0 0.0
    %266 = vmatprep.subr.mxu0 0.0
    %267 = vmatpush1.msra.mxu0 0.0
    %268 = vmatprep.subr.mxu0 0.0
    %269 = vmatpush1.msra.mxu0 0.0
    %270 = vmatprep.subr.mxu0 0.0
    %271 = vmatpush1.msra.mxu0 0.0
    %272 = vmatprep.mubr.f32.mxu0 0.0
    %v273 = vand.u32 %v111, 4294901760
    %274 = vmatmul.mubr.f32.gmra.mrb[0].mxu0 %v273
    %v275 = vpop.f32.mrb[0].mxu0
    %v276 = vadd.f32 %v194, %v275
    %v277 = vpop.f32.mrb[0].mxu0
    %v278 = vadd.f32 %v196, %v277
    %279 = vdwg.mxu0
    %v280 = vand.u32 %v118, 4294901760
    %v281 = vsub.f32 %v118, %v280
    %282 = vmatprep.subr.mxu0 %v281
    %v283 = vand.u32 %v115, 4294901760
    %v284 = vsub.f32 %v115, %v283
    %285 = vmatpush1.msra.mxu0 %v284
    %286 = vmatprep.subr.mxu0 0.0
    %287 = vmatpush1.msra.mxu0 0.0
    %288 = vmatprep.subr.mxu0 0.0
    %289 = vmatpush1.msra.mxu0 0.0
    %290 = vmatprep.subr.mxu0 0.0
    %291 = vmatpush1.msra.mxu0 0.0
    %292 = vmatprep.subr.mxu0 0.0
    %293 = vmatpush1.msra.mxu0 0.0
    %294 = vmatprep.subr.mxu0 0.0
    %295 = vmatpush1.msra.mxu0 0.0
    %296 = vmatprep.subr.mxu0 0.0
    %297 = vmatpush1.msra.mxu0 0.0
    %298 = vmatprep.subr.mxu0 0.0
    %299 = vmatpush1.msra.mxu0 0.0
    %300 = vmatprep.subr.mxu0 0.0
    %301 = vmatpush1.msra.mxu0 0.0
    %302 = vmatprep.subr.mxu0 0.0
    %303 = vmatpush1.msra.mxu0 0.0
    %304 = vmatprep.subr.mxu0 0.0
    %305 = vmatpush1.msra.mxu0 0.0
    %306 = vmatprep.subr.mxu0 0.0
    %307 = vmatpush1.msra.mxu0 0.0
    %308 = vmatprep.subr.mxu0 0.0
    %309 = vmatpush1.msra.mxu0 0.0
    %310 = vmatprep.subr.mxu0 0.0
    %311 = vmatpush1.msra.mxu0 0.0
    %312 = vmatprep.subr.mxu0 0.0
    %313 = vmatpush1.msra.mxu0 0.0
    %314 = vmatprep.subr.mxu0 0.0
    %315 = vmatpush1.msra.mxu0 0.0
    %316 = vmatprep.subr.mxu0 0.0
    %317 = vmatpush1.msra.mxu0 0.0
    %318 = vmatprep.subr.mxu0 0.0
    %319 = vmatpush1.msra.mxu0 0.0
    %320 = vmatprep.subr.mxu0 0.0
    %321 = vmatpush1.msra.mxu0 0.0
    %322 = vmatprep.subr.mxu0 0.0
    %323 = vmatpush1.msra.mxu0 0.0
    %324 = vmatprep.subr.mxu0 0.0
    %325 = vmatpush1.msra.mxu0 0.0
    %326 = vmatprep.subr.mxu0 0.0
    %327 = vmatpush1.msra.mxu0 0.0
    %328 = vmatprep.subr.mxu0 0.0
    %329 = vmatpush1.msra.mxu0 0.0
    %330 = vmatprep.subr.mxu0 0.0
    %331 = vmatpush1.msra.mxu0 0.0
    %332 = vmatprep.subr.mxu0 0.0
    %333 = vmatpush1.msra.mxu0 0.0
    %334 = vmatprep.subr.mxu0 0.0
    %335 = vmatpush1.msra.mxu0 0.0
    %336 = vmatprep.subr.mxu0 0.0
    %337 = vmatpush1.msra.mxu0 0.0
    %338 = vmatprep.subr.mxu0 0.0
    %339 = vmatpush1.msra.mxu0 0.0
    %340 = vmatprep.subr.mxu0 0.0
    %341 = vmatpush1.msra.mxu0 0.0
    %342 = vmatprep.subr.mxu0 0.0
    %343 = vmatpush1.msra.mxu0 0.0
    %344 = vmatprep.subr.mxu0 0.0
    %345 = vmatpush1.msra.mxu0 0.0
    %346 = vmatprep.subr.mxu0 0.0
    %347 = vmatpush1.msra.mxu0 0.0
    %348 = vmatprep.mubr.f32.mxu0 0.0
    %v349 = vand.u32 %v111, 4294901760
    %v350 = vsub.f32 %v111, %v349
    %351 = vmatmul.mubr.f32.gmra.mrb[0].mxu0 %v350
    %v352 = vpop.f32.mrb[0].mxu0
    %v353 = vadd.f32 %v276, %v352
    %v354 = vpop.f32.mrb[0].mxu0
    %v355 = vadd.f32 %v278, %v354
    %356 = vdwg.mxu0
    %v357 = vand.u32 %v118, 4294901760
    %358 = vmatprep.subr.mxu0 %v357
    %v359 = vand.u32 %v115, 4294901760
    %360 = vmatpush1.msra.mxu0 %v359
    %361 = vmatprep.subr.mxu0 0.0
    %362 = vmatpush1.msra.mxu0 0.0
    %363 = vmatprep.subr.mxu0 0.0
    %364 = vmatpush1.msra.mxu0 0.0
    %365 = vmatprep.subr.mxu0 0.0
    %366 = vmatpush1.msra.mxu0 0.0
    %367 = vmatprep.subr.mxu0 0.0
    %368 = vmatpush1.msra.mxu0 0.0
    %369 = vmatprep.subr.mxu0 0.0
    %370 = vmatpush1.msra.mxu0 0.0
    %371 = vmatprep.subr.mxu0 0.0
    %372 = vmatpush1.msra.mxu0 0.0
    %373 = vmatprep.subr.mxu0 0.0
    %374 = vmatpush1.msra.mxu0 0.0
    %375 = vmatprep.subr.mxu0 0.0
    %376 = vmatpush1.msra.mxu0 0.0
    %377 = vmatprep.subr.mxu0 0.0
    %378 = vmatpush1.msra.mxu0 0.0
    %379 = vmatprep.subr.mxu0 0.0
    %380 = vmatpush1.msra.mxu0 0.0
    %381 = vmatprep.subr.mxu0 0.0
    %382 = vmatpush1.msra.mxu0 0.0
    %383 = vmatprep.subr.mxu0 0.0
    %384 = vmatpush1.msra.mxu0 0.0
    %385 = vmatprep.subr.mxu0 0.0
    %386 = vmatpush1.msra.mxu0 0.0
    %387 = vmatprep.subr.mxu0 0.0
    %388 = vmatpush1.msra.mxu0 0.0
    %389 = vmatprep.subr.mxu0 0.0
    %390 = vmatpush1.msra.mxu0 0.0
    %391 = vmatprep.subr.mxu0 0.0
    %392 = vmatpush1.msra.mxu0 0.0
    %393 = vmatprep.subr.mxu0 0.0
    %394 = vmatpush1.msra.mxu0 0.0
    %395 = vmatprep.subr.mxu0 0.0
    %396 = vmatpush1.msra.mxu0 0.0
    %397 = vmatprep.subr.mxu0 0.0
    %398 = vmatpush1.msra.mxu0 0.0
    %399 = vmatprep.subr.mxu0 0.0
    %400 = vmatpush1.msra.mxu0 0.0
    %401 = vmatprep.subr.mxu0 0.0
    %402 = vmatpush1.msra.mxu0 0.0
    %403 = vmatprep.subr.mxu0 0.0
    %404 = vmatpush1.msra.mxu0 0.0
    %405 = vmatprep.subr.mxu0 0.0
    %406 = vmatpush1.msra.mxu0 0.0
    %407 = vmatprep.subr.mxu0 0.0
    %408 = vmatpush1.msra.mxu0 0.0
    %409 = vmatprep.subr.mxu0 0.0
    %410 = vmatpush1.msra.mxu0 0.0
    %411 = vmatprep.subr.mxu0 0.0
    %412 = vmatpush1.msra.mxu0 0.0
    %413 = vmatprep.subr.mxu0 0.0
    %414 = vmatpush1.msra.mxu0 0.0
    %415 = vmatprep.subr.mxu0 0.0
    %416 = vmatpush1.msra.mxu0 0.0
    %417 = vmatprep.subr.mxu0 0.0
    %418 = vmatpush1.msra.mxu0 0.0
    %419 = vmatprep.subr.mxu0 0.0
    %420 = vmatpush1.msra.mxu0 0.0
    %421 = vmatprep.subr.mxu0 0.0
    %422 = vmatpush1.msra.mxu0 0.0
    %423 = vmatprep.mubr.f32.mxu0 0.0
    %v424 = vand.u32 %v111, 4294901760
    %v425 = vsub.f32 %v111, %v424
    %v426 = vand.u32 %v425, 4294901760
    %427 = vmatmul.mubr.f32.gmra.mrb[0].mxu0 %v426
    %v428 = vpop.f32.mrb[0].mxu0
    %v429 = vadd.f32 %v353, %v428
    %v430 = vpop.f32.mrb[0].mxu0
    %v431 = vadd.f32 %v355, %v430
    %432 = vdwg.mxu0
    %v433 = vand.u32 %v118, 4294901760
    %v434 = vsub.f32 %v118, %v433
    %v435 = vand.u32 %v434, 4294901760
    %436 = vmatprep.subr.mxu0 %v435
    %v437 = vand.u32 %v115, 4294901760
    %v438 = vsub.f32 %v115, %v437
    %v439 = vand.u32 %v438, 4294901760
    %440 = vmatpush1.msra.mxu0 %v439
    %441 = vmatprep.subr.mxu0 0.0
    %442 = vmatpush1.msra.mxu0 0.0
    %443 = vmatprep.subr.mxu0 0.0
    %444 = vmatpush1.msra.mxu0 0.0
    %445 = vmatprep.subr.mxu0 0.0
    %446 = vmatpush1.msra.mxu0 0.0
    %447 = vmatprep.subr.mxu0 0.0
    %448 = vmatpush1.msra.mxu0 0.0
    %449 = vmatprep.subr.mxu0 0.0
    %450 = vmatpush1.msra.mxu0 0.0
    %451 = vmatprep.subr.mxu0 0.0
    %452 = vmatpush1.msra.mxu0 0.0
    %453 = vmatprep.subr.mxu0 0.0
    %454 = vmatpush1.msra.mxu0 0.0
    %455 = vmatprep.subr.mxu0 0.0
    %456 = vmatpush1.msra.mxu0 0.0
    %457 = vmatprep.subr.mxu0 0.0
    %458 = vmatpush1.msra.mxu0 0.0
    %459 = vmatprep.subr.mxu0 0.0
    %460 = vmatpush1.msra.mxu0 0.0
    %461 = vmatprep.subr.mxu0 0.0
    %462 = vmatpush1.msra.mxu0 0.0
    %463 = vmatprep.subr.mxu0 0.0
    %464 = vmatpush1.msra.mxu0 0.0
    %465 = vmatprep.subr.mxu0 0.0
    %466 = vmatpush1.msra.mxu0 0.0
    %467 = vmatprep.subr.mxu0 0.0
    %468 = vmatpush1.msra.mxu0 0.0
    %469 = vmatprep.subr.mxu0 0.0
    %470 = vmatpush1.msra.mxu0 0.0
    %471 = vmatprep.subr.mxu0 0.0
    %472 = vmatpush1.msra.mxu0 0.0
    %473 = vmatprep.subr.mxu0 0.0
    %474 = vmatpush1.msra.mxu0 0.0
    %475 = vmatprep.subr.mxu0 0.0
    %476 = vmatpush1.msra.mxu0 0.0
    %477 = vmatprep.subr.mxu0 0.0
    %478 = vmatpush1.msra.mxu0 0.0
    %479 = vmatprep.subr.mxu0 0.0
    %480 = vmatpush1.msra.mxu0 0.0
    %481 = vmatprep.subr.mxu0 0.0
    %482 = vmatpush1.msra.mxu0 0.0
    %483 = vmatprep.subr.mxu0 0.0
    %484 = vmatpush1.msra.mxu0 0.0
    %485 = vmatprep.subr.mxu0 0.0
    %486 = vmatpush1.msra.mxu0 0.0
    %487 = vmatprep.subr.mxu0 0.0
    %488 = vmatpush1.msra.mxu0 0.0
    %489 = vmatprep.subr.mxu0 0.0
    %490 = vmatpush1.msra.mxu0 0.0
    %491 = vmatprep.subr.mxu0 0.0
    %492 = vmatpush1.msra.mxu0 0.0
    %493 = vmatprep.subr.mxu0 0.0
    %494 = vmatpush1.msra.mxu0 0.0
    %495 = vmatprep.subr.mxu0 0.0
    %496 = vmatpush1.msra.mxu0 0.0
    %497 = vmatprep.subr.mxu0 0.0
    %498 = vmatpush1.msra.mxu0 0.0
    %499 = vmatprep.subr.mxu0 0.0
    %500 = vmatpush1.msra.mxu0 0.0
    %501 = vmatprep.subr.mxu0 0.0
    %502 = vmatpush1.msra.mxu0 0.0
    %503 = vmatprep.mubr.f32.mxu0 0.0
    %v504 = vand.u32 %v111, 4294901760
    %505 = vmatmul.mubr.f32.gmra.mrb[0].mxu0 %v504
    %v506 = vpop.f32.mrb[0].mxu0
    %v507 = vadd.f32 %v429, %v506
    %v508 = vpop.f32.mrb[0].mxu0
    %v509 = vadd.f32 %v431, %v508
    %510 = vdwg.mxu0
    %v511 = vand.u32 %v118, 4294901760
    %512 = vmatprep.subr.mxu0 %v511
    %v513 = vand.u32 %v115, 4294901760
    %514 = vmatpush1.msra.mxu0 %v513
    %515 = vmatprep.subr.mxu0 0.0
    %516 = vmatpush1.msra.mxu0 0.0
    %517 = vmatprep.subr.mxu0 0.0
    %518 = vmatpush1.msra.mxu0 0.0
    %519 = vmatprep.subr.mxu0 0.0
    %520 = vmatpush1.msra.mxu0 0.0
    %521 = vmatprep.subr.mxu0 0.0
    %522 = vmatpush1.msra.mxu0 0.0
    %523 = vmatprep.subr.mxu0 0.0
    %524 = vmatpush1.msra.mxu0 0.0
    %525 = vmatprep.subr.mxu0 0.0
    %526 = vmatpush1.msra.mxu0 0.0
    %527 = vmatprep.subr.mxu0 0.0
    %528 = vmatpush1.msra.mxu0 0.0
    %529 = vmatprep.subr.mxu0 0.0
    %530 = vmatpush1.msra.mxu0 0.0
    %531 = vmatprep.subr.mxu0 0.0
    %532 = vmatpush1.msra.mxu0 0.0
    %533 = vmatprep.subr.mxu0 0.0
    %534 = vmatpush1.msra.mxu0 0.0
    %535 = vmatprep.subr.mxu0 0.0
    %536 = vmatpush1.msra.mxu0 0.0
    %537 = vmatprep.subr.mxu0 0.0
    %538 = vmatpush1.msra.mxu0 0.0
    %539 = vmatprep.subr.mxu0 0.0
    %540 = vmatpush1.msra.mxu0 0.0
    %541 = vmatprep.subr.mxu0 0.0
    %542 = vmatpush1.msra.mxu0 0.0
    %543 = vmatprep.subr.mxu0 0.0
    %544 = vmatpush1.msra.mxu0 0.0
    %545 = vmatprep.subr.mxu0 0.0
    %546 = vmatpush1.msra.mxu0 0.0
    %547 = vmatprep.subr.mxu0 0.0
    %548 = vmatpush1.msra.mxu0 0.0
    %549 = vmatprep.subr.mxu0 0.0
    %550 = vmatpush1.msra.mxu0 0.0
    %551 = vmatprep.subr.mxu0 0.0
    %552 = vmatpush1.msra.mxu0 0.0
    %553 = vmatprep.subr.mxu0 0.0
    %554 = vmatpush1.msra.mxu0 0.0
    %555 = vmatprep.subr.mxu0 0.0
    %556 = vmatpush1.msra.mxu0 0.0
    %557 = vmatprep.subr.mxu0 0.0
    %558 = vmatpush1.msra.mxu0 0.0
    %559 = vmatprep.subr.mxu0 0.0
    %560 = vmatpush1.msra.mxu0 0.0
    %561 = vmatprep.subr.mxu0 0.0
    %562 = vmatpush1.msra.mxu0 0.0
    %563 = vmatprep.subr.mxu0 0.0
    %564 = vmatpush1.msra.mxu0 0.0
    %565 = vmatprep.subr.mxu0 0.0
    %566 = vmatpush1.msra.mxu0 0.0
    %567 = vmatprep.subr.mxu0 0.0
    %568 = vmatpush1.msra.mxu0 0.0
    %569 = vmatprep.subr.mxu0 0.0
    %570 = vmatpush1.msra.mxu0 0.0
    %571 = vmatprep.subr.mxu0 0.0
    %572 = vmatpush1.msra.mxu0 0.0
    %573 = vmatprep.subr.mxu0 0.0
    %574 = vmatpush1.msra.mxu0 0.0
    %575 = vmatprep.subr.mxu0 0.0
    %576 = vmatpush1.msra.mxu0 0.0
    %577 = vmatprep.mubr.f32.mxu0 0.0
    %v578 = vand.u32 %v111, 4294901760
    %579 = vmatmul.mubr.f32.gmra.mrb[0].mxu0 %v578
    %v580 = vpop.f32.mrb[0].mxu0
    %v581 = vadd.f32 %v507, %v580
    %v582 = vpop.f32.mrb[0].mxu0
    %v583 = vadd.f32 %v509, %v582
    %584 = vdwg.mxu0
    %vm585 = vcmask 64512
    %v587 = vsel %vm585, %v103, 0
    %v589 = vand.u32 %v105, 4294901760
    %590 = vmatprep.subr.mxu0 %v589
    %v591 = vand.u32 %v104, 4294901760
    %592 = vmatpush1.msra.mxu0 %v591
    %593 = vmatprep.subr.mxu0 0.0
    %594 = vmatpush1.msra.mxu0 0.0
    %595 = vmatprep.subr.mxu0 0.0
    %596 = vmatpush1.msra.mxu0 0.0
    %597 = vmatprep.subr.mxu0 0.0
    %598 = vmatpush1.msra.mxu0 0.0
    %599 = vmatprep.subr.mxu0 0.0
    %600 = vmatpush1.msra.mxu0 0.0
    %601 = vmatprep.subr.mxu0 0.0
    %602 = vmatpush1.msra.mxu0 0.0
    %603 = vmatprep.subr.mxu0 0.0
    %604 = vmatpush1.msra.mxu0 0.0
    %605 = vmatprep.subr.mxu0 0.0
    %606 = vmatpush1.msra.mxu0 0.0
    %607 = vmatprep.subr.mxu0 0.0
    %608 = vmatpush1.msra.mxu0 0.0
    %609 = vmatprep.subr.mxu0 0.0
    %610 = vmatpush1.msra.mxu0 0.0
    %611 = vmatprep.subr.mxu0 0.0
    %612 = vmatpush1.msra.mxu0 0.0
    %613 = vmatprep.subr.mxu0 0.0
    %614 = vmatpush1.msra.mxu0 0.0
    %615 = vmatprep.subr.mxu0 0.0
    %616 = vmatpush1.msra.mxu0 0.0
    %617 = vmatprep.subr.mxu0 0.0
    %618 = vmatpush1.msra.mxu0 0.0
    %619 = vmatprep.subr.mxu0 0.0
    %620 = vmatpush1.msra.mxu0 0.0
    %621 = vmatprep.subr.mxu0 0.0
    %622 = vmatpush1.msra.mxu0 0.0
    %623 = vmatprep.subr.mxu0 0.0
    %624 = vmatpush1.msra.mxu0 0.0
    %625 = vmatprep.subr.mxu0 0.0
    %626 = vmatpush1.msra.mxu0 0.0
    %627 = vmatprep.subr.mxu0 0.0
    %628 = vmatpush1.msra.mxu0 0.0
    %629 = vmatprep.subr.mxu0 0.0
    %630 = vmatpush1.msra.mxu0 0.0
    %631 = vmatprep.subr.mxu0 0.0
    %632 = vmatpush1.msra.mxu0 0.0
    %633 = vmatprep.subr.mxu0 0.0
    %634 = vmatpush1.msra.mxu0 0.0
    %635 = vmatprep.subr.mxu0 0.0
    %636 = vmatpush1.msra.mxu0 0.0
    %637 = vmatprep.subr.mxu0 0.0
    %638 = vmatpush1.msra.mxu0 0.0
    %639 = vmatprep.subr.mxu0 0.0
    %640 = vmatpush1.msra.mxu0 0.0
    %641 = vmatprep.subr.mxu0 0.0
    %642 = vmatpush1.msra.mxu0 0.0
    %643 = vmatprep.subr.mxu0 0.0
    %644 = vmatpush1.msra.mxu0 0.0
    %645 = vmatprep.subr.mxu0 0.0
    %646 = vmatpush1.msra.mxu0 0.0
    %647 = vmatprep.subr.mxu0 0.0
    %648 = vmatpush1.msra.mxu0 0.0
    %649 = vmatprep.subr.mxu0 0.0
    %650 = vmatpush1.msra.mxu0 0.0
    %651 = vmatprep.subr.mxu0 0.0
    %652 = vmatpush1.msra.mxu0 0.0
    %653 = vmatprep.subr.mxu0 0.0
    %654 = vmatpush1.msra.mxu0 0.0
    %655 = vmatprep.mubr.f32.mxu0 0.0
    %v656 = vand.u32 %v587, 4294901760
    %v657 = vsub.f32 %v587, %v656
    %v658 = vand.u32 %v657, 4294901760
    %v659 = vsub.f32 %v657, %v658
    %v660 = vand.u32 %v659, 4294901760
    %661 = vmatmul.mubr.f32.gmra.mrb[0].mxu0 %v660
    %v662 = vpop.f32.mrb[0].mxu0
    %v663 = vadd.f32 %v581, %v662
    %v664 = vpop.f32.mrb[0].mxu0
    %v665 = vadd.f32 %v583, %v664
    %666 = vdwg.mxu0
    %v667 = vand.u32 %v105, 4294901760
    %v668 = vsub.f32 %v105, %v667
    %v669 = vand.u32 %v668, 4294901760
    %v670 = vsub.f32 %v668, %v669
    %v671 = vand.u32 %v670, 4294901760
    %672 = vmatprep.subr.mxu0 %v671
    %v673 = vand.u32 %v104, 4294901760
    %v674 = vsub.f32 %v104, %v673
    %v675 = vand.u32 %v674, 4294901760
    %v676 = vsub.f32 %v674, %v675
    %v677 = vand.u32 %v676, 4294901760
    %678 = vmatpush1.msra.mxu0 %v677
    %679 = vmatprep.subr.mxu0 0.0
    %680 = vmatpush1.msra.mxu0 0.0
    %681 = vmatprep.subr.mxu0 0.0
    %682 = vmatpush1.msra.mxu0 0.0
    %683 = vmatprep.subr.mxu0 0.0
    %684 = vmatpush1.msra.mxu0 0.0
    %685 = vmatprep.subr.mxu0 0.0
    %686 = vmatpush1.msra.mxu0 0.0
    %687 = vmatprep.subr.mxu0 0.0
    %688 = vmatpush1.msra.mxu0 0.0
    %689 = vmatprep.subr.mxu0 0.0
    %690 = vmatpush1.msra.mxu0 0.0
    %691 = vmatprep.subr.mxu0 0.0
    %692 = vmatpush1.msra.mxu0 0.0
    %693 = vmatprep.subr.mxu0 0.0
    %694 = vmatpush1.msra.mxu0 0.0
    %695 = vmatprep.subr.mxu0 0.0
    %696 = vmatpush1.msra.mxu0 0.0
    %697 = vmatprep.subr.mxu0 0.0
    %698 = vmatpush1.msra.mxu0 0.0
    %699 = vmatprep.subr.mxu0 0.0
    %700 = vmatpush1.msra.mxu0 0.0
    %701 = vmatprep.subr.mxu0 0.0
    %702 = vmatpush1.msra.mxu0 0.0
    %703 = vmatprep.subr.mxu0 0.0
    %704 = vmatpush1.msra.mxu0 0.0
    %705 = vmatprep.subr.mxu0 0.0
    %706 = vmatpush1.msra.mxu0 0.0
    %707 = vmatprep.subr.mxu0 0.0
    %708 = vmatpush1.msra.mxu0 0.0
    %709 = vmatprep.subr.mxu0 0.0
    %710 = vmatpush1.msra.mxu0 0.0
    %711 = vmatprep.subr.mxu0 0.0
    %712 = vmatpush1.msra.mxu0 0.0
    %713 = vmatprep.subr.mxu0 0.0
    %714 = vmatpush1.msra.mxu0 0.0
    %715 = vmatprep.subr.mxu0 0.0
    %716 = vmatpush1.msra.mxu0 0.0
    %717 = vmatprep.subr.mxu0 0.0
    %718 = vmatpush1.msra.mxu0 0.0
    %719 = vmatprep.subr.mxu0 0.0
    %720 = vmatpush1.msra.mxu0 0.0
    %721 = vmatprep.subr.mxu0 0.0
    %722 = vmatpush1.msra.mxu0 0.0
    %723 = vmatprep.subr.mxu0 0.0
    %724 = vmatpush1.msra.mxu0 0.0
    %725 = vmatprep.subr.mxu0 0.0
    %726 = vmatpush1.msra.mxu0 0.0
    %727 = vmatprep.subr.mxu0 0.0
    %728 = vmatpush1.msra.mxu0 0.0
    %729 = vmatprep.subr.mxu0 0.0
    %730 = vmatpush1.msra.mxu0 0.0
    %731 = vmatprep.subr.mxu0 0.0
    %732 = vmatpush1.msra.mxu0 0.0
    %733 = vmatprep.subr.mxu0 0.0
    %734 = vmatpush1.msra.mxu0 0.0
    %735 = vmatprep.subr.mxu0 0.0
    %736 = vmatpush1.msra.mxu0 0.0
    %737 = vmatprep.subr.mxu0 0.0
    %738 = vmatpush1.msra.mxu0 0.0
    %739 = vmatprep.subr.mxu0 0.0
    %740 = vmatpush1.msra.mxu0 0.0
    %741 = vmatprep.mubr.f32.mxu0 0.0
    %v742 = vand.u32 %v587, 4294901760
    %743 = vmatmul.mubr.f32.gmra.mrb[0].mxu0 %v742
    %v744 = vpop.f32.mrb[0].mxu0
    %v745 = vadd.f32 %v663, %v744
    %v746 = vpop.f32.mrb[0].mxu0
    %v747 = vadd.f32 %v665, %v746
    %748 = vdwg.mxu0
    %v749 = vand.u32 %v105, 4294901760
    %v750 = vsub.f32 %v105, %v749
    %751 = vmatprep.subr.mxu0 %v750
    %v752 = vand.u32 %v104, 4294901760
    %v753 = vsub.f32 %v104, %v752
    %754 = vmatpush1.msra.mxu0 %v753
    %755 = vmatprep.subr.mxu0 0.0
    %756 = vmatpush1.msra.mxu0 0.0
    %757 = vmatprep.subr.mxu0 0.0
    %758 = vmatpush1.msra.mxu0 0.0
    %759 = vmatprep.subr.mxu0 0.0
    %760 = vmatpush1.msra.mxu0 0.0
    %761 = vmatprep.subr.mxu0 0.0
    %762 = vmatpush1.msra.mxu0 0.0
    %763 = vmatprep.subr.mxu0 0.0
    %764 = vmatpush1.msra.mxu0 0.0
    %765 = vmatprep.subr.mxu0 0.0
    %766 = vmatpush1.msra.mxu0 0.0
    %767 = vmatprep.subr.mxu0 0.0
    %768 = vmatpush1.msra.mxu0 0.0
    %769 = vmatprep.subr.mxu0 0.0
    %770 = vmatpush1.msra.mxu0 0.0
    %771 = vmatprep.subr.mxu0 0.0
    %772 = vmatpush1.msra.mxu0 0.0
    %773 = vmatprep.subr.mxu0 0.0
    %774 = vmatpush1.msra.mxu0 0.0
    %775 = vmatprep.subr.mxu0 0.0
    %776 = vmatpush1.msra.mxu0 0.0
    %777 = vmatprep.subr.mxu0 0.0
    %778 = vmatpush1.msra.mxu0 0.0
    %779 = vmatprep.subr.mxu0 0.0
    %780 = vmatpush1.msra.mxu0 0.0
    %781 = vmatprep.subr.mxu0 0.0
    %782 = vmatpush1.msra.mxu0 0.0
    %783 = vmatprep.subr.mxu0 0.0
    %784 = vmatpush1.msra.mxu0 0.0
    %785 = vmatprep.subr.mxu0 0.0
    %786 = vmatpush1.msra.mxu0 0.0
    %787 = vmatprep.subr.mxu0 0.0
    %788 = vmatpush1.msra.mxu0 0.0
    %789 = vmatprep.subr.mxu0 0.0
    %790 = vmatpush1.msra.mxu0 0.0
    %791 = vmatprep.subr.mxu0 0.0
    %792 = vmatpush1.msra.mxu0 0.0
    %793 = vmatprep.subr.mxu0 0.0
    %794 = vmatpush1.msra.mxu0 0.0
    %795 = vmatprep.subr.mxu0 0.0
    %796 = vmatpush1.msra.mxu0 0.0
    %797 = vmatprep.subr.mxu0 0.0
    %798 = vmatpush1.msra.mxu0 0.0
    %799 = vmatprep.subr.mxu0 0.0
    %800 = vmatpush1.msra.mxu0 0.0
    %801 = vmatprep.subr.mxu0 0.0
    %802 = vmatpush1.msra.mxu0 0.0
    %803 = vmatprep.subr.mxu0 0.0
    %804 = vmatpush1.msra.mxu0 0.0
    %805 = vmatprep.subr.mxu0 0.0
    %806 = vmatpush1.msra.mxu0 0.0
    %807 = vmatprep.subr.mxu0 0.0
    %808 = vmatpush1.msra.mxu0 0.0
    %809 = vmatprep.subr.mxu0 0.0
    %810 = vmatpush1.msra.mxu0 0.0
    %811 = vmatprep.subr.mxu0 0.0
    %812 = vmatpush1.msra.mxu0 0.0
    %813 = vmatprep.subr.mxu0 0.0
    %814 = vmatpush1.msra.mxu0 0.0
    %815 = vmatprep.subr.mxu0 0.0
    %816 = vmatpush1.msra.mxu0 0.0
    %817 = vmatprep.mubr.f32.mxu0 0.0
    %v818 = vand.u32 %v587, 4294901760
    %v819 = vsub.f32 %v587, %v818
    %820 = vmatmul.mubr.f32.gmra.mrb[0].mxu0 %v819
    %v821 = vpop.f32.mrb[0].mxu0
    %v822 = vadd.f32 %v745, %v821
    %v823 = vpop.f32.mrb[0].mxu0
    %v824 = vadd.f32 %v747, %v823
    %825 = vdwg.mxu0
    %v826 = vand.u32 %v105, 4294901760
    %827 = vmatprep.subr.mxu0 %v826
    %v828 = vand.u32 %v104, 4294901760
    %829 = vmatpush1.msra.mxu0 %v828
    %830 = vmatprep.subr.mxu0 0.0
    %831 = vmatpush1.msra.mxu0 0.0
    %832 = vmatprep.subr.mxu0 0.0
    %833 = vmatpush1.msra.mxu0 0.0
    %834 = vmatprep.subr.mxu0 0.0
    %835 = vmatpush1.msra.mxu0 0.0
    %836 = vmatprep.subr.mxu0 0.0
    %837 = vmatpush1.msra.mxu0 0.0
    %838 = vmatprep.subr.mxu0 0.0
    %839 = vmatpush1.msra.mxu0 0.0
    %840 = vmatprep.subr.mxu0 0.0
    %841 = vmatpush1.msra.mxu0 0.0
    %842 = vmatprep.subr.mxu0 0.0
    %843 = vmatpush1.msra.mxu0 0.0
    %844 = vmatprep.subr.mxu0 0.0
    %845 = vmatpush1.msra.mxu0 0.0
    %846 = vmatprep.subr.mxu0 0.0
    %847 = vmatpush1.msra.mxu0 0.0
    %848 = vmatprep.subr.mxu0 0.0
    %849 = vmatpush1.msra.mxu0 0.0
    %850 = vmatprep.subr.mxu0 0.0
    %851 = vmatpush1.msra.mxu0 0.0
    %852 = vmatprep.subr.mxu0 0.0
    %853 = vmatpush1.msra.mxu0 0.0
    %854 = vmatprep.subr.mxu0 0.0
    %855 = vmatpush1.msra.mxu0 0.0
    %856 = vmatprep.subr.mxu0 0.0
    %857 = vmatpush1.msra.mxu0 0.0
    %858 = vmatprep.subr.mxu0 0.0
    %859 = vmatpush1.msra.mxu0 0.0
    %860 = vmatprep.subr.mxu0 0.0
    %861 = vmatpush1.msra.mxu0 0.0
    %862 = vmatprep.subr.mxu0 0.0
    %863 = vmatpush1.msra.mxu0 0.0
    %864 = vmatprep.subr.mxu0 0.0
    %865 = vmatpush1.msra.mxu0 0.0
    %866 = vmatprep.subr.mxu0 0.0
    %867 = vmatpush1.msra.mxu0 0.0
    %868 = vmatprep.subr.mxu0 0.0
    %869 = vmatpush1.msra.mxu0 0.0
    %870 = vmatprep.subr.mxu0 0.0
    %871 = vmatpush1.msra.mxu0 0.0
    %872 = vmatprep.subr.mxu0 0.0
    %873 = vmatpush1.msra.mxu0 0.0
    %874 = vmatprep.subr.mxu0 0.0
    %875 = vmatpush1.msra.mxu0 0.0
    %876 = vmatprep.subr.mxu0 0.0
    %877 = vmatpush1.msra.mxu0 0.0
    %878 = vmatprep.subr.mxu0 0.0
    %879 = vmatpush1.msra.mxu0 0.0
    %880 = vmatprep.subr.mxu0 0.0
    %881 = vmatpush1.msra.mxu0 0.0
    %882 = vmatprep.subr.mxu0 0.0
    %883 = vmatpush1.msra.mxu0 0.0
    %884 = vmatprep.subr.mxu0 0.0
    %885 = vmatpush1.msra.mxu0 0.0
    %886 = vmatprep.subr.mxu0 0.0
    %887 = vmatpush1.msra.mxu0 0.0
    %888 = vmatprep.subr.mxu0 0.0
    %889 = vmatpush1.msra.mxu0 0.0
    %890 = vmatprep.subr.mxu0 0.0
    %891 = vmatpush1.msra.mxu0 0.0
    %892 = vmatprep.mubr.f32.mxu0 0.0
    %v893 = vand.u32 %v587, 4294901760
    %v894 = vsub.f32 %v587, %v893
    %v895 = vand.u32 %v894, 4294901760
    %896 = vmatmul.mubr.f32.gmra.mrb[0].mxu0 %v895
    %v897 = vpop.f32.mrb[0].mxu0
    %v898 = vadd.f32 %v822, %v897
    %v899 = vpop.f32.mrb[0].mxu0
    %v900 = vadd.f32 %v824, %v899
    %901 = vdwg.mxu0
    %v902 = vand.u32 %v105, 4294901760
    %v903 = vsub.f32 %v105, %v902
    %v904 = vand.u32 %v903, 4294901760
    %905 = vmatprep.subr.mxu0 %v904
    %v906 = vand.u32 %v104, 4294901760
    %v907 = vsub.f32 %v104, %v906
    %v908 = vand.u32 %v907, 4294901760
    %909 = vmatpush1.msra.mxu0 %v908
    %910 = vmatprep.subr.mxu0 0.0
    %911 = vmatpush1.msra.mxu0 0.0
    %912 = vmatprep.subr.mxu0 0.0
    %913 = vmatpush1.msra.mxu0 0.0
    %914 = vmatprep.subr.mxu0 0.0
    %915 = vmatpush1.msra.mxu0 0.0
    %916 = vmatprep.subr.mxu0 0.0
    %917 = vmatpush1.msra.mxu0 0.0
    %918 = vmatprep.subr.mxu0 0.0
    %919 = vmatpush1.msra.mxu0 0.0
    %920 = vmatprep.subr.mxu0 0.0
    %921 = vmatpush1.msra.mxu0 0.0
    %922 = vmatprep.subr.mxu0 0.0
    %923 = vmatpush1.msra.mxu0 0.0
    %924 = vmatprep.subr.mxu0 0.0
    %925 = vmatpush1.msra.mxu0 0.0
    %926 = vmatprep.subr.mxu0 0.0
    %927 = vmatpush1.msra.mxu0 0.0
    %928 = vmatprep.subr.mxu0 0.0
    %929 = vmatpush1.msra.mxu0 0.0
    %930 = vmatprep.subr.mxu0 0.0
    %931 = vmatpush1.msra.mxu0 0.0
    %932 = vmatprep.subr.mxu0 0.0
    %933 = vmatpush1.msra.mxu0 0.0
    %934 = vmatprep.subr.mxu0 0.0
    %935 = vmatpush1.msra.mxu0 0.0
    %936 = vmatprep.subr.mxu0 0.0
    %937 = vmatpush1.msra.mxu0 0.0
    %938 = vmatprep.subr.mxu0 0.0
    %939 = vmatpush1.msra.mxu0 0.0
    %940 = vmatprep.subr.mxu0 0.0
    %941 = vmatpush1.msra.mxu0 0.0
    %942 = vmatprep.subr.mxu0 0.0
    %943 = vmatpush1.msra.mxu0 0.0
    %944 = vmatprep.subr.mxu0 0.0
    %945 = vmatpush1.msra.mxu0 0.0
    %946 = vmatprep.subr.mxu0 0.0
    %947 = vmatpush1.msra.mxu0 0.0
    %948 = vmatprep.subr.mxu0 0.0
    %949 = vmatpush1.msra.mxu0 0.0
    %950 = vmatprep.subr.mxu0 0.0
    %951 = vmatpush1.msra.mxu0 0.0
    %952 = vmatprep.subr.mxu0 0.0
    %953 = vmatpush1.msra.mxu0 0.0
    %954 = vmatprep.subr.mxu0 0.0
    %955 = vmatpush1.msra.mxu0 0.0
    %956 = vmatprep.subr.mxu0 0.0
    %957 = vmatpush1.msra.mxu0 0.0
    %958 = vmatprep.subr.mxu0 0.0
    %959 = vmatpush1.msra.mxu0 0.0
    %960 = vmatprep.subr.mxu0 0.0
    %961 = vmatpush1.msra.mxu0 0.0
    %962 = vmatprep.subr.mxu0 0.0
    %963 = vmatpush1.msra.mxu0 0.0
    %964 = vmatprep.subr.mxu0 0.0
    %965 = vmatpush1.msra.mxu0 0.0
    %966 = vmatprep.subr.mxu0 0.0
    %967 = vmatpush1.msra.mxu0 0.0
    %968 = vmatprep.subr.mxu0 0.0
    %969 = vmatpush1.msra.mxu0 0.0
    %970 = vmatprep.subr.mxu0 0.0
    %971 = vmatpush1.msra.mxu0 0.0
    %972 = vmatprep.mubr.f32.mxu0 0.0
    %v973 = vand.u32 %v587, 4294901760
    %974 = vmatmul.mubr.f32.gmra.mrb[0].mxu0 %v973
    %v975 = vpop.f32.mrb[0].mxu0
    %v976 = vadd.f32 %v898, %v975
    %v977 = vpop.f32.mrb[0].mxu0
    %v978 = vadd.f32 %v900, %v977
    %979 = vdwg.mxu0
    %v980 = vand.u32 %v105, 4294901760
    %981 = vmatprep.subr.mxu0 %v980
    %v982 = vand.u32 %v104, 4294901760
    %983 = vmatpush1.msra.mxu0 %v982
    %984 = vmatprep.subr.mxu0 0.0
    %985 = vmatpush1.msra.mxu0 0.0
    %986 = vmatprep.subr.mxu0 0.0
    %987 = vmatpush1.msra.mxu0 0.0
    %988 = vmatprep.subr.mxu0 0.0
    %989 = vmatpush1.msra.mxu0 0.0
    %990 = vmatprep.subr.mxu0 0.0
    %991 = vmatpush1.msra.mxu0 0.0
    %992 = vmatprep.subr.mxu0 0.0
    %993 = vmatpush1.msra.mxu0 0.0
    %994 = vmatprep.subr.mxu0 0.0
    %995 = vmatpush1.msra.mxu0 0.0
    %996 = vmatprep.subr.mxu0 0.0
    %997 = vmatpush1.msra.mxu0 0.0
    %998 = vmatprep.subr.mxu0 0.0
    %999 = vmatpush1.msra.mxu0 0.0
    %1000 = vmatprep.subr.mxu0 0.0
    %1001 = vmatpush1.msra.mxu0 0.0
    %1002 = vmatprep.subr.mxu0 0.0
    %1003 = vmatpush1.msra.mxu0 0.0
    %1004 = vmatprep.subr.mxu0 0.0
    %1005 = vmatpush1.msra.mxu0 0.0
    %1006 = vmatprep.subr.mxu0 0.0
    %1007 = vmatpush1.msra.mxu0 0.0
    %1008 = vmatprep.subr.mxu0 0.0
    %1009 = vmatpush1.msra.mxu0 0.0
    %1010 = vmatprep.subr.mxu0 0.0
    %1011 = vmatpush1.msra.mxu0 0.0
    %1012 = vmatprep.subr.mxu0 0.0
    %1013 = vmatpush1.msra.mxu0 0.0
    %1014 = vmatprep.subr.mxu0 0.0
    %1015 = vmatpush1.msra.mxu0 0.0
    %1016 = vmatprep.subr.mxu0 0.0
    %1017 = vmatpush1.msra.mxu0 0.0
    %1018 = vmatprep.subr.mxu0 0.0
    %1019 = vmatpush1.msra.mxu0 0.0
    %1020 = vmatprep.subr.mxu0 0.0
    %1021 = vmatpush1.msra.mxu0 0.0
    %1022 = vmatprep.subr.mxu0 0.0
    %1023 = vmatpush1.msra.mxu0 0.0
    %1024 = vmatprep.subr.mxu0 0.0
    %1025 = vmatpush1.msra.mxu0 0.0
    %1026 = vmatprep.subr.mxu0 0.0
    %1027 = vmatpush1.msra.mxu0 0.0
    %1028 = vmatprep.subr.mxu0 0.0
    %1029 = vmatpush1.msra.mxu0 0.0
    %1030 = vmatprep.subr.mxu0 0.0
    %1031 = vmatpush1.msra.mxu0 0.0
    %1032 = vmatprep.subr.mxu0 0.0
    %1033 = vmatpush1.msra.mxu0 0.0
    %1034 = vmatprep.subr.mxu0 0.0
    %1035 = vmatpush1.msra.mxu0 0.0
    %1036 = vmatprep.subr.mxu0 0.0
    %1037 = vmatpush1.msra.mxu0 0.0
    %1038 = vmatprep.subr.mxu0 0.0
    %1039 = vmatpush1.msra.mxu0 0.0
    %1040 = vmatprep.subr.mxu0 0.0
    %1041 = vmatpush1.msra.mxu0 0.0
    %1042 = vmatprep.subr.mxu0 0.0
    %1043 = vmatpush1.msra.mxu0 0.0
    %1044 = vmatprep.subr.mxu0 0.0
    %1045 = vmatpush1.msra.mxu0 0.0
    %1046 = vmatprep.mubr.f32.mxu0 0.0
    %v1047 = vand.u32 %v587, 4294901760
    %1048 = vmatmul.mubr.f32.gmra.mrb[0].mxu0 %v1047
    %v1049 = vpop.f32.mrb[0].mxu0
    %v1050 = vadd.f32 %v976, %v1049
    %v1051 = vpop.f32.mrb[0].mxu0
    %v1052 = vadd.f32 %v978, %v1051
    %1053 = vdwg.mxu0
    %v1054 = vld [vmem:[%s4] sm:$0x3]
    %v1056 = vlaneseq
    %v1057 = vshrl.u32 %v1056, 7
    %v1058 = vsub.s32 0, %v1057
    %v1059 = vrot.slane %v1054, %v1058
    %v1060 = vlaneseq
    %v1061 = vshrl.u32 %v1060, 7
    %v1062 = vsub.s32 1, %v1061
    %v1063 = vrot.slane %v1054, %v1062
    %v1066 = vadd.f32 %v1050, %v1059
    %v1067 = vadd.f32 %v1052, %v1063
    %v1068 = vtanh.pop %v1067
    %v1069 = vld [vmem:[#allocation9] sm:$0xff]
    %v1070 = vld [vmem:[#allocation9 + $0x8] sm:$0xff]
    %v1071 = vld [vmem:[#allocation9 + $0x10] sm:$0xff]
    %v1072 = vld [vmem:[#allocation9 + $0x18] sm:$0xff]
    %v1073 = vld [vmem:[#allocation9 + $0x20] sm:$0xff]
    %v1074 = vld [vmem:[#allocation9 + $0x28] sm:$0xff]
    %v1075 = vld [vmem:[#allocation9 + $0x30] sm:$0xff]
    %v1076 = vld [vmem:[#allocation9 + $0x38] sm:$0xff]
    %v1077 = vld [vmem:[#allocation9 + $0x40] sm:$0xff]
    %v1078 = vld [vmem:[#allocation9 + $0x48] sm:$0xff]
    %v1079 = vld [vmem:[#allocation9 + $0x50] sm:$0xff]
    %v1080 = vld [vmem:[#allocation9 + $0x58] sm:$0xff]
    %v1081 = vld [vmem:[#allocation9 + $0x60] sm:$0xff]
    %v1082 = vld [vmem:[#allocation9 + $0x68] sm:$0xff]
    %v1083 = vld [vmem:[#allocation9 + $0x70] sm:$0xff]
    %v1084 = vld [vmem:[#allocation9 + $0x78] sm:$0xff]
    %v1085 = vld [vmem:[%s6] sm:$0x1]
    %v1087 = vlaneseq
    %v1088 = vshrl.u32 %v1087, 7
    %v1089 = vsub.s32 0, %v1088
    %v1090 = vrot.slane %v1085, %v1089
    %1092 = vmatprep.subr.mxu0 0.0
    %v1093 = vand.u32 %v1069, 4294901760
    %1094 = vmatpush1.msra.mxu0 %v1093
    %1095 = vmatprep.subr.mxu0 0.0
    %v1096 = vand.u32 %v1070, 4294901760
    %1097 = vmatpush1.msra.mxu0 %v1096
    %1098 = vmatprep.subr.mxu0 0.0
    %v1099 = vand.u32 %v1071, 4294901760
    %1100 = vmatpush1.msra.mxu0 %v1099
    %1101 = vmatprep.subr.mxu0 0.0
    %v1102 = vand.u32 %v1072, 4294901760
    %1103 = vmatpush1.msra.mxu0 %v1102
    %1104 = vmatprep.subr.mxu0 0.0
    %v1105 = vand.u32 %v1073, 4294901760
    %1106 = vmatpush1.msra.mxu0 %v1105
    %1107 = vmatprep.subr.mxu0 0.0
    %v1108 = vand.u32 %v1074, 4294901760
    %1109 = vmatpush1.msra.mxu0 %v1108
    %1110 = vmatprep.subr.mxu0 0.0
    %v1111 = vand.u32 %v1075, 4294901760
    %1112 = vmatpush1.msra.mxu0 %v1111
    %1113 = vmatprep.subr.mxu0 0.0
    %v1114 = vand.u32 %v1076, 4294901760
    %1115 = vmatpush1.msra.mxu0 %v1114
    %1116 = vmatprep.subr.mxu0 0.0
    %v1117 = vand.u32 %v1077, 4294901760
    %1118 = vmatpush1.msra.mxu0 %v1117
    %1119 = vmatprep.subr.mxu0 0.0
    %v1120 = vand.u32 %v1078, 4294901760
    %1121 = vmatpush1.msra.mxu0 %v1120
    %1122 = vmatprep.subr.mxu0 0.0
    %v1123 = vand.u32 %v1079, 4294901760
    %1124 = vmatpush1.msra.mxu0 %v1123
    %1125 = vmatprep.subr.mxu0 0.0
    %v1126 = vand.u32 %v1080, 4294901760
    %1127 = vmatpush1.msra.mxu0 %v1126
    %1128 = vmatprep.subr.mxu0 0.0
    %v1129 = vand.u32 %v1081, 4294901760
    %1130 = vmatpush1.msra.mxu0 %v1129
    %1131 = vmatprep.subr.mxu0 0.0
    %v1132 = vand.u32 %v1082, 4294901760
    %1133 = vmatpush1.msra.mxu0 %v1132
    %1134 = vmatprep.subr.mxu0 0.0
    %v1135 = vand.u32 %v1083, 4294901760
    %1136 = vmatpush1.msra.mxu0 %v1135
    %1137 = vmatprep.subr.mxu0 0.0
    %v1138 = vand.u32 %v1084, 4294901760
    %1139 = vmatpush1.msra.mxu0 %v1138
    %1140 = vmatprep.subr.mxu0 0.0
    %1141 = vmatpush1.msra.mxu0 0.0
    %1142 = vmatprep.subr.mxu0 0.0
    %1143 = vmatpush1.msra.mxu0 0.0
    %1144 = vmatprep.subr.mxu0 0.0
    %1145 = vmatpush1.msra.mxu0 0.0
    %1146 = vmatprep.subr.mxu0 0.0
    %1147 = vmatpush1.msra.mxu0 0.0
    %1148 = vmatprep.subr.mxu0 0.0
    %1149 = vmatpush1.msra.mxu0 0.0
    %1150 = vmatprep.subr.mxu0 0.0
    %1151 = vmatpush1.msra.mxu0 0.0
    %1152 = vmatprep.subr.mxu0 0.0
    %1153 = vmatpush1.msra.mxu0 0.0
    %1154 = vmatprep.subr.mxu0 0.0
    %1155 = vmatpush1.msra.mxu0 0.0
    %1156 = vmatprep.subr.mxu0 0.0
    %1157 = vmatpush1.msra.mxu0 0.0
    %1158 = vmatprep.subr.mxu0 0.0
    %1159 = vmatpush1.msra.mxu0 0.0
    %1160 = vmatprep.subr.mxu0 0.0
    %1161 = vmatpush1.msra.mxu0 0.0
    %1162 = vmatprep.subr.mxu0 0.0
    %1163 = vmatpush1.msra.mxu0 0.0
    %1164 = vmatprep.subr.mxu0 0.0
    %1165 = vmatpush1.msra.mxu0 0.0
    %1166 = vmatprep.subr.mxu0 0.0
    %1167 = vmatpush1.msra.mxu0 0.0
    %1168 = vmatprep.subr.mxu0 0.0
    %1169 = vmatpush1.msra.mxu0 0.0
    %1170 = vmatprep.subr.mxu0 0.0
    %1171 = vmatpush1.msra.mxu0 0.0
    %1172 = vmatprep.mubr.f32.mxu0 0.0
    %v1173 = vand.u32 %v1068, 4294901760
    %v1174 = vsub.f32 %v1068, %v1173
    %v1175 = vand.u32 %v1174, 4294901760
    %v1176 = vsub.f32 %v1174, %v1175
    %v1177 = vand.u32 %v1176, 4294901760
    %1178 = vmatmul.mubr.f32.gmra.mrb[0].mxu0 %v1177
    %v1179 = vpop.f32.mrb[0].mxu0
    %v1180 = vadd.f32 %v1090, %v1179
    %v1181 = vpop.f32.mrb[0].mxu0
    %1182 = vdwg.mxu0
    %1183 = vmatprep.subr.mxu0 0.0
    %v1184 = vand.u32 %v1069, 4294901760
    %v1185 = vsub.f32 %v1069, %v1184
    %v1186 = vand.u32 %v1185, 4294901760
    %v1187 = vsub.f32 %v1185, %v1186
    %v1188 = vand.u32 %v1187, 4294901760
    %1189 = vmatpush1.msra.mxu0 %v1188
    %1190 = vmatprep.subr.mxu0 0.0
    %v1191 = vand.u32 %v1070, 4294901760
    %v1192 = vsub.f32 %v1070, %v1191
    %v1193 = vand.u32 %v1192, 4294901760
    %v1194 = vsub.f32 %v1192, %v1193
    %v1195 = vand.u32 %v1194, 4294901760
    %1196 = vmatpush1.msra.mxu0 %v1195
    %1197 = vmatprep.subr.mxu0 0.0
    %v1198 = vand.u32 %v1071, 4294901760
    %v1199 = vsub.f32 %v1071, %v1198
    %v1200 = vand.u32 %v1199, 4294901760
    %v1201 = vsub.f32 %v1199, %v1200
    %v1202 = vand.u32 %v1201, 4294901760
    %1203 = vmatpush1.msra.mxu0 %v1202
    %1204 = vmatprep.subr.mxu0 0.0
    %v1205 = vand.u32 %v1072, 4294901760
    %v1206 = vsub.f32 %v1072, %v1205
    %v1207 = vand.u32 %v1206, 4294901760
    %v1208 = vsub.f32 %v1206, %v1207
    %v1209 = vand.u32 %v1208, 4294901760
    %1210 = vmatpush1.msra.mxu0 %v1209
    %1211 = vmatprep.subr.mxu0 0.0
    %v1212 = vand.u32 %v1073, 4294901760
    %v1213 = vsub.f32 %v1073, %v1212
    %v1214 = vand.u32 %v1213, 4294901760
    %v1215 = vsub.f32 %v1213, %v1214
    %v1216 = vand.u32 %v1215, 4294901760
    %1217 = vmatpush1.msra.mxu0 %v1216
    %1218 = vmatprep.subr.mxu0 0.0
    %v1219 = vand.u32 %v1074, 4294901760
    %v1220 = vsub.f32 %v1074, %v1219
    %v1221 = vand.u32 %v1220, 4294901760
    %v1222 = vsub.f32 %v1220, %v1221
    %v1223 = vand.u32 %v1222, 4294901760
    %1224 = vmatpush1.msra.mxu0 %v1223
    %1225 = vmatprep.subr.mxu0 0.0
    %v1226 = vand.u32 %v1075, 4294901760
    %v1227 = vsub.f32 %v1075, %v1226
    %v1228 = vand.u32 %v1227, 4294901760
    %v1229 = vsub.f32 %v1227, %v1228
    %v1230 = vand.u32 %v1229, 4294901760
    %1231 = vmatpush1.msra.mxu0 %v1230
    %1232 = vmatprep.subr.mxu0 0.0
    %v1233 = vand.u32 %v1076, 4294901760
    %v1234 = vsub.f32 %v1076, %v1233
    %v1235 = vand.u32 %v1234, 4294901760
    %v1236 = vsub.f32 %v1234, %v1235
    %v1237 = vand.u32 %v1236, 4294901760
    %1238 = vmatpush1.msra.mxu0 %v1237
    %1239 = vmatprep.subr.mxu0 0.0
    %v1240 = vand.u32 %v1077, 4294901760
    %v1241 = vsub.f32 %v1077, %v1240
    %v1242 = vand.u32 %v1241, 4294901760
    %v1243 = vsub.f32 %v1241, %v1242
    %v1244 = vand.u32 %v1243, 4294901760
    %1245 = vmatpush1.msra.mxu0 %v1244
    %1246 = vmatprep.subr.mxu0 0.0
    %v1247 = vand.u32 %v1078, 4294901760
    %v1248 = vsub.f32 %v1078, %v1247
    %v1249 = vand.u32 %v1248, 4294901760
    %v1250 = vsub.f32 %v1248, %v1249
    %v1251 = vand.u32 %v1250, 4294901760
    %1252 = vmatpush1.msra.mxu0 %v1251
    %1253 = vmatprep.subr.mxu0 0.0
    %v1254 = vand.u32 %v1079, 4294901760
    %v1255 = vsub.f32 %v1079, %v1254
    %v1256 = vand.u32 %v1255, 4294901760
    %v1257 = vsub.f32 %v1255, %v1256
    %v1258 = vand.u32 %v1257, 4294901760
    %1259 = vmatpush1.msra.mxu0 %v1258
    %1260 = vmatprep.subr.mxu0 0.0
    %v1261 = vand.u32 %v1080, 4294901760
    %v1262 = vsub.f32 %v1080, %v1261
    %v1263 = vand.u32 %v1262, 4294901760
    %v1264 = vsub.f32 %v1262, %v1263
    %v1265 = vand.u32 %v1264, 4294901760
    %1266 = vmatpush1.msra.mxu0 %v1265
    %1267 = vmatprep.subr.mxu0 0.0
    %v1268 = vand.u32 %v1081, 4294901760
    %v1269 = vsub.f32 %v1081, %v1268
    %v1270 = vand.u32 %v1269, 4294901760
    %v1271 = vsub.f32 %v1269, %v1270
    %v1272 = vand.u32 %v1271, 4294901760
    %1273 = vmatpush1.msra.mxu0 %v1272
    %1274 = vmatprep.subr.mxu0 0.0
    %v1275 = vand.u32 %v1082, 4294901760
    %v1276 = vsub.f32 %v1082, %v1275
    %v1277 = vand.u32 %v1276, 4294901760
    %v1278 = vsub.f32 %v1276, %v1277
    %v1279 = vand.u32 %v1278, 4294901760
    %1280 = vmatpush1.msra.mxu0 %v1279
    %1281 = vmatprep.subr.mxu0 0.0
    %v1282 = vand.u32 %v1083, 4294901760
    %v1283 = vsub.f32 %v1083, %v1282
    %v1284 = vand.u32 %v1283, 4294901760
    %v1285 = vsub.f32 %v1283, %v1284
    %v1286 = vand.u32 %v1285, 4294901760
    %1287 = vmatpush1.msra.mxu0 %v1286
    %1288 = vmatprep.subr.mxu0 0.0
    %v1289 = vand.u32 %v1084, 4294901760
    %v1290 = vsub.f32 %v1084, %v1289
    %v1291 = vand.u32 %v1290, 4294901760
    %v1292 = vsub.f32 %v1290, %v1291
    %v1293 = vand.u32 %v1292, 4294901760
    %1294 = vmatpush1.msra.mxu0 %v1293
    %1295 = vmatprep.subr.mxu0 0.0
    %1296 = vmatpush1.msra.mxu0 0.0
    %1297 = vmatprep.subr.mxu0 0.0
    %1298 = vmatpush1.msra.mxu0 0.0
    %1299 = vmatprep.subr.mxu0 0.0
    %1300 = vmatpush1.msra.mxu0 0.0
    %1301 = vmatprep.subr.mxu0 0.0
    %1302 = vmatpush1.msra.mxu0 0.0
    %1303 = vmatprep.subr.mxu0 0.0
    %1304 = vmatpush1.msra.mxu0 0.0
    %1305 = vmatprep.subr.mxu0 0.0
    %1306 = vmatpush1.msra.mxu0 0.0
    %1307 = vmatprep.subr.mxu0 0.0
    %1308 = vmatpush1.msra.mxu0 0.0
    %1309 = vmatprep.subr.mxu0 0.0
    %1310 = vmatpush1.msra.mxu0 0.0
    %1311 = vmatprep.subr.mxu0 0.0
    %1312 = vmatpush1.msra.mxu0 0.0
    %1313 = vmatprep.subr.mxu0 0.0
    %1314 = vmatpush1.msra.mxu0 0.0
    %1315 = vmatprep.subr.mxu0 0.0
    %1316 = vmatpush1.msra.mxu0 0.0
    %1317 = vmatprep.subr.mxu0 0.0
    %1318 = vmatpush1.msra.mxu0 0.0
    %1319 = vmatprep.subr.mxu0 0.0
    %1320 = vmatpush1.msra.mxu0 0.0
    %1321 = vmatprep.subr.mxu0 0.0
    %1322 = vmatpush1.msra.mxu0 0.0
    %1323 = vmatprep.subr.mxu0 0.0
    %1324 = vmatpush1.msra.mxu0 0.0
    %1325 = vmatprep.subr.mxu0 0.0
    %1326 = vmatpush1.msra.mxu0 0.0
    %1327 = vmatprep.mubr.f32.mxu0 0.0
    %v1328 = vand.u32 %v1068, 4294901760
    %1329 = vmatmul.mubr.f32.gmra.mrb[0].mxu0 %v1328
    %v1330 = vpop.f32.mrb[0].mxu0
    %v1331 = vadd.f32 %v1180, %v1330
    %v1332 = vpop.f32.mrb[0].mxu0
    %1333 = vdwg.mxu0
    %1334 = vmatprep.subr.mxu0 0.0
    %v1335 = vand.u32 %v1069, 4294901760
    %v1336 = vsub.f32 %v1069, %v1335
    %1337 = vmatpush1.msra.mxu0 %v1336
    %1338 = vmatprep.subr.mxu0 0.0
    %v1339 = vand.u32 %v1070, 4294901760
    %v1340 = vsub.f32 %v1070, %v1339
    %1341 = vmatpush1.msra.mxu0 %v1340
    %1342 = vmatprep.subr.mxu0 0.0
    %v1343 = vand.u32 %v1071, 4294901760
    %v1344 = vsub.f32 %v1071, %v1343
    %1345 = vmatpush1.msra.mxu0 %v1344
    %1346 = vmatprep.subr.mxu0 0.0
    %v1347 = vand.u32 %v1072, 4294901760
    %v1348 = vsub.f32 %v1072, %v1347
    %1349 = vmatpush1.msra.mxu0 %v1348
    %1350 = vmatprep.subr.mxu0 0.0
    %v1351 = vand.u32 %v1073, 4294901760
    %v1352 = vsub.f32 %v1073, %v1351
    %1353 = vmatpush1.msra.mxu0 %v1352
    %1354 = vmatprep.subr.mxu0 0.0
    %v1355 = vand.u32 %v1074, 4294901760
    %v1356 = vsub.f32 %v1074, %v1355
    %1357 = vmatpush1.msra.mxu0 %v1356
    %1358 = vmatprep.subr.mxu0 0.0
    %v1359 = vand.u32 %v1075, 4294901760
    %v1360 = vsub.f32 %v1075, %v1359
    %1361 = vmatpush1.msra.mxu0 %v1360
    %1362 = vmatprep.subr.mxu0 0.0
    %v1363 = vand.u32 %v1076, 4294901760
    %v1364 = vsub.f32 %v1076, %v1363
    %1365 = vmatpush1.msra.mxu0 %v1364
    %1366 = vmatprep.subr.mxu0 0.0
    %v1367 = vand.u32 %v1077, 4294901760
    %v1368 = vsub.f32 %v1077, %v1367
    %1369 = vmatpush1.msra.mxu0 %v1368
    %1370 = vmatprep.subr.mxu0 0.0
    %v1371 = vand.u32 %v1078, 4294901760
    %v1372 = vsub.f32 %v1078, %v1371
    %1373 = vmatpush1.msra.mxu0 %v1372
    %1374 = vmatprep.subr.mxu0 0.0
    %v1375 = vand.u32 %v1079, 4294901760
    %v1376 = vsub.f32 %v1079, %v1375
    %1377 = vmatpush1.msra.mxu0 %v1376
    %1378 = vmatprep.subr.mxu0 0.0
    %v1379 = vand.u32 %v1080, 4294901760
    %v1380 = vsub.f32 %v1080, %v1379
    %1381 = vmatpush1.msra.mxu0 %v1380
    %1382 = vmatprep.subr.mxu0 0.0
    %v1383 = vand.u32 %v1081, 4294901760
    %v1384 = vsub.f32 %v1081, %v1383
    %1385 = vmatpush1.msra.mxu0 %v1384
    %1386 = vmatprep.subr.mxu0 0.0
    %v1387 = vand.u32 %v1082, 4294901760
    %v1388 = vsub.f32 %v1082, %v1387
    %1389 = vmatpush1.msra.mxu0 %v1388
    %1390 = vmatprep.subr.mxu0 0.0
    %v1391 = vand.u32 %v1083, 4294901760
    %v1392 = vsub.f32 %v1083, %v1391
    %1393 = vmatpush1.msra.mxu0 %v1392
    %1394 = vmatprep.subr.mxu0 0.0
    %v1395 = vand.u32 %v1084, 4294901760
    %v1396 = vsub.f32 %v1084, %v1395
    %1397 = vmatpush1.msra.mxu0 %v1396
    %1398 = vmatprep.subr.mxu0 0.0
    %1399 = vmatpush1.msra.mxu0 0.0
    %1400 = vmatprep.subr.mxu0 0.0
    %1401 = vmatpush1.msra.mxu0 0.0
    %1402 = vmatprep.subr.mxu0 0.0
    %1403 = vmatpush1.msra.mxu0 0.0
    %1404 = vmatprep.subr.mxu0 0.0
    %1405 = vmatpush1.msra.mxu0 0.0
    %1406 = vmatprep.subr.mxu0 0.0
    %1407 = vmatpush1.msra.mxu0 0.0
    %1408 = vmatprep.subr.mxu0 0.0
    %1409 = vmatpush1.msra.mxu0 0.0
    %1410 = vmatprep.subr.mxu0 0.0
    %1411 = vmatpush1.msra.mxu0 0.0
    %1412 = vmatprep.subr.mxu0 0.0
    %1413 = vmatpush1.msra.mxu0 0.0
    %1414 = vmatprep.subr.mxu0 0.0
    %1415 = vmatpush1.msra.mxu0 0.0
    %1416 = vmatprep.subr.mxu0 0.0
    %1417 = vmatpush1.msra.mxu0 0.0
    %1418 = vmatprep.subr.mxu0 0.0
    %1419 = vmatpush1.msra.mxu0 0.0
    %1420 = vmatprep.subr.mxu0 0.0
    %1421 = vmatpush1.msra.mxu0 0.0
    %1422 = vmatprep.subr.mxu0 0.0
    %1423 = vmatpush1.msra.mxu0 0.0
    %1424 = vmatprep.subr.mxu0 0.0
    %1425 = vmatpush1.msra.mxu0 0.0
    %1426 = vmatprep.subr.mxu0 0.0
    %1427 = vmatpush1.msra.mxu0 0.0
    %1428 = vmatprep.subr.mxu0 0.0
    %1429 = vmatpush1.msra.mxu0 0.0
    %1430 = vmatprep.mubr.f32.mxu0 0.0
    %v1431 = vand.u32 %v1068, 4294901760
    %v1432 = vsub.f32 %v1068, %v1431
    %1433 = vmatmul.mubr.f32.gmra.mrb[0].mxu0 %v1432
    %v1434 = vpop.f32.mrb[0].mxu0
    %v1435 = vadd.f32 %v1331, %v1434
    %v1436 = vpop.f32.mrb[0].mxu0
    %1437 = vdwg.mxu0
    %1438 = vmatprep.subr.mxu0 0.0
    %v1439 = vand.u32 %v1069, 4294901760
    %1440 = vmatpush1.msra.mxu0 %v1439
    %1441 = vmatprep.subr.mxu0 0.0
    %v1442 = vand.u32 %v1070, 4294901760
    %1443 = vmatpush1.msra.mxu0 %v1442
    %1444 = vmatprep.subr.mxu0 0.0
    %v1445 = vand.u32 %v1071, 4294901760
    %1446 = vmatpush1.msra.mxu0 %v1445
    %1447 = vmatprep.subr.mxu0 0.0
    %v1448 = vand.u32 %v1072, 4294901760
    %1449 = vmatpush1.msra.mxu0 %v1448
    %1450 = vmatprep.subr.mxu0 0.0
    %v1451 = vand.u32 %v1073, 4294901760
    %1452 = vmatpush1.msra.mxu0 %v1451
    %1453 = vmatprep.subr.mxu0 0.0
    %v1454 = vand.u32 %v1074, 4294901760
    %1455 = vmatpush1.msra.mxu0 %v1454
    %1456 = vmatprep.subr.mxu0 0.0
    %v1457 = vand.u32 %v1075, 4294901760
    %1458 = vmatpush1.msra.mxu0 %v1457
    %1459 = vmatprep.subr.mxu0 0.0
    %v1460 = vand.u32 %v1076, 4294901760
    %1461 = vmatpush1.msra.mxu0 %v1460
    %1462 = vmatprep.subr.mxu0 0.0
    %v1463 = vand.u32 %v1077, 4294901760
    %1464 = vmatpush1.msra.mxu0 %v1463
    %1465 = vmatprep.subr.mxu0 0.0
    %v1466 = vand.u32 %v1078, 4294901760
    %1467 = vmatpush1.msra.mxu0 %v1466
    %1468 = vmatprep.subr.mxu0 0.0
    %v1469 = vand.u32 %v1079, 4294901760
    %1470 = vmatpush1.msra.mxu0 %v1469
    %1471 = vmatprep.subr.mxu0 0.0
    %v1472 = vand.u32 %v1080, 4294901760
    %1473 = vmatpush1.msra.mxu0 %v1472
    %1474 = vmatprep.subr.mxu0 0.0
    %v1475 = vand.u32 %v1081, 4294901760
    %1476 = vmatpush1.msra.mxu0 %v1475
    %1477 = vmatprep.subr.mxu0 0.0
    %v1478 = vand.u32 %v1082, 4294901760
    %1479 = vmatpush1.msra.mxu0 %v1478
    %1480 = vmatprep.subr.mxu0 0.0
    %v1481 = vand.u32 %v1083, 4294901760
    %1482 = vmatpush1.msra.mxu0 %v1481
    %1483 = vmatprep.subr.mxu0 0.0
    %v1484 = vand.u32 %v1084, 4294901760
    %1485 = vmatpush1.msra.mxu0 %v1484
    %1486 = vmatprep.subr.mxu0 0.0
    %1487 = vmatpush1.msra.mxu0 0.0
    %1488 = vmatprep.subr.mxu0 0.0
    %1489 = vmatpush1.msra.mxu0 0.0
    %1490 = vmatprep.subr.mxu0 0.0
    %1491 = vmatpush1.msra.mxu0 0.0
    %1492 = vmatprep.subr.mxu0 0.0
    %1493 = vmatpush1.msra.mxu0 0.0
    %1494 = vmatprep.subr.mxu0 0.0
    %1495 = vmatpush1.msra.mxu0 0.0
    %1496 = vmatprep.subr.mxu0 0.0
    %1497 = vmatpush1.msra.mxu0 0.0
    %1498 = vmatprep.subr.mxu0 0.0
    %1499 = vmatpush1.msra.mxu0 0.0
    %1500 = vmatprep.subr.mxu0 0.0
    %1501 = vmatpush1.msra.mxu0 0.0
    %1502 = vmatprep.subr.mxu0 0.0
    %1503 = vmatpush1.msra.mxu0 0.0
    %1504 = vmatprep.subr.mxu0 0.0
    %1505 = vmatpush1.msra.mxu0 0.0
    %1506 = vmatprep.subr.mxu0 0.0
    %1507 = vmatpush1.msra.mxu0 0.0
    %1508 = vmatprep.subr.mxu0 0.0
    %1509 = vmatpush1.msra.mxu0 0.0
    %1510 = vmatprep.subr.mxu0 0.0
    %1511 = vmatpush1.msra.mxu0 0.0
    %1512 = vmatprep.subr.mxu0 0.0
    %1513 = vmatpush1.msra.mxu0 0.0
    %1514 = vmatprep.subr.mxu0 0.0
    %1515 = vmatpush1.msra.mxu0 0.0
    %1516 = vmatprep.subr.mxu0 0.0
    %1517 = vmatpush1.msra.mxu0 0.0
    %1518 = vmatprep.mubr.f32.mxu0 0.0
    %v1519 = vand.u32 %v1068, 4294901760
    %v1520 = vsub.f32 %v1068, %v1519
    %v1521 = vand.u32 %v1520, 4294901760
    %1522 = vmatmul.mubr.f32.gmra.mrb[0].mxu0 %v1521
    %v1523 = vpop.f32.mrb[0].mxu0
    %v1524 = vadd.f32 %v1435, %v1523
    %v1525 = vpop.f32.mrb[0].mxu0
    %1526 = vdwg.mxu0
    %1527 = vmatprep.subr.mxu0 0.0
    %v1528 = vand.u32 %v1069, 4294901760
    %v1529 = vsub.f32 %v1069, %v1528
    %v1530 = vand.u32 %v1529, 4294901760
    %1531 = vmatpush1.msra.mxu0 %v1530
    %1532 = vmatprep.subr.mxu0 0.0
    %v1533 = vand.u32 %v1070, 4294901760
    %v1534 = vsub.f32 %v1070, %v1533
    %v1535 = vand.u32 %v1534, 4294901760
    %1536 = vmatpush1.msra.mxu0 %v1535
    %1537 = vmatprep.subr.mxu0 0.0
    %v1538 = vand.u32 %v1071, 4294901760
    %v1539 = vsub.f32 %v1071, %v1538
    %v1540 = vand.u32 %v1539, 4294901760
    %1541 = vmatpush1.msra.mxu0 %v1540
    %1542 = vmatprep.subr.mxu0 0.0
    %v1543 = vand.u32 %v1072, 4294901760
    %v1544 = vsub.f32 %v1072, %v1543
    %v1545 = vand.u32 %v1544, 4294901760
    %1546 = vmatpush1.msra.mxu0 %v1545
    %1547 = vmatprep.subr.mxu0 0.0
    %v1548 = vand.u32 %v1073, 4294901760
    %v1549 = vsub.f32 %v1073, %v1548
    %v1550 = vand.u32 %v1549, 4294901760
    %1551 = vmatpush1.msra.mxu0 %v1550
    %1552 = vmatprep.subr.mxu0 0.0
    %v1553 = vand.u32 %v1074, 4294901760
    %v1554 = vsub.f32 %v1074, %v1553
    %v1555 = vand.u32 %v1554, 4294901760
    %1556 = vmatpush1.msra.mxu0 %v1555
    %1557 = vmatprep.subr.mxu0 0.0
    %v1558 = vand.u32 %v1075, 4294901760
    %v1559 = vsub.f32 %v1075, %v1558
    %v1560 = vand.u32 %v1559, 4294901760
    %1561 = vmatpush1.msra.mxu0 %v1560
    %1562 = vmatprep.subr.mxu0 0.0
    %v1563 = vand.u32 %v1076, 4294901760
    %v1564 = vsub.f32 %v1076, %v1563
    %v1565 = vand.u32 %v1564, 4294901760
    %1566 = vmatpush1.msra.mxu0 %v1565
    %1567 = vmatprep.subr.mxu0 0.0
    %v1568 = vand.u32 %v1077, 4294901760
    %v1569 = vsub.f32 %v1077, %v1568
    %v1570 = vand.u32 %v1569, 4294901760
    %1571 = vmatpush1.msra.mxu0 %v1570
    %1572 = vmatprep.subr.mxu0 0.0
    %v1573 = vand.u32 %v1078, 4294901760
    %v1574 = vsub.f32 %v1078, %v1573
    %v1575 = vand.u32 %v1574, 4294901760
    %1576 = vmatpush1.msra.mxu0 %v1575
    %1577 = vmatprep.subr.mxu0 0.0
    %v1578 = vand.u32 %v1079, 4294901760
    %v1579 = vsub.f32 %v1079, %v1578
    %v1580 = vand.u32 %v1579, 4294901760
    %1581 = vmatpush1.msra.mxu0 %v1580
    %1582 = vmatprep.subr.mxu0 0.0
    %v1583 = vand.u32 %v1080, 4294901760
    %v1584 = vsub.f32 %v1080, %v1583
    %v1585 = vand.u32 %v1584, 4294901760
    %1586 = vmatpush1.msra.mxu0 %v1585
    %1587 = vmatprep.subr.mxu0 0.0
    %v1588 = vand.u32 %v1081, 4294901760
    %v1589 = vsub.f32 %v1081, %v1588
    %v1590 = vand.u32 %v1589, 4294901760
    %1591 = vmatpush1.msra.mxu0 %v1590
    %1592 = vmatprep.subr.mxu0 0.0
    %v1593 = vand.u32 %v1082, 4294901760
    %v1594 = vsub.f32 %v1082, %v1593
    %v1595 = vand.u32 %v1594, 4294901760
    %1596 = vmatpush1.msra.mxu0 %v1595
    %1597 = vmatprep.subr.mxu0 0.0
    %v1598 = vand.u32 %v1083, 4294901760
    %v1599 = vsub.f32 %v1083, %v1598
    %v1600 = vand.u32 %v1599, 4294901760
    %1601 = vmatpush1.msra.mxu0 %v1600
    %1602 = vmatprep.subr.mxu0 0.0
    %v1603 = vand.u32 %v1084, 4294901760
    %v1604 = vsub.f32 %v1084, %v1603
    %v1605 = vand.u32 %v1604, 4294901760
    %1606 = vmatpush1.msra.mxu0 %v1605
    %1607 = vmatprep.subr.mxu0 0.0
    %1608 = vmatpush1.msra.mxu0 0.0
    %1609 = vmatprep.subr.mxu0 0.0
    %1610 = vmatpush1.msra.mxu0 0.0
    %1611 = vmatprep.subr.mxu0 0.0
    %1612 = vmatpush1.msra.mxu0 0.0
    %1613 = vmatprep.subr.mxu0 0.0
    %1614 = vmatpush1.msra.mxu0 0.0
    %1615 = vmatprep.subr.mxu0 0.0
    %1616 = vmatpush1.msra.mxu0 0.0
    %1617 = vmatprep.subr.mxu0 0.0
    %1618 = vmatpush1.msra.mxu0 0.0
    %1619 = vmatprep.subr.mxu0 0.0
    %1620 = vmatpush1.msra.mxu0 0.0
    %1621 = vmatprep.subr.mxu0 0.0
    %1622 = vmatpush1.msra.mxu0 0.0
    %1623 = vmatprep.subr.mxu0 0.0
    %1624 = vmatpush1.msra.mxu0 0.0
    %1625 = vmatprep.subr.mxu0 0.0
    %1626 = vmatpush1.msra.mxu0 0.0
    %1627 = vmatprep.subr.mxu0 0.0
    %1628 = vmatpush1.msra.mxu0 0.0
    %1629 = vmatprep.subr.mxu0 0.0
    %1630 = vmatpush1.msra.mxu0 0.0
    %1631 = vmatprep.subr.mxu0 0.0
    %1632 = vmatpush1.msra.mxu0 0.0
    %1633 = vmatprep.subr.mxu0 0.0
    %1634 = vmatpush1.msra.mxu0 0.0
    %1635 = vmatprep.subr.mxu0 0.0
    %1636 = vmatpush1.msra.mxu0 0.0
    %1637 = vmatprep.subr.mxu0 0.0
    %1638 = vmatpush1.msra.mxu0 0.0
    %1639 = vmatprep.mubr.f32.mxu0 0.0
    %v1640 = vand.u32 %v1068, 4294901760
    %1641 = vmatmul.mubr.f32.gmra.mrb[0].mxu0 %v1640
    %v1642 = vpop.f32.mrb[0].mxu0
    %v1643 = vadd.f32 %v1524, %v1642
    %v1644 = vpop.f32.mrb[0].mxu0
    %1645 = vdwg.mxu0
    %1646 = vmatprep.subr.mxu0 0.0
    %v1647 = vand.u32 %v1069, 4294901760
    %1648 = vmatpush1.msra.mxu0 %v1647
    %1649 = vmatprep.subr.mxu0 0.0
    %v1650 = vand.u32 %v1070, 4294901760
    %1651 = vmatpush1.msra.mxu0 %v1650
    %1652 = vmatprep.subr.mxu0 0.0
    %v1653 = vand.u32 %v1071, 4294901760
    %1654 = vmatpush1.msra.mxu0 %v1653
    %1655 = vmatprep.subr.mxu0 0.0
    %v1656 = vand.u32 %v1072, 4294901760
    %1657 = vmatpush1.msra.mxu0 %v1656
    %1658 = vmatprep.subr.mxu0 0.0
    %v1659 = vand.u32 %v1073, 4294901760
    %1660 = vmatpush1.msra.mxu0 %v1659
    %1661 = vmatprep.subr.mxu0 0.0
    %v1662 = vand.u32 %v1074, 4294901760
    %1663 = vmatpush1.msra.mxu0 %v1662
    %1664 = vmatprep.subr.mxu0 0.0
    %v1665 = vand.u32 %v1075, 4294901760
    %1666 = vmatpush1.msra.mxu0 %v1665
    %1667 = vmatprep.subr.mxu0 0.0
    %v1668 = vand.u32 %v1076, 4294901760
    %1669 = vmatpush1.msra.mxu0 %v1668
    %1670 = vmatprep.subr.mxu0 0.0
    %v1671 = vand.u32 %v1077, 4294901760
    %1672 = vmatpush1.msra.mxu0 %v1671
    %1673 = vmatprep.subr.mxu0 0.0
    %v1674 = vand.u32 %v1078, 4294901760
    %1675 = vmatpush1.msra.mxu0 %v1674
    %1676 = vmatprep.subr.mxu0 0.0
    %v1677 = vand.u32 %v1079, 4294901760
    %1678 = vmatpush1.msra.mxu0 %v1677
    %1679 = vmatprep.subr.mxu0 0.0
    %v1680 = vand.u32 %v1080, 4294901760
    %1681 = vmatpush1.msra.mxu0 %v1680
    %1682 = vmatprep.subr.mxu0 0.0
    %v1683 = vand.u32 %v1081, 4294901760
    %1684 = vmatpush1.msra.mxu0 %v1683
    %1685 = vmatprep.subr.mxu0 0.0
    %v1686 = vand.u32 %v1082, 4294901760
    %1687 = vmatpush1.msra.mxu0 %v1686
    %1688 = vmatprep.subr.mxu0 0.0
    %v1689 = vand.u32 %v1083, 4294901760
    %1690 = vmatpush1.msra.mxu0 %v1689
    %1691 = vmatprep.subr.mxu0 0.0
    %v1692 = vand.u32 %v1084, 4294901760
    %1693 = vmatpush1.msra.mxu0 %v1692
    %1694 = vmatprep.subr.mxu0 0.0
    %1695 = vmatpush1.msra.mxu0 0.0
    %1696 = vmatprep.subr.mxu0 0.0
    %1697 = vmatpush1.msra.mxu0 0.0
    %1698 = vmatprep.subr.mxu0 0.0
    %1699 = vmatpush1.msra.mxu0 0.0
    %1700 = vmatprep.subr.mxu0 0.0
    %1701 = vmatpush1.msra.mxu0 0.0
    %1702 = vmatprep.subr.mxu0 0.0
    %1703 = vmatpush1.msra.mxu0 0.0
    %1704 = vmatprep.subr.mxu0 0.0
    %1705 = vmatpush1.msra.mxu0 0.0
    %1706 = vmatprep.subr.mxu0 0.0
    %1707 = vmatpush1.msra.mxu0 0.0
    %1708 = vmatprep.subr.mxu0 0.0
    %1709 = vmatpush1.msra.mxu0 0.0
    %1710 = vmatprep.subr.mxu0 0.0
    %1711 = vmatpush1.msra.mxu0 0.0
    %1712 = vmatprep.subr.mxu0 0.0
    %1713 = vmatpush1.msra.mxu0 0.0
    %1714 = vmatprep.subr.mxu0 0.0
    %1715 = vmatpush1.msra.mxu0 0.0
    %1716 = vmatprep.subr.mxu0 0.0
    %1717 = vmatpush1.msra.mxu0 0.0
    %1718 = vmatprep.subr.mxu0 0.0
    %1719 = vmatpush1.msra.mxu0 0.0
    %1720 = vmatprep.subr.mxu0 0.0
    %1721 = vmatpush1.msra.mxu0 0.0
    %1722 = vmatprep.subr.mxu0 0.0
    %1723 = vmatpush1.msra.mxu0 0.0
    %1724 = vmatprep.subr.mxu0 0.0
    %1725 = vmatpush1.msra.mxu0 0.0
    %1726 = vmatprep.mubr.f32.mxu0 0.0
    %v1727 = vand.u32 %v1068, 4294901760
    %1728 = vmatmul.mubr.f32.gmra.mrb[0].mxu0 %v1727
    %v1729 = vpop.f32.mrb[0].mxu0
    %v1730 = vadd.f32 %v1643, %v1729
    %v1731 = vpop.f32.mrb[0].mxu0
    %1732 = vdwg.mxu0
    %v1733 = vtanh.pop %v1730
    %s1734 = scalar_lea.vmem [#allocation9], 128
    %v1735 = vld [vmem:[%s1734] sm:$0xff]
    %v1736 = vld [vmem:[%s1734 + $0x8] sm:$0xff]
    %v1737 = vld [vmem:[%s1734 + $0x10] sm:$0xff]
    %v1738 = vld [vmem:[%s1734 + $0x18] sm:$0xff]
    %v1739 = vld [vmem:[%s1734 + $0x20] sm:$0xff]
    %v1740 = vld [vmem:[%s1734 + $0x28] sm:$0xff]
    %v1741 = vld [vmem:[%s1734 + $0x30] sm:$0xff]
    %v1742 = vld [vmem:[%s1734 + $0x38] sm:$0xff]
    %v1743 = vld [vmem:[%s1734 + $0x40] sm:$0xff]
    %v1744 = vld [vmem:[%s1734 + $0x48] sm:$0xff]
    %v1745 = vld [vmem:[%s1734 + $0x50] sm:$0xff]
    %v1746 = vld [vmem:[%s1734 + $0x58] sm:$0xff]
    %v1747 = vld [vmem:[%s1734 + $0x60] sm:$0xff]
    %v1748 = vld [vmem:[%s1734 + $0x68] sm:$0xff]
    %v1749 = vld [vmem:[%s1734 + $0x70] sm:$0xff]
    %v1750 = vld [vmem:[%s1734 + $0x78] sm:$0xff]
    %s1751 = scalar_lea.vmem %s6, 1
    %v1752 = vld [vmem:[%s1751] sm:$0x1]
    %v1754 = vlaneseq
    %v1755 = vshrl.u32 %v1754, 7
    %v1756 = vsub.s32 0, %v1755
    %v1757 = vrot.slane %v1752, %v1756
    %1759 = vmatprep.subr.mxu0 0.0
    %v1760 = vand.u32 %v1735, 4294901760
    %1761 = vmatpush1.msra.mxu0 %v1760
    %1762 = vmatprep.subr.mxu0 0.0
    %v1763 = vand.u32 %v1736, 4294901760
    %1764 = vmatpush1.msra.mxu0 %v1763
    %1765 = vmatprep.subr.mxu0 0.0
    %v1766 = vand.u32 %v1737, 4294901760
    %1767 = vmatpush1.msra.mxu0 %v1766
    %1768 = vmatprep.subr.mxu0 0.0
    %v1769 = vand.u32 %v1738, 4294901760
    %1770 = vmatpush1.msra.mxu0 %v1769
    %1771 = vmatprep.subr.mxu0 0.0
    %v1772 = vand.u32 %v1739, 4294901760
    %1773 = vmatpush1.msra.mxu0 %v1772
    %1774 = vmatprep.subr.mxu0 0.0
    %v1775 = vand.u32 %v1740, 4294901760
    %1776 = vmatpush1.msra.mxu0 %v1775
    %1777 = vmatprep.subr.mxu0 0.0
    %v1778 = vand.u32 %v1741, 4294901760
    %1779 = vmatpush1.msra.mxu0 %v1778
    %1780 = vmatprep.subr.mxu0 0.0
    %v1781 = vand.u32 %v1742, 4294901760
    %1782 = vmatpush1.msra.mxu0 %v1781
    %1783 = vmatprep.subr.mxu0 0.0
    %v1784 = vand.u32 %v1743, 4294901760
    %1785 = vmatpush1.msra.mxu0 %v1784
    %1786 = vmatprep.subr.mxu0 0.0
    %v1787 = vand.u32 %v1744, 4294901760
    %1788 = vmatpush1.msra.mxu0 %v1787
    %1789 = vmatprep.subr.mxu0 0.0
    %v1790 = vand.u32 %v1745, 4294901760
    %1791 = vmatpush1.msra.mxu0 %v1790
    %1792 = vmatprep.subr.mxu0 0.0
    %v1793 = vand.u32 %v1746, 4294901760
    %1794 = vmatpush1.msra.mxu0 %v1793
    %1795 = vmatprep.subr.mxu0 0.0
    %v1796 = vand.u32 %v1747, 4294901760
    %1797 = vmatpush1.msra.mxu0 %v1796
    %1798 = vmatprep.subr.mxu0 0.0
    %v1799 = vand.u32 %v1748, 4294901760
    %1800 = vmatpush1.msra.mxu0 %v1799
    %1801 = vmatprep.subr.mxu0 0.0
    %v1802 = vand.u32 %v1749, 4294901760
    %1803 = vmatpush1.msra.mxu0 %v1802
    %1804 = vmatprep.subr.mxu0 0.0
    %v1805 = vand.u32 %v1750, 4294901760
    %1806 = vmatpush1.msra.mxu0 %v1805
    %1807 = vmatprep.subr.mxu0 0.0
    %1808 = vmatpush1.msra.mxu0 0.0
    %1809 = vmatprep.subr.mxu0 0.0
    %1810 = vmatpush1.msra.mxu0 0.0
    %1811 = vmatprep.subr.mxu0 0.0
    %1812 = vmatpush1.msra.mxu0 0.0
    %1813 = vmatprep.subr.mxu0 0.0
    %1814 = vmatpush1.msra.mxu0 0.0
    %1815 = vmatprep.subr.mxu0 0.0
    %1816 = vmatpush1.msra.mxu0 0.0
    %1817 = vmatprep.subr.mxu0 0.0
    %1818 = vmatpush1.msra.mxu0 0.0
    %1819 = vmatprep.subr.mxu0 0.0
    %1820 = vmatpush1.msra.mxu0 0.0
    %1821 = vmatprep.subr.mxu0 0.0
    %1822 = vmatpush1.msra.mxu0 0.0
    %1823 = vmatprep.subr.mxu0 0.0
    %1824 = vmatpush1.msra.mxu0 0.0
    %1825 = vmatprep.subr.mxu0 0.0
    %1826 = vmatpush1.msra.mxu0 0.0
    %1827 = vmatprep.subr.mxu0 0.0
    %1828 = vmatpush1.msra.mxu0 0.0
    %1829 = vmatprep.subr.mxu0 0.0
    %1830 = vmatpush1.msra.mxu0 0.0
    %1831 = vmatprep.subr.mxu0 0.0
    %1832 = vmatpush1.msra.mxu0 0.0
    %1833 = vmatprep.subr.mxu0 0.0
    %1834 = vmatpush1.msra.mxu0 0.0
    %1835 = vmatprep.subr.mxu0 0.0
    %1836 = vmatpush1.msra.mxu0 0.0
    %1837 = vmatprep.subr.mxu0 0.0
    %1838 = vmatpush1.msra.mxu0 0.0
    %1839 = vmatprep.mubr.f32.mxu0 0.0
    %v1840 = vand.u32 %v1733, 4294901760
    %v1841 = vsub.f32 %v1733, %v1840
    %v1842 = vand.u32 %v1841, 4294901760
    %v1843 = vsub.f32 %v1841, %v1842
    %v1844 = vand.u32 %v1843, 4294901760
    %1845 = vmatmul.mubr.f32.gmra.mrb[0].mxu0 %v1844
    %v1846 = vpop.f32.mrb[0].mxu0
    %v1847 = vadd.f32 %v1757, %v1846
    %v1848 = vpop.f32.mrb[0].mxu0
    %1849 = vdwg.mxu0
    %1850 = vmatprep.subr.mxu0 0.0
    %v1851 = vand.u32 %v1735, 4294901760
    %v1852 = vsub.f32 %v1735, %v1851
    %v1853 = vand.u32 %v1852, 4294901760
    %v1854 = vsub.f32 %v1852, %v1853
    %v1855 = vand.u32 %v1854, 4294901760
    %1856 = vmatpush1.msra.mxu0 %v1855
    %1857 = vmatprep.subr.mxu0 0.0
    %v1858 = vand.u32 %v1736, 4294901760
    %v1859 = vsub.f32 %v1736, %v1858
    %v1860 = vand.u32 %v1859, 4294901760
    %v1861 = vsub.f32 %v1859, %v1860
    %v1862 = vand.u32 %v1861, 4294901760
    %1863 = vmatpush1.msra.mxu0 %v1862
    %1864 = vmatprep.subr.mxu0 0.0
    %v1865 = vand.u32 %v1737, 4294901760
    %v1866 = vsub.f32 %v1737, %v1865
    %v1867 = vand.u32 %v1866, 4294901760
    %v1868 = vsub.f32 %v1866, %v1867
    %v1869 = vand.u32 %v1868, 4294901760
    %1870 = vmatpush1.msra.mxu0 %v1869
    %1871 = vmatprep.subr.mxu0 0.0
    %v1872 = vand.u32 %v1738, 4294901760
    %v1873 = vsub.f32 %v1738, %v1872
    %v1874 = vand.u32 %v1873, 4294901760
    %v1875 = vsub.f32 %v1873, %v1874
    %v1876 = vand.u32 %v1875, 4294901760
    %1877 = vmatpush1.msra.mxu0 %v1876
    %1878 = vmatprep.subr.mxu0 0.0
    %v1879 = vand.u32 %v1739, 4294901760
    %v1880 = vsub.f32 %v1739, %v1879
    %v1881 = vand.u32 %v1880, 4294901760
    %v1882 = vsub.f32 %v1880, %v1881
    %v1883 = vand.u32 %v1882, 4294901760
    %1884 = vmatpush1.msra.mxu0 %v1883
    %1885 = vmatprep.subr.mxu0 0.0
    %v1886 = vand.u32 %v1740, 4294901760
    %v1887 = vsub.f32 %v1740, %v1886
    %v1888 = vand.u32 %v1887, 4294901760
    %v1889 = vsub.f32 %v1887, %v1888
    %v1890 = vand.u32 %v1889, 4294901760
    %1891 = vmatpush1.msra.mxu0 %v1890
    %1892 = vmatprep.subr.mxu0 0.0
    %v1893 = vand.u32 %v1741, 4294901760
    %v1894 = vsub.f32 %v1741, %v1893
    %v1895 = vand.u32 %v1894, 4294901760
    %v1896 = vsub.f32 %v1894, %v1895
    %v1897 = vand.u32 %v1896, 4294901760
    %1898 = vmatpush1.msra.mxu0 %v1897
    %1899 = vmatprep.subr.mxu0 0.0
    %v1900 = vand.u32 %v1742, 4294901760
    %v1901 = vsub.f32 %v1742, %v1900
    %v1902 = vand.u32 %v1901, 4294901760
    %v1903 = vsub.f32 %v1901, %v1902
    %v1904 = vand.u32 %v1903, 4294901760
    %1905 = vmatpush1.msra.mxu0 %v1904
    %1906 = vmatprep.subr.mxu0 0.0
    %v1907 = vand.u32 %v1743, 4294901760
    %v1908 = vsub.f32 %v1743, %v1907
    %v1909 = vand.u32 %v1908, 4294901760
    %v1910 = vsub.f32 %v1908, %v1909
    %v1911 = vand.u32 %v1910, 4294901760
    %1912 = vmatpush1.msra.mxu0 %v1911
    %1913 = vmatprep.subr.mxu0 0.0
    %v1914 = vand.u32 %v1744, 4294901760
    %v1915 = vsub.f32 %v1744, %v1914
    %v1916 = vand.u32 %v1915, 4294901760
    %v1917 = vsub.f32 %v1915, %v1916
    %v1918 = vand.u32 %v1917, 4294901760
    %1919 = vmatpush1.msra.mxu0 %v1918
    %1920 = vmatprep.subr.mxu0 0.0
    %v1921 = vand.u32 %v1745, 4294901760
    %v1922 = vsub.f32 %v1745, %v1921
    %v1923 = vand.u32 %v1922, 4294901760
    %v1924 = vsub.f32 %v1922, %v1923
    %v1925 = vand.u32 %v1924, 4294901760
    %1926 = vmatpush1.msra.mxu0 %v1925
    %1927 = vmatprep.subr.mxu0 0.0
    %v1928 = vand.u32 %v1746, 4294901760
    %v1929 = vsub.f32 %v1746, %v1928
    %v1930 = vand.u32 %v1929, 4294901760
    %v1931 = vsub.f32 %v1929, %v1930
    %v1932 = vand.u32 %v1931, 4294901760
    %1933 = vmatpush1.msra.mxu0 %v1932
    %1934 = vmatprep.subr.mxu0 0.0
    %v1935 = vand.u32 %v1747, 4294901760
    %v1936 = vsub.f32 %v1747, %v1935
    %v1937 = vand.u32 %v1936, 4294901760
    %v1938 = vsub.f32 %v1936, %v1937
    %v1939 = vand.u32 %v1938, 4294901760
    %1940 = vmatpush1.msra.mxu0 %v1939
    %1941 = vmatprep.subr.mxu0 0.0
    %v1942 = vand.u32 %v1748, 4294901760
    %v1943 = vsub.f32 %v1748, %v1942
    %v1944 = vand.u32 %v1943, 4294901760
    %v1945 = vsub.f32 %v1943, %v1944
    %v1946 = vand.u32 %v1945, 4294901760
    %1947 = vmatpush1.msra.mxu0 %v1946
    %1948 = vmatprep.subr.mxu0 0.0
    %v1949 = vand.u32 %v1749, 4294901760
    %v1950 = vsub.f32 %v1749, %v1949
    %v1951 = vand.u32 %v1950, 4294901760
    %v1952 = vsub.f32 %v1950, %v1951
    %v1953 = vand.u32 %v1952, 4294901760
    %1954 = vmatpush1.msra.mxu0 %v1953
    %1955 = vmatprep.subr.mxu0 0.0
    %v1956 = vand.u32 %v1750, 4294901760
    %v1957 = vsub.f32 %v1750, %v1956
    %v1958 = vand.u32 %v1957, 4294901760
    %v1959 = vsub.f32 %v1957, %v1958
    %v1960 = vand.u32 %v1959, 4294901760
    %1961 = vmatpush1.msra.mxu0 %v1960
    %1962 = vmatprep.subr.mxu0 0.0
    %1963 = vmatpush1.msra.mxu0 0.0
    %1964 = vmatprep.subr.mxu0 0.0
    %1965 = vmatpush1.msra.mxu0 0.0
    %1966 = vmatprep.subr.mxu0 0.0
    %1967 = vmatpush1.msra.mxu0 0.0
    %1968 = vmatprep.subr.mxu0 0.0
    %1969 = vmatpush1.msra.mxu0 0.0
    %1970 = vmatprep.subr.mxu0 0.0
    %1971 = vmatpush1.msra.mxu0 0.0
    %1972 = vmatprep.subr.mxu0 0.0
    %1973 = vmatpush1.msra.mxu0 0.0
    %1974 = vmatprep.subr.mxu0 0.0
    %1975 = vmatpush1.msra.mxu0 0.0
    %1976 = vmatprep.subr.mxu0 0.0
    %1977 = vmatpush1.msra.mxu0 0.0
    %1978 = vmatprep.subr.mxu0 0.0
    %1979 = vmatpush1.msra.mxu0 0.0
    %1980 = vmatprep.subr.mxu0 0.0
    %1981 = vmatpush1.msra.mxu0 0.0
    %1982 = vmatprep.subr.mxu0 0.0
    %1983 = vmatpush1.msra.mxu0 0.0
    %1984 = vmatprep.subr.mxu0 0.0
    %1985 = vmatpush1.msra.mxu0 0.0
    %1986 = vmatprep.subr.mxu0 0.0
    %1987 = vmatpush1.msra.mxu0 0.0
    %1988 = vmatprep.subr.mxu0 0.0
    %1989 = vmatpush1.msra.mxu0 0.0
    %1990 = vmatprep.subr.mxu0 0.0
    %1991 = vmatpush1.msra.mxu0 0.0
    %1992 = vmatprep.subr.mxu0 0.0
    %1993 = vmatpush1.msra.mxu0 0.0
    %1994 = vmatprep.mubr.f32.mxu0 0.0
    %v1995 = vand.u32 %v1733, 4294901760
    %1996 = vmatmul.mubr.f32.gmra.mrb[0].mxu0 %v1995
    %v1997 = vpop.f32.mrb[0].mxu0
    %v1998 = vadd.f32 %v1847, %v1997
    %v1999 = vpop.f32.mrb[0].mxu0
    %2000 = vdwg.mxu0
    %2001 = vmatprep.subr.mxu0 0.0
    %v2002 = vand.u32 %v1735, 4294901760
    %v2003 = vsub.f32 %v1735, %v2002
    %2004 = vmatpush1.msra.mxu0 %v2003
    %2005 = vmatprep.subr.mxu0 0.0
    %v2006 = vand.u32 %v1736, 4294901760
    %v2007 = vsub.f32 %v1736, %v2006
    %2008 = vmatpush1.msra.mxu0 %v2007
    %2009 = vmatprep.subr.mxu0 0.0
    %v2010 = vand.u32 %v1737, 4294901760
    %v2011 = vsub.f32 %v1737, %v2010
    %2012 = vmatpush1.msra.mxu0 %v2011
    %2013 = vmatprep.subr.mxu0 0.0
    %v2014 = vand.u32 %v1738, 4294901760
    %v2015 = vsub.f32 %v1738, %v2014
    %2016 = vmatpush1.msra.mxu0 %v2015
    %2017 = vmatprep.subr.mxu0 0.0
    %v2018 = vand.u32 %v1739, 4294901760
    %v2019 = vsub.f32 %v1739, %v2018
    %2020 = vmatpush1.msra.mxu0 %v2019
    %2021 = vmatprep.subr.mxu0 0.0
    %v2022 = vand.u32 %v1740, 4294901760
    %v2023 = vsub.f32 %v1740, %v2022
    %2024 = vmatpush1.msra.mxu0 %v2023
    %2025 = vmatprep.subr.mxu0 0.0
    %v2026 = vand.u32 %v1741, 4294901760
    %v2027 = vsub.f32 %v1741, %v2026
    %2028 = vmatpush1.msra.mxu0 %v2027
    %2029 = vmatprep.subr.mxu0 0.0
    %v2030 = vand.u32 %v1742, 4294901760
    %v2031 = vsub.f32 %v1742, %v2030
    %2032 = vmatpush1.msra.mxu0 %v2031
    %2033 = vmatprep.subr.mxu0 0.0
    %v2034 = vand.u32 %v1743, 4294901760
    %v2035 = vsub.f32 %v1743, %v2034
    %2036 = vmatpush1.msra.mxu0 %v2035
    %2037 = vmatprep.subr.mxu0 0.0
    %v2038 = vand.u32 %v1744, 4294901760
    %v2039 = vsub.f32 %v1744, %v2038
    %2040 = vmatpush1.msra.mxu0 %v2039
    %2041 = vmatprep.subr.mxu0 0.0
    %v2042 = vand.u32 %v1745, 4294901760
    %v2043 = vsub.f32 %v1745, %v2042
    %2044 = vmatpush1.msra.mxu0 %v2043
    %2045 = vmatprep.subr.mxu0 0.0
    %v2046 = vand.u32 %v1746, 4294901760
    %v2047 = vsub.f32 %v1746, %v2046
    %2048 = vmatpush1.msra.mxu0 %v2047
    %2049 = vmatprep.subr.mxu0 0.0
    %v2050 = vand.u32 %v1747, 4294901760
    %v2051 = vsub.f32 %v1747, %v2050
    %2052 = vmatpush1.msra.mxu0 %v2051
    %2053 = vmatprep.subr.mxu0 0.0
    %v2054 = vand.u32 %v1748, 4294901760
    %v2055 = vsub.f32 %v1748, %v2054
    %2056 = vmatpush1.msra.mxu0 %v2055
    %2057 = vmatprep.subr.mxu0 0.0
    %v2058 = vand.u32 %v1749, 4294901760
    %v2059 = vsub.f32 %v1749, %v2058
    %2060 = vmatpush1.msra.mxu0 %v2059
    %2061 = vmatprep.subr.mxu0 0.0
    %v2062 = vand.u32 %v1750, 4294901760
    %v2063 = vsub.f32 %v1750, %v2062
    %2064 = vmatpush1.msra.mxu0 %v2063
    %2065 = vmatprep.subr.mxu0 0.0
    %2066 = vmatpush1.msra.mxu0 0.0
    %2067 = vmatprep.subr.mxu0 0.0
    %2068 = vmatpush1.msra.mxu0 0.0
    %2069 = vmatprep.subr.mxu0 0.0
    %2070 = vmatpush1.msra.mxu0 0.0
    %2071 = vmatprep.subr.mxu0 0.0
    %2072 = vmatpush1.msra.mxu0 0.0
    %2073 = vmatprep.subr.mxu0 0.0
    %2074 = vmatpush1.msra.mxu0 0.0
    %2075 = vmatprep.subr.mxu0 0.0
    %2076 = vmatpush1.msra.mxu0 0.0
    %2077 = vmatprep.subr.mxu0 0.0
    %2078 = vmatpush1.msra.mxu0 0.0
    %2079 = vmatprep.subr.mxu0 0.0
    %2080 = vmatpush1.msra.mxu0 0.0
    %2081 = vmatprep.subr.mxu0 0.0
    %2082 = vmatpush1.msra.mxu0 0.0
    %2083 = vmatprep.subr.mxu0 0.0
    %2084 = vmatpush1.msra.mxu0 0.0
    %2085 = vmatprep.subr.mxu0 0.0
    %2086 = vmatpush1.msra.mxu0 0.0
    %2087 = vmatprep.subr.mxu0 0.0
    %2088 = vmatpush1.msra.mxu0 0.0
    %2089 = vmatprep.subr.mxu0 0.0
    %2090 = vmatpush1.msra.mxu0 0.0
    %2091 = vmatprep.subr.mxu0 0.0
    %2092 = vmatpush1.msra.mxu0 0.0
    %2093 = vmatprep.subr.mxu0 0.0
    %2094 = vmatpush1.msra.mxu0 0.0
    %2095 = vmatprep.subr.mxu0 0.0
    %2096 = vmatpush1.msra.mxu0 0.0
    %2097 = vmatprep.mubr.f32.mxu0 0.0
    %v2098 = vand.u32 %v1733, 4294901760
    %v2099 = vsub.f32 %v1733, %v2098
    %2100 = vmatmul.mubr.f32.gmra.mrb[0].mxu0 %v2099
    %v2101 = vpop.f32.mrb[0].mxu0
    %v2102 = vadd.f32 %v1998, %v2101
    %v2103 = vpop.f32.mrb[0].mxu0
    %2104 = vdwg.mxu0
    %2105 = vmatprep.subr.mxu0 0.0
    %v2106 = vand.u32 %v1735, 4294901760
    %2107 = vmatpush1.msra.mxu0 %v2106
    %2108 = vmatprep.subr.mxu0 0.0
    %v2109 = vand.u32 %v1736, 4294901760
    %2110 = vmatpush1.msra.mxu0 %v2109
    %2111 = vmatprep.subr.mxu0 0.0
    %v2112 = vand.u32 %v1737, 4294901760
    %2113 = vmatpush1.msra.mxu0 %v2112
    %2114 = vmatprep.subr.mxu0 0.0
    %v2115 = vand.u32 %v1738, 4294901760
    %2116 = vmatpush1.msra.mxu0 %v2115
    %2117 = vmatprep.subr.mxu0 0.0
    %v2118 = vand.u32 %v1739, 4294901760
    %2119 = vmatpush1.msra.mxu0 %v2118
    %2120 = vmatprep.subr.mxu0 0.0
    %v2121 = vand.u32 %v1740, 4294901760
    %2122 = vmatpush1.msra.mxu0 %v2121
    %2123 = vmatprep.subr.mxu0 0.0
    %v2124 = vand.u32 %v1741, 4294901760
    %2125 = vmatpush1.msra.mxu0 %v2124
    %2126 = vmatprep.subr.mxu0 0.0
    %v2127 = vand.u32 %v1742, 4294901760
    %2128 = vmatpush1.msra.mxu0 %v2127
    %2129 = vmatprep.subr.mxu0 0.0
    %v2130 = vand.u32 %v1743, 4294901760
    %2131 = vmatpush1.msra.mxu0 %v2130
    %2132 = vmatprep.subr.mxu0 0.0
    %v2133 = vand.u32 %v1744, 4294901760
    %2134 = vmatpush1.msra.mxu0 %v2133
    %2135 = vmatprep.subr.mxu0 0.0
    %v2136 = vand.u32 %v1745, 4294901760
    %2137 = vmatpush1.msra.mxu0 %v2136
    %2138 = vmatprep.subr.mxu0 0.0
    %v2139 = vand.u32 %v1746, 4294901760
    %2140 = vmatpush1.msra.mxu0 %v2139
    %2141 = vmatprep.subr.mxu0 0.0
    %v2142 = vand.u32 %v1747, 4294901760
    %2143 = vmatpush1.msra.mxu0 %v2142
    %2144 = vmatprep.subr.mxu0 0.0
    %v2145 = vand.u32 %v1748, 4294901760
    %2146 = vmatpush1.msra.mxu0 %v2145
    %2147 = vmatprep.subr.mxu0 0.0
    %v2148 = vand.u32 %v1749, 4294901760
    %2149 = vmatpush1.msra.mxu0 %v2148
    %2150 = vmatprep.subr.mxu0 0.0
    %v2151 = vand.u32 %v1750, 4294901760
    %2152 = vmatpush1.msra.mxu0 %v2151
    %2153 = vmatprep.subr.mxu0 0.0
    %2154 = vmatpush1.msra.mxu0 0.0
    %2155 = vmatprep.subr.mxu0 0.0
    %2156 = vmatpush1.msra.mxu0 0.0
    %2157 = vmatprep.subr.mxu0 0.0
    %2158 = vmatpush1.msra.mxu0 0.0
    %2159 = vmatprep.subr.mxu0 0.0
    %2160 = vmatpush1.msra.mxu0 0.0
    %2161 = vmatprep.subr.mxu0 0.0
    %2162 = vmatpush1.msra.mxu0 0.0
    %2163 = vmatprep.subr.mxu0 0.0
    %2164 = vmatpush1.msra.mxu0 0.0
    %2165 = vmatprep.subr.mxu0 0.0
    %2166 = vmatpush1.msra.mxu0 0.0
    %2167 = vmatprep.subr.mxu0 0.0
    %2168 = vmatpush1.msra.mxu0 0.0
    %2169 = vmatprep.subr.mxu0 0.0
    %2170 = vmatpush1.msra.mxu0 0.0
    %2171 = vmatprep.subr.mxu0 0.0
    %2172 = vmatpush1.msra.mxu0 0.0
    %2173 = vmatprep.subr.mxu0 0.0
    %2174 = vmatpush1.msra.mxu0 0.0
    %2175 = vmatprep.subr.mxu0 0.0
    %2176 = vmatpush1.msra.mxu0 0.0
    %2177 = vmatprep.subr.mxu0 0.0
    %2178 = vmatpush1.msra.mxu0 0.0
    %2179 = vmatprep.subr.mxu0 0.0
    %2180 = vmatpush1.msra.mxu0 0.0
    %2181 = vmatprep.subr.mxu0 0.0
    %2182 = vmatpush1.msra.mxu0 0.0
    %2183 = vmatprep.subr.mxu0 0.0
    %2184 = vmatpush1.msra.mxu0 0.0
    %2185 = vmatprep.mubr.f32.mxu0 0.0
    %v2186 = vand.u32 %v1733, 4294901760
    %v2187 = vsub.f32 %v1733, %v2186
    %v2188 = vand.u32 %v2187, 4294901760
    %2189 = vmatmul.mubr.f32.gmra.mrb[0].mxu0 %v2188
    %v2190 = vpop.f32.mrb[0].mxu0
    %v2191 = vadd.f32 %v2102, %v2190
    %v2192 = vpop.f32.mrb[0].mxu0
    %2193 = vdwg.mxu0
    %2194 = vmatprep.subr.mxu0 0.0
    %v2195 = vand.u32 %v1735, 4294901760
    %v2196 = vsub.f32 %v1735, %v2195
    %v2197 = vand.u32 %v2196, 4294901760
    %2198 = vmatpush1.msra.mxu0 %v2197
    %2199 = vmatprep.subr.mxu0 0.0
    %v2200 = vand.u32 %v1736, 4294901760
    %v2201 = vsub.f32 %v1736, %v2200
    %v2202 = vand.u32 %v2201, 4294901760
    %2203 = vmatpush1.msra.mxu0 %v2202
    %2204 = vmatprep.subr.mxu0 0.0
    %v2205 = vand.u32 %v1737, 4294901760
    %v2206 = vsub.f32 %v1737, %v2205
    %v2207 = vand.u32 %v2206, 4294901760
    %2208 = vmatpush1.msra.mxu0 %v2207
    %2209 = vmatprep.subr.mxu0 0.0
    %v2210 = vand.u32 %v1738, 4294901760
    %v2211 = vsub.f32 %v1738, %v2210
    %v2212 = vand.u32 %v2211, 4294901760
    %2213 = vmatpush1.msra.mxu0 %v2212
    %2214 = vmatprep.subr.mxu0 0.0
    %v2215 = vand.u32 %v1739, 4294901760
    %v2216 = vsub.f32 %v1739, %v2215
    %v2217 = vand.u32 %v2216, 4294901760
    %2218 = vmatpush1.msra.mxu0 %v2217
    %2219 = vmatprep.subr.mxu0 0.0
    %v2220 = vand.u32 %v1740, 4294901760
    %v2221 = vsub.f32 %v1740, %v2220
    %v2222 = vand.u32 %v2221, 4294901760
    %2223 = vmatpush1.msra.mxu0 %v2222
    %2224 = vmatprep.subr.mxu0 0.0
    %v2225 = vand.u32 %v1741, 4294901760
    %v2226 = vsub.f32 %v1741, %v2225
    %v2227 = vand.u32 %v2226, 4294901760
    %2228 = vmatpush1.msra.mxu0 %v2227
    %2229 = vmatprep.subr.mxu0 0.0
    %v2230 = vand.u32 %v1742, 4294901760
    %v2231 = vsub.f32 %v1742, %v2230
    %v2232 = vand.u32 %v2231, 4294901760
    %2233 = vmatpush1.msra.mxu0 %v2232
    %2234 = vmatprep.subr.mxu0 0.0
    %v2235 = vand.u32 %v1743, 4294901760
    %v2236 = vsub.f32 %v1743, %v2235
    %v2237 = vand.u32 %v2236, 4294901760
    %2238 = vmatpush1.msra.mxu0 %v2237
    %2239 = vmatprep.subr.mxu0 0.0
    %v2240 = vand.u32 %v1744, 4294901760
    %v2241 = vsub.f32 %v1744, %v2240
    %v2242 = vand.u32 %v2241, 4294901760
    %2243 = vmatpush1.msra.mxu0 %v2242
    %2244 = vmatprep.subr.mxu0 0.0
    %v2245 = vand.u32 %v1745, 4294901760
    %v2246 = vsub.f32 %v1745, %v2245
    %v2247 = vand.u32 %v2246, 4294901760
    %2248 = vmatpush1.msra.mxu0 %v2247
    %2249 = vmatprep.subr.mxu0 0.0
    %v2250 = vand.u32 %v1746, 4294901760
    %v2251 = vsub.f32 %v1746, %v2250
    %v2252 = vand.u32 %v2251, 4294901760
    %2253 = vmatpush1.msra.mxu0 %v2252
    %2254 = vmatprep.subr.mxu0 0.0
    %v2255 = vand.u32 %v1747, 4294901760
    %v2256 = vsub.f32 %v1747, %v2255
    %v2257 = vand.u32 %v2256, 4294901760
    %2258 = vmatpush1.msra.mxu0 %v2257
    %2259 = vmatprep.subr.mxu0 0.0
    %v2260 = vand.u32 %v1748, 4294901760
    %v2261 = vsub.f32 %v1748, %v2260
    %v2262 = vand.u32 %v2261, 4294901760
    %2263 = vmatpush1.msra.mxu0 %v2262
    %2264 = vmatprep.subr.mxu0 0.0
    %v2265 = vand.u32 %v1749, 4294901760
    %v2266 = vsub.f32 %v1749, %v2265
    %v2267 = vand.u32 %v2266, 4294901760
    %2268 = vmatpush1.msra.mxu0 %v2267
    %2269 = vmatprep.subr.mxu0 0.0
    %v2270 = vand.u32 %v1750, 4294901760
    %v2271 = vsub.f32 %v1750, %v2270
    %v2272 = vand.u32 %v2271, 4294901760
    %2273 = vmatpush1.msra.mxu0 %v2272
    %2274 = vmatprep.subr.mxu0 0.0
    %2275 = vmatpush1.msra.mxu0 0.0
    %2276 = vmatprep.subr.mxu0 0.0
    %2277 = vmatpush1.msra.mxu0 0.0
    %2278 = vmatprep.subr.mxu0 0.0
    %2279 = vmatpush1.msra.mxu0 0.0
    %2280 = vmatprep.subr.mxu0 0.0
    %2281 = vmatpush1.msra.mxu0 0.0
    %2282 = vmatprep.subr.mxu0 0.0
    %2283 = vmatpush1.msra.mxu0 0.0
    %2284 = vmatprep.subr.mxu0 0.0
    %2285 = vmatpush1.msra.mxu0 0.0
    %2286 = vmatprep.subr.mxu0 0.0
    %2287 = vmatpush1.msra.mxu0 0.0
    %2288 = vmatprep.subr.mxu0 0.0
    %2289 = vmatpush1.msra.mxu0 0.0
    %2290 = vmatprep.subr.mxu0 0.0
    %2291 = vmatpush1.msra.mxu0 0.0
    %2292 = vmatprep.subr.mxu0 0.0
    %2293 = vmatpush1.msra.mxu0 0.0
    %2294 = vmatprep.subr.mxu0 0.0
    %2295 = vmatpush1.msra.mxu0 0.0
    %2296 = vmatprep.subr.mxu0 0.0
    %2297 = vmatpush1.msra.mxu0 0.0
    %2298 = vmatprep.subr.mxu0 0.0
    %2299 = vmatpush1.msra.mxu0 0.0
    %2300 = vmatprep.subr.mxu0 0.0
    %2301 = vmatpush1.msra.mxu0 0.0
    %2302 = vmatprep.subr.mxu0 0.0
    %2303 = vmatpush1.msra.mxu0 0.0
    %2304 = vmatprep.subr.mxu0 0.0
    %2305 = vmatpush1.msra.mxu0 0.0
    %2306 = vmatprep.mubr.f32.mxu0 0.0
    %v2307 = vand.u32 %v1733, 4294901760
    %2308 = vmatmul.mubr.f32.gmra.mrb[0].mxu0 %v2307
    %v2309 = vpop.f32.mrb[0].mxu0
    %v2310 = vadd.f32 %v2191, %v2309
    %v2311 = vpop.f32.mrb[0].mxu0
    %2312 = vdwg.mxu0
    %2313 = vmatprep.subr.mxu0 0.0
    %v2314 = vand.u32 %v1735, 4294901760
    %2315 = vmatpush1.msra.mxu0 %v2314
    %2316 = vmatprep.subr.mxu0 0.0
    %v2317 = vand.u32 %v1736, 4294901760
    %2318 = vmatpush1.msra.mxu0 %v2317
    %2319 = vmatprep.subr.mxu0 0.0
    %v2320 = vand.u32 %v1737, 4294901760
    %2321 = vmatpush1.msra.mxu0 %v2320
    %2322 = vmatprep.subr.mxu0 0.0
    %v2323 = vand.u32 %v1738, 4294901760
    %2324 = vmatpush1.msra.mxu0 %v2323
    %2325 = vmatprep.subr.mxu0 0.0
    %v2326 = vand.u32 %v1739, 4294901760
    %2327 = vmatpush1.msra.mxu0 %v2326
    %2328 = vmatprep.subr.mxu0 0.0
    %v2329 = vand.u32 %v1740, 4294901760
    %2330 = vmatpush1.msra.mxu0 %v2329
    %2331 = vmatprep.subr.mxu0 0.0
    %v2332 = vand.u32 %v1741, 4294901760
    %2333 = vmatpush1.msra.mxu0 %v2332
    %2334 = vmatprep.subr.mxu0 0.0
    %v2335 = vand.u32 %v1742, 4294901760
    %2336 = vmatpush1.msra.mxu0 %v2335
    %2337 = vmatprep.subr.mxu0 0.0
    %v2338 = vand.u32 %v1743, 4294901760
    %2339 = vmatpush1.msra.mxu0 %v2338
    %2340 = vmatprep.subr.mxu0 0.0
    %v2341 = vand.u32 %v1744, 4294901760
    %2342 = vmatpush1.msra.mxu0 %v2341
    %2343 = vmatprep.subr.mxu0 0.0
    %v2344 = vand.u32 %v1745, 4294901760
    %2345 = vmatpush1.msra.mxu0 %v2344
    %2346 = vmatprep.subr.mxu0 0.0
    %v2347 = vand.u32 %v1746, 4294901760
    %2348 = vmatpush1.msra.mxu0 %v2347
    %2349 = vmatprep.subr.mxu0 0.0
    %v2350 = vand.u32 %v1747, 4294901760
    %2351 = vmatpush1.msra.mxu0 %v2350
    %2352 = vmatprep.subr.mxu0 0.0
    %v2353 = vand.u32 %v1748, 4294901760
    %2354 = vmatpush1.msra.mxu0 %v2353
    %2355 = vmatprep.subr.mxu0 0.0
    %v2356 = vand.u32 %v1749, 4294901760
    %2357 = vmatpush1.msra.mxu0 %v2356
    %2358 = vmatprep.subr.mxu0 0.0
    %v2359 = vand.u32 %v1750, 4294901760
    %2360 = vmatpush1.msra.mxu0 %v2359
    %2361 = vmatprep.subr.mxu0 0.0
    %2362 = vmatpush1.msra.mxu0 0.0
    %2363 = vmatprep.subr.mxu0 0.0
    %2364 = vmatpush1.msra.mxu0 0.0
    %2365 = vmatprep.subr.mxu0 0.0
    %2366 = vmatpush1.msra.mxu0 0.0
    %2367 = vmatprep.subr.mxu0 0.0
    %2368 = vmatpush1.msra.mxu0 0.0
    %2369 = vmatprep.subr.mxu0 0.0
    %2370 = vmatpush1.msra.mxu0 0.0
    %2371 = vmatprep.subr.mxu0 0.0
    %2372 = vmatpush1.msra.mxu0 0.0
    %2373 = vmatprep.subr.mxu0 0.0
    %2374 = vmatpush1.msra.mxu0 0.0
    %2375 = vmatprep.subr.mxu0 0.0
    %2376 = vmatpush1.msra.mxu0 0.0
    %2377 = vmatprep.subr.mxu0 0.0
    %2378 = vmatpush1.msra.mxu0 0.0
    %2379 = vmatprep.subr.mxu0 0.0
    %2380 = vmatpush1.msra.mxu0 0.0
    %2381 = vmatprep.subr.mxu0 0.0
    %2382 = vmatpush1.msra.mxu0 0.0
    %2383 = vmatprep.subr.mxu0 0.0
    %2384 = vmatpush1.msra.mxu0 0.0
    %2385 = vmatprep.subr.mxu0 0.0
    %2386 = vmatpush1.msra.mxu0 0.0
    %2387 = vmatprep.subr.mxu0 0.0
    %2388 = vmatpush1.msra.mxu0 0.0
    %2389 = vmatprep.subr.mxu0 0.0
    %2390 = vmatpush1.msra.mxu0 0.0
    %2391 = vmatprep.subr.mxu0 0.0
    %2392 = vmatpush1.msra.mxu0 0.0
    %2393 = vmatprep.mubr.f32.mxu0 0.0
    %v2394 = vand.u32 %v1733, 4294901760
    %2395 = vmatmul.mubr.f32.gmra.mrb[0].mxu0 %v2394
    %v2396 = vpop.f32.mrb[0].mxu0
    %v2397 = vadd.f32 %v2310, %v2396
    %v2398 = vpop.f32.mrb[0].mxu0
    %2399 = vdwg.mxu0
    %v2400 = vtanh.pop %v2397
    %v2401 = vld [vmem:[#allocation10] sm:$0xff]
    %v2402 = vld [vmem:[#allocation10 + $0x8] sm:$0xff]
    %v2403 = vld [vmem:[#allocation10 + $0x10] sm:$0xff]
    %v2404 = vld [vmem:[#allocation10 + $0x18] sm:$0xff]
    %v2405 = vld [vmem:[#allocation10 + $0x20] sm:$0xff]
    %v2406 = vld [vmem:[#allocation10 + $0x28] sm:$0xff]
    %v2407 = vld [vmem:[#allocation10 + $0x30] sm:$0xff]
    %v2408 = vld [vmem:[#allocation10 + $0x38] sm:$0xff]
    %v2409 = vld [vmem:[#allocation10 + $0x40] sm:$0xff]
    %v2410 = vld [vmem:[#allocation10 + $0x48] sm:$0xff]
    %v2411 = vld [vmem:[#allocation10 + $0x50] sm:$0xff]
    %v2412 = vld [vmem:[#allocation10 + $0x58] sm:$0xff]
    %v2413 = vld [vmem:[#allocation10 + $0x60] sm:$0xff]
    %v2414 = vld [vmem:[#allocation10 + $0x68] sm:$0xff]
    %v2415 = vld [vmem:[#allocation10 + $0x70] sm:$0xff]
    %v2416 = vld [vmem:[#allocation10 + $0x78] sm:$0xff]
    %2417 = vmatprep.subr.mxu0 0.0
    %v2418 = vand.u32 %v2401, 4294901760
    %2419 = vmatpush1.msra.mxu0 %v2418
    %2420 = vmatprep.subr.mxu0 0.0
    %v2421 = vand.u32 %v2402, 4294901760
    %2422 = vmatpush1.msra.mxu0 %v2421
    %2423 = vmatprep.subr.mxu0 0.0
    %v2424 = vand.u32 %v2403, 4294901760
    %2425 = vmatpush1.msra.mxu0 %v2424
    %2426 = vmatprep.subr.mxu0 0.0
    %v2427 = vand.u32 %v2404, 4294901760
    %2428 = vmatpush1.msra.mxu0 %v2427
    %2429 = vmatprep.subr.mxu0 0.0
    %v2430 = vand.u32 %v2405, 4294901760
    %2431 = vmatpush1.msra.mxu0 %v2430
    %2432 = vmatprep.subr.mxu0 0.0
    %v2433 = vand.u32 %v2406, 4294901760
    %2434 = vmatpush1.msra.mxu0 %v2433
    %2435 = vmatprep.subr.mxu0 0.0
    %v2436 = vand.u32 %v2407, 4294901760
    %2437 = vmatpush1.msra.mxu0 %v2436
    %2438 = vmatprep.subr.mxu0 0.0
    %v2439 = vand.u32 %v2408, 4294901760
    %2440 = vmatpush1.msra.mxu0 %v2439
    %2441 = vmatprep.subr.mxu0 0.0
    %v2442 = vand.u32 %v2409, 4294901760
    %2443 = vmatpush1.msra.mxu0 %v2442
    %2444 = vmatprep.subr.mxu0 0.0
    %v2445 = vand.u32 %v2410, 4294901760
    %2446 = vmatpush1.msra.mxu0 %v2445
    %2447 = vmatprep.subr.mxu0 0.0
    %v2448 = vand.u32 %v2411, 4294901760
    %2449 = vmatpush1.msra.mxu0 %v2448
    %2450 = vmatprep.subr.mxu0 0.0
    %v2451 = vand.u32 %v2412, 4294901760
    %2452 = vmatpush1.msra.mxu0 %v2451
    %2453 = vmatprep.subr.mxu0 0.0
    %v2454 = vand.u32 %v2413, 4294901760
    %2455 = vmatpush1.msra.mxu0 %v2454
    %2456 = vmatprep.subr.mxu0 0.0
    %v2457 = vand.u32 %v2414, 4294901760
    %2458 = vmatpush1.msra.mxu0 %v2457
    %2459 = vmatprep.subr.mxu0 0.0
    %v2460 = vand.u32 %v2415, 4294901760
    %2461 = vmatpush1.msra.mxu0 %v2460
    %2462 = vmatprep.subr.mxu0 0.0
    %v2463 = vand.u32 %v2416, 4294901760
    %2464 = vmatpush1.msra.mxu0 %v2463
    %2465 = vmatprep.subr.mxu0 0.0
    %2466 = vmatpush1.msra.mxu0 0.0
    %2467 = vmatprep.subr.mxu0 0.0
    %2468 = vmatpush1.msra.mxu0 0.0
    %2469 = vmatprep.subr.mxu0 0.0
    %2470 = vmatpush1.msra.mxu0 0.0
    %2471 = vmatprep.subr.mxu0 0.0
    %2472 = vmatpush1.msra.mxu0 0.0
    %2473 = vmatprep.subr.mxu0 0.0
    %2474 = vmatpush1.msra.mxu0 0.0
    %2475 = vmatprep.subr.mxu0 0.0
    %2476 = vmatpush1.msra.mxu0 0.0
    %2477 = vmatprep.subr.mxu0 0.0
    %2478 = vmatpush1.msra.mxu0 0.0
    %2479 = vmatprep.subr.mxu0 0.0
    %2480 = vmatpush1.msra.mxu0 0.0
    %2481 = vmatprep.subr.mxu0 0.0
    %2482 = vmatpush1.msra.mxu0 0.0
    %2483 = vmatprep.subr.mxu0 0.0
    %2484 = vmatpush1.msra.mxu0 0.0
    %2485 = vmatprep.subr.mxu0 0.0
    %2486 = vmatpush1.msra.mxu0 0.0
    %2487 = vmatprep.subr.mxu0 0.0
    %2488 = vmatpush1.msra.mxu0 0.0
    %2489 = vmatprep.subr.mxu0 0.0
    %2490 = vmatpush1.msra.mxu0 0.0
    %2491 = vmatprep.subr.mxu0 0.0
    %2492 = vmatpush1.msra.mxu0 0.0
    %2493 = vmatprep.subr.mxu0 0.0
    %2494 = vmatpush1.msra.mxu0 0.0
    %2495 = vmatprep.subr.mxu0 0.0
    %2496 = vmatpush1.msra.mxu0 0.0
    %2497 = vmatprep.mubr.f32.mxu0 0.0
    %v2498 = vand.u32 %v2400, 4294901760
    %v2499 = vsub.f32 %v2400, %v2498
    %v2500 = vand.u32 %v2499, 4294901760
    %v2501 = vsub.f32 %v2499, %v2500
    %v2502 = vand.u32 %v2501, 4294901760
    %2503 = vmatmul.mubr.f32.gmra.mrb[0].mxu0 %v2502
    %v2504 = vpop.f32.mrb[0].mxu0
    %v2505 = vadd.f32 0.0, %v2504
    %v2506 = vpop.f32.mrb[0].mxu0
    %2507 = vdwg.mxu0
    %2508 = vmatprep.subr.mxu0 0.0
    %v2509 = vand.u32 %v2401, 4294901760
    %v2510 = vsub.f32 %v2401, %v2509
    %v2511 = vand.u32 %v2510, 4294901760
    %v2512 = vsub.f32 %v2510, %v2511
    %v2513 = vand.u32 %v2512, 4294901760
    %2514 = vmatpush1.msra.mxu0 %v2513
    %2515 = vmatprep.subr.mxu0 0.0
    %v2516 = vand.u32 %v2402, 4294901760
    %v2517 = vsub.f32 %v2402, %v2516
    %v2518 = vand.u32 %v2517, 4294901760
    %v2519 = vsub.f32 %v2517, %v2518
    %v2520 = vand.u32 %v2519, 4294901760
    %2521 = vmatpush1.msra.mxu0 %v2520
    %2522 = vmatprep.subr.mxu0 0.0
    %v2523 = vand.u32 %v2403, 4294901760
    %v2524 = vsub.f32 %v2403, %v2523
    %v2525 = vand.u32 %v2524, 4294901760
    %v2526 = vsub.f32 %v2524, %v2525
    %v2527 = vand.u32 %v2526, 4294901760
    %2528 = vmatpush1.msra.mxu0 %v2527
    %2529 = vmatprep.subr.mxu0 0.0
    %v2530 = vand.u32 %v2404, 4294901760
    %v2531 = vsub.f32 %v2404, %v2530
    %v2532 = vand.u32 %v2531, 4294901760
    %v2533 = vsub.f32 %v2531, %v2532
    %v2534 = vand.u32 %v2533, 4294901760
    %2535 = vmatpush1.msra.mxu0 %v2534
    %2536 = vmatprep.subr.mxu0 0.0
    %v2537 = vand.u32 %v2405, 4294901760
    %v2538 = vsub.f32 %v2405, %v2537
    %v2539 = vand.u32 %v2538, 4294901760
    %v2540 = vsub.f32 %v2538, %v2539
    %v2541 = vand.u32 %v2540, 4294901760
    %2542 = vmatpush1.msra.mxu0 %v2541
    %2543 = vmatprep.subr.mxu0 0.0
    %v2544 = vand.u32 %v2406, 4294901760
    %v2545 = vsub.f32 %v2406, %v2544
    %v2546 = vand.u32 %v2545, 4294901760
    %v2547 = vsub.f32 %v2545, %v2546
    %v2548 = vand.u32 %v2547, 4294901760
    %2549 = vmatpush1.msra.mxu0 %v2548
    %2550 = vmatprep.subr.mxu0 0.0
    %v2551 = vand.u32 %v2407, 4294901760
    %v2552 = vsub.f32 %v2407, %v2551
    %v2553 = vand.u32 %v2552, 4294901760
    %v2554 = vsub.f32 %v2552, %v2553
    %v2555 = vand.u32 %v2554, 4294901760
    %2556 = vmatpush1.msra.mxu0 %v2555
    %2557 = vmatprep.subr.mxu0 0.0
    %v2558 = vand.u32 %v2408, 4294901760
    %v2559 = vsub.f32 %v2408, %v2558
    %v2560 = vand.u32 %v2559, 4294901760
    %v2561 = vsub.f32 %v2559, %v2560
    %v2562 = vand.u32 %v2561, 4294901760
    %2563 = vmatpush1.msra.mxu0 %v2562
    %2564 = vmatprep.subr.mxu0 0.0
    %v2565 = vand.u32 %v2409, 4294901760
    %v2566 = vsub.f32 %v2409, %v2565
    %v2567 = vand.u32 %v2566, 4294901760
    %v2568 = vsub.f32 %v2566, %v2567
    %v2569 = vand.u32 %v2568, 4294901760
    %2570 = vmatpush1.msra.mxu0 %v2569
    %2571 = vmatprep.subr.mxu0 0.0
    %v2572 = vand.u32 %v2410, 4294901760
    %v2573 = vsub.f32 %v2410, %v2572
    %v2574 = vand.u32 %v2573, 4294901760
    %v2575 = vsub.f32 %v2573, %v2574
    %v2576 = vand.u32 %v2575, 4294901760
    %2577 = vmatpush1.msra.mxu0 %v2576
    %2578 = vmatprep.subr.mxu0 0.0
    %v2579 = vand.u32 %v2411, 4294901760
    %v2580 = vsub.f32 %v2411, %v2579
    %v2581 = vand.u32 %v2580, 4294901760
    %v2582 = vsub.f32 %v2580, %v2581
    %v2583 = vand.u32 %v2582, 4294901760
    %2584 = vmatpush1.msra.mxu0 %v2583
    %2585 = vmatprep.subr.mxu0 0.0
    %v2586 = vand.u32 %v2412, 4294901760
    %v2587 = vsub.f32 %v2412, %v2586
    %v2588 = vand.u32 %v2587, 4294901760
    %v2589 = vsub.f32 %v2587, %v2588
    %v2590 = vand.u32 %v2589, 4294901760
    %2591 = vmatpush1.msra.mxu0 %v2590
    %2592 = vmatprep.subr.mxu0 0.0
    %v2593 = vand.u32 %v2413, 4294901760
    %v2594 = vsub.f32 %v2413, %v2593
    %v2595 = vand.u32 %v2594, 4294901760
    %v2596 = vsub.f32 %v2594, %v2595
    %v2597 = vand.u32 %v2596, 4294901760
    %2598 = vmatpush1.msra.mxu0 %v2597
    %2599 = vmatprep.subr.mxu0 0.0
    %v2600 = vand.u32 %v2414, 4294901760
    %v2601 = vsub.f32 %v2414, %v2600
    %v2602 = vand.u32 %v2601, 4294901760
    %v2603 = vsub.f32 %v2601, %v2602
    %v2604 = vand.u32 %v2603, 4294901760
    %2605 = vmatpush1.msra.mxu0 %v2604
    %2606 = vmatprep.subr.mxu0 0.0
    %v2607 = vand.u32 %v2415, 4294901760
    %v2608 = vsub.f32 %v2415, %v2607
    %v2609 = vand.u32 %v2608, 4294901760
    %v2610 = vsub.f32 %v2608, %v2609
    %v2611 = vand.u32 %v2610, 4294901760
    %2612 = vmatpush1.msra.mxu0 %v2611
    %2613 = vmatprep.subr.mxu0 0.0
    %v2614 = vand.u32 %v2416, 4294901760
    %v2615 = vsub.f32 %v2416, %v2614
    %v2616 = vand.u32 %v2615, 4294901760
    %v2617 = vsub.f32 %v2615, %v2616
    %v2618 = vand.u32 %v2617, 4294901760
    %2619 = vmatpush1.msra.mxu0 %v2618
    %2620 = vmatprep.subr.mxu0 0.0
    %2621 = vmatpush1.msra.mxu0 0.0
    %2622 = vmatprep.subr.mxu0 0.0
    %2623 = vmatpush1.msra.mxu0 0.0
    %2624 = vmatprep.subr.mxu0 0.0
    %2625 = vmatpush1.msra.mxu0 0.0
    %2626 = vmatprep.subr.mxu0 0.0
    %2627 = vmatpush1.msra.mxu0 0.0
    %2628 = vmatprep.subr.mxu0 0.0
    %2629 = vmatpush1.msra.mxu0 0.0
    %2630 = vmatprep.subr.mxu0 0.0
    %2631 = vmatpush1.msra.mxu0 0.0
    %2632 = vmatprep.subr.mxu0 0.0
    %2633 = vmatpush1.msra.mxu0 0.0
    %2634 = vmatprep.subr.mxu0 0.0
    %2635 = vmatpush1.msra.mxu0 0.0
    %2636 = vmatprep.subr.mxu0 0.0
    %2637 = vmatpush1.msra.mxu0 0.0
    %2638 = vmatprep.subr.mxu0 0.0
    %2639 = vmatpush1.msra.mxu0 0.0
    %2640 = vmatprep.subr.mxu0 0.0
    %2641 = vmatpush1.msra.mxu0 0.0
    %2642 = vmatprep.subr.mxu0 0.0
    %2643 = vmatpush1.msra.mxu0 0.0
    %2644 = vmatprep.subr.mxu0 0.0
    %2645 = vmatpush1.msra.mxu0 0.0
    %2646 = vmatprep.subr.mxu0 0.0
    %2647 = vmatpush1.msra.mxu0 0.0
    %2648 = vmatprep.subr.mxu0 0.0
    %2649 = vmatpush1.msra.mxu0 0.0
    %2650 = vmatprep.subr.mxu0 0.0
    %2651 = vmatpush1.msra.mxu0 0.0
    %2652 = vmatprep.mubr.f32.mxu0 0.0
    %v2653 = vand.u32 %v2400, 4294901760
    %2654 = vmatmul.mubr.f32.gmra.mrb[0].mxu0 %v2653
    %v2655 = vpop.f32.mrb[0].mxu0
    %v2656 = vadd.f32 %v2505, %v2655
    %v2657 = vpop.f32.mrb[0].mxu0
    %2658 = vdwg.mxu0
    %2659 = vmatprep.subr.mxu0 0.0
    %v2660 = vand.u32 %v2401, 4294901760
    %v2661 = vsub.f32 %v2401, %v2660
    %2662 = vmatpush1.msra.mxu0 %v2661
    %2663 = vmatprep.subr.mxu0 0.0
    %v2664 = vand.u32 %v2402, 4294901760
    %v2665 = vsub.f32 %v2402, %v2664
    %2666 = vmatpush1.msra.mxu0 %v2665
    %2667 = vmatprep.subr.mxu0 0.0
    %v2668 = vand.u32 %v2403, 4294901760
    %v2669 = vsub.f32 %v2403, %v2668
    %2670 = vmatpush1.msra.mxu0 %v2669
    %2671 = vmatprep.subr.mxu0 0.0
    %v2672 = vand.u32 %v2404, 4294901760
    %v2673 = vsub.f32 %v2404, %v2672
    %2674 = vmatpush1.msra.mxu0 %v2673
    %2675 = vmatprep.subr.mxu0 0.0
    %v2676 = vand.u32 %v2405, 4294901760
    %v2677 = vsub.f32 %v2405, %v2676
    %2678 = vmatpush1.msra.mxu0 %v2677
    %2679 = vmatprep.subr.mxu0 0.0
    %v2680 = vand.u32 %v2406, 4294901760
    %v2681 = vsub.f32 %v2406, %v2680
    %2682 = vmatpush1.msra.mxu0 %v2681
    %2683 = vmatprep.subr.mxu0 0.0
    %v2684 = vand.u32 %v2407, 4294901760
    %v2685 = vsub.f32 %v2407, %v2684
    %2686 = vmatpush1.msra.mxu0 %v2685
    %2687 = vmatprep.subr.mxu0 0.0
    %v2688 = vand.u32 %v2408, 4294901760
    %v2689 = vsub.f32 %v2408, %v2688
    %2690 = vmatpush1.msra.mxu0 %v2689
    %2691 = vmatprep.subr.mxu0 0.0
    %v2692 = vand.u32 %v2409, 4294901760
    %v2693 = vsub.f32 %v2409, %v2692
    %2694 = vmatpush1.msra.mxu0 %v2693
    %2695 = vmatprep.subr.mxu0 0.0
    %v2696 = vand.u32 %v2410, 4294901760
    %v2697 = vsub.f32 %v2410, %v2696
    %2698 = vmatpush1.msra.mxu0 %v2697
    %2699 = vmatprep.subr.mxu0 0.0
    %v2700 = vand.u32 %v2411, 4294901760
    %v2701 = vsub.f32 %v2411, %v2700
    %2702 = vmatpush1.msra.mxu0 %v2701
    %2703 = vmatprep.subr.mxu0 0.0
    %v2704 = vand.u32 %v2412, 4294901760
    %v2705 = vsub.f32 %v2412, %v2704
    %2706 = vmatpush1.msra.mxu0 %v2705
    %2707 = vmatprep.subr.mxu0 0.0
    %v2708 = vand.u32 %v2413, 4294901760
    %v2709 = vsub.f32 %v2413, %v2708
    %2710 = vmatpush1.msra.mxu0 %v2709
    %2711 = vmatprep.subr.mxu0 0.0
    %v2712 = vand.u32 %v2414, 4294901760
    %v2713 = vsub.f32 %v2414, %v2712
    %2714 = vmatpush1.msra.mxu0 %v2713
    %2715 = vmatprep.subr.mxu0 0.0
    %v2716 = vand.u32 %v2415, 4294901760
    %v2717 = vsub.f32 %v2415, %v2716
    %2718 = vmatpush1.msra.mxu0 %v2717
    %2719 = vmatprep.subr.mxu0 0.0
    %v2720 = vand.u32 %v2416, 4294901760
    %v2721 = vsub.f32 %v2416, %v2720
    %2722 = vmatpush1.msra.mxu0 %v2721
    %2723 = vmatprep.subr.mxu0 0.0
    %2724 = vmatpush1.msra.mxu0 0.0
    %2725 = vmatprep.subr.mxu0 0.0
    %2726 = vmatpush1.msra.mxu0 0.0
    %2727 = vmatprep.subr.mxu0 0.0
    %2728 = vmatpush1.msra.mxu0 0.0
    %2729 = vmatprep.subr.mxu0 0.0
    %2730 = vmatpush1.msra.mxu0 0.0
    %2731 = vmatprep.subr.mxu0 0.0
    %2732 = vmatpush1.msra.mxu0 0.0
    %2733 = vmatprep.subr.mxu0 0.0
    %2734 = vmatpush1.msra.mxu0 0.0
    %2735 = vmatprep.subr.mxu0 0.0
    %2736 = vmatpush1.msra.mxu0 0.0
    %2737 = vmatprep.subr.mxu0 0.0
    %2738 = vmatpush1.msra.mxu0 0.0
    %2739 = vmatprep.subr.mxu0 0.0
    %2740 = vmatpush1.msra.mxu0 0.0
    %2741 = vmatprep.subr.mxu0 0.0
    %2742 = vmatpush1.msra.mxu0 0.0
    %2743 = vmatprep.subr.mxu0 0.0
    %2744 = vmatpush1.msra.mxu0 0.0
    %2745 = vmatprep.subr.mxu0 0.0
    %2746 = vmatpush1.msra.mxu0 0.0
    %2747 = vmatprep.subr.mxu0 0.0
    %2748 = vmatpush1.msra.mxu0 0.0
    %2749 = vmatprep.subr.mxu0 0.0
    %2750 = vmatpush1.msra.mxu0 0.0
    %2751 = vmatprep.subr.mxu0 0.0
    %2752 = vmatpush1.msra.mxu0 0.0
    %2753 = vmatprep.subr.mxu0 0.0
    %2754 = vmatpush1.msra.mxu0 0.0
    %2755 = vmatprep.mubr.f32.mxu0 0.0
    %v2756 = vand.u32 %v2400, 4294901760
    %v2757 = vsub.f32 %v2400, %v2756
    %2758 = vmatmul.mubr.f32.gmra.mrb[0].mxu0 %v2757
    %v2759 = vpop.f32.mrb[0].mxu0
    %v2760 = vadd.f32 %v2656, %v2759
    %v2761 = vpop.f32.mrb[0].mxu0
    %2762 = vdwg.mxu0
    %2763 = vmatprep.subr.mxu0 0.0
    %v2764 = vand.u32 %v2401, 4294901760
    %2765 = vmatpush1.msra.mxu0 %v2764
    %2766 = vmatprep.subr.mxu0 0.0
    %v2767 = vand.u32 %v2402, 4294901760
    %2768 = vmatpush1.msra.mxu0 %v2767
    %2769 = vmatprep.subr.mxu0 0.0
    %v2770 = vand.u32 %v2403, 4294901760
    %2771 = vmatpush1.msra.mxu0 %v2770
    %2772 = vmatprep.subr.mxu0 0.0
    %v2773 = vand.u32 %v2404, 4294901760
    %2774 = vmatpush1.msra.mxu0 %v2773
    %2775 = vmatprep.subr.mxu0 0.0
    %v2776 = vand.u32 %v2405, 4294901760
    %2777 = vmatpush1.msra.mxu0 %v2776
    %2778 = vmatprep.subr.mxu0 0.0
    %v2779 = vand.u32 %v2406, 4294901760
    %2780 = vmatpush1.msra.mxu0 %v2779
    %2781 = vmatprep.subr.mxu0 0.0
    %v2782 = vand.u32 %v2407, 4294901760
    %2783 = vmatpush1.msra.mxu0 %v2782
    %2784 = vmatprep.subr.mxu0 0.0
    %v2785 = vand.u32 %v2408, 4294901760
    %2786 = vmatpush1.msra.mxu0 %v2785
    %2787 = vmatprep.subr.mxu0 0.0
    %v2788 = vand.u32 %v2409, 4294901760
    %2789 = vmatpush1.msra.mxu0 %v2788
    %2790 = vmatprep.subr.mxu0 0.0
    %v2791 = vand.u32 %v2410, 4294901760
    %2792 = vmatpush1.msra.mxu0 %v2791
    %2793 = vmatprep.subr.mxu0 0.0
    %v2794 = vand.u32 %v2411, 4294901760
    %2795 = vmatpush1.msra.mxu0 %v2794
    %2796 = vmatprep.subr.mxu0 0.0
    %v2797 = vand.u32 %v2412, 4294901760
    %2798 = vmatpush1.msra.mxu0 %v2797
    %2799 = vmatprep.subr.mxu0 0.0
    %v2800 = vand.u32 %v2413, 4294901760
    %2801 = vmatpush1.msra.mxu0 %v2800
    %2802 = vmatprep.subr.mxu0 0.0
    %v2803 = vand.u32 %v2414, 4294901760
    %2804 = vmatpush1.msra.mxu0 %v2803
    %2805 = vmatprep.subr.mxu0 0.0
    %v2806 = vand.u32 %v2415, 4294901760
    %2807 = vmatpush1.msra.mxu0 %v2806
    %2808 = vmatprep.subr.mxu0 0.0
    %v2809 = vand.u32 %v2416, 4294901760
    %2810 = vmatpush1.msra.mxu0 %v2809
    %2811 = vmatprep.subr.mxu0 0.0
    %2812 = vmatpush1.msra.mxu0 0.0
    %2813 = vmatprep.subr.mxu0 0.0
    %2814 = vmatpush1.msra.mxu0 0.0
    %2815 = vmatprep.subr.mxu0 0.0
    %2816 = vmatpush1.msra.mxu0 0.0
    %2817 = vmatprep.subr.mxu0 0.0
    %2818 = vmatpush1.msra.mxu0 0.0
    %2819 = vmatprep.subr.mxu0 0.0
    %2820 = vmatpush1.msra.mxu0 0.0
    %2821 = vmatprep.subr.mxu0 0.0
    %2822 = vmatpush1.msra.mxu0 0.0
    %2823 = vmatprep.subr.mxu0 0.0
    %2824 = vmatpush1.msra.mxu0 0.0
    %2825 = vmatprep.subr.mxu0 0.0
    %2826 = vmatpush1.msra.mxu0 0.0
    %2827 = vmatprep.subr.mxu0 0.0
    %2828 = vmatpush1.msra.mxu0 0.0
    %2829 = vmatprep.subr.mxu0 0.0
    %2830 = vmatpush1.msra.mxu0 0.0
    %2831 = vmatprep.subr.mxu0 0.0
    %2832 = vmatpush1.msra.mxu0 0.0
    %2833 = vmatprep.subr.mxu0 0.0
    %2834 = vmatpush1.msra.mxu0 0.0
    %2835 = vmatprep.subr.mxu0 0.0
    %2836 = vmatpush1.msra.mxu0 0.0
    %2837 = vmatprep.subr.mxu0 0.0
    %2838 = vmatpush1.msra.mxu0 0.0
    %2839 = vmatprep.subr.mxu0 0.0
    %2840 = vmatpush1.msra.mxu0 0.0
    %2841 = vmatprep.subr.mxu0 0.0
    %2842 = vmatpush1.msra.mxu0 0.0
    %2843 = vmatprep.mubr.f32.mxu0 0.0
    %v2844 = vand.u32 %v2400, 4294901760
    %v2845 = vsub.f32 %v2400, %v2844
    %v2846 = vand.u32 %v2845, 4294901760
    %2847 = vmatmul.mubr.f32.gmra.mrb[0].mxu0 %v2846
    %v2848 = vpop.f32.mrb[0].mxu0
    %v2849 = vadd.f32 %v2760, %v2848
    %v2850 = vpop.f32.mrb[0].mxu0
    %2851 = vdwg.mxu0
    %2852 = vmatprep.subr.mxu0 0.0
    %v2853 = vand.u32 %v2401, 4294901760
    %v2854 = vsub.f32 %v2401, %v2853
    %v2855 = vand.u32 %v2854, 4294901760
    %2856 = vmatpush1.msra.mxu0 %v2855
    %2857 = vmatprep.subr.mxu0 0.0
    %v2858 = vand.u32 %v2402, 4294901760
    %v2859 = vsub.f32 %v2402, %v2858
    %v2860 = vand.u32 %v2859, 4294901760
    %2861 = vmatpush1.msra.mxu0 %v2860
    %2862 = vmatprep.subr.mxu0 0.0
    %v2863 = vand.u32 %v2403, 4294901760
    %v2864 = vsub.f32 %v2403, %v2863
    %v2865 = vand.u32 %v2864, 4294901760
    %2866 = vmatpush1.msra.mxu0 %v2865
    %2867 = vmatprep.subr.mxu0 0.0
    %v2868 = vand.u32 %v2404, 4294901760
    %v2869 = vsub.f32 %v2404, %v2868
    %v2870 = vand.u32 %v2869, 4294901760
    %2871 = vmatpush1.msra.mxu0 %v2870
    %2872 = vmatprep.subr.mxu0 0.0
    %v2873 = vand.u32 %v2405, 4294901760
    %v2874 = vsub.f32 %v2405, %v2873
    %v2875 = vand.u32 %v2874, 4294901760
    %2876 = vmatpush1.msra.mxu0 %v2875
    %2877 = vmatprep.subr.mxu0 0.0
    %v2878 = vand.u32 %v2406, 4294901760
    %v2879 = vsub.f32 %v2406, %v2878
    %v2880 = vand.u32 %v2879, 4294901760
    %2881 = vmatpush1.msra.mxu0 %v2880
    %2882 = vmatprep.subr.mxu0 0.0
    %v2883 = vand.u32 %v2407, 4294901760
    %v2884 = vsub.f32 %v2407, %v2883
    %v2885 = vand.u32 %v2884, 4294901760
    %2886 = vmatpush1.msra.mxu0 %v2885
    %2887 = vmatprep.subr.mxu0 0.0
    %v2888 = vand.u32 %v2408, 4294901760
    %v2889 = vsub.f32 %v2408, %v2888
    %v2890 = vand.u32 %v2889, 4294901760
    %2891 = vmatpush1.msra.mxu0 %v2890
    %2892 = vmatprep.subr.mxu0 0.0
    %v2893 = vand.u32 %v2409, 4294901760
    %v2894 = vsub.f32 %v2409, %v2893
    %v2895 = vand.u32 %v2894, 4294901760
    %2896 = vmatpush1.msra.mxu0 %v2895
    %2897 = vmatprep.subr.mxu0 0.0
    %v2898 = vand.u32 %v2410, 4294901760
    %v2899 = vsub.f32 %v2410, %v2898
    %v2900 = vand.u32 %v2899, 4294901760
    %2901 = vmatpush1.msra.mxu0 %v2900
    %2902 = vmatprep.subr.mxu0 0.0
    %v2903 = vand.u32 %v2411, 4294901760
    %v2904 = vsub.f32 %v2411, %v2903
    %v2905 = vand.u32 %v2904, 4294901760
    %2906 = vmatpush1.msra.mxu0 %v2905
    %2907 = vmatprep.subr.mxu0 0.0
    %v2908 = vand.u32 %v2412, 4294901760
    %v2909 = vsub.f32 %v2412, %v2908
    %v2910 = vand.u32 %v2909, 4294901760
    %2911 = vmatpush1.msra.mxu0 %v2910
    %2912 = vmatprep.subr.mxu0 0.0
    %v2913 = vand.u32 %v2413, 4294901760
    %v2914 = vsub.f32 %v2413, %v2913
    %v2915 = vand.u32 %v2914, 4294901760
    %2916 = vmatpush1.msra.mxu0 %v2915
    %2917 = vmatprep.subr.mxu0 0.0
    %v2918 = vand.u32 %v2414, 4294901760
    %v2919 = vsub.f32 %v2414, %v2918
    %v2920 = vand.u32 %v2919, 4294901760
    %2921 = vmatpush1.msra.mxu0 %v2920
    %2922 = vmatprep.subr.mxu0 0.0
    %v2923 = vand.u32 %v2415, 4294901760
    %v2924 = vsub.f32 %v2415, %v2923
    %v2925 = vand.u32 %v2924, 4294901760
    %2926 = vmatpush1.msra.mxu0 %v2925
    %2927 = vmatprep.subr.mxu0 0.0
    %v2928 = vand.u32 %v2416, 4294901760
    %v2929 = vsub.f32 %v2416, %v2928
    %v2930 = vand.u32 %v2929, 4294901760
    %2931 = vmatpush1.msra.mxu0 %v2930
    %2932 = vmatprep.subr.mxu0 0.0
    %2933 = vmatpush1.msra.mxu0 0.0
    %2934 = vmatprep.subr.mxu0 0.0
    %2935 = vmatpush1.msra.mxu0 0.0
    %2936 = vmatprep.subr.mxu0 0.0
    %2937 = vmatpush1.msra.mxu0 0.0
    %2938 = vmatprep.subr.mxu0 0.0
    %2939 = vmatpush1.msra.mxu0 0.0
    %2940 = vmatprep.subr.mxu0 0.0
    %2941 = vmatpush1.msra.mxu0 0.0
    %2942 = vmatprep.subr.mxu0 0.0
    %2943 = vmatpush1.msra.mxu0 0.0
    %2944 = vmatprep.subr.mxu0 0.0
    %2945 = vmatpush1.msra.mxu0 0.0
    %2946 = vmatprep.subr.mxu0 0.0
    %2947 = vmatpush1.msra.mxu0 0.0
    %2948 = vmatprep.subr.mxu0 0.0
    %2949 = vmatpush1.msra.mxu0 0.0
    %2950 = vmatprep.subr.mxu0 0.0
    %2951 = vmatpush1.msra.mxu0 0.0
    %2952 = vmatprep.subr.mxu0 0.0
    %2953 = vmatpush1.msra.mxu0 0.0
    %2954 = vmatprep.subr.mxu0 0.0
    %2955 = vmatpush1.msra.mxu0 0.0
    %2956 = vmatprep.subr.mxu0 0.0
    %2957 = vmatpush1.msra.mxu0 0.0
    %2958 = vmatprep.subr.mxu0 0.0
    %2959 = vmatpush1.msra.mxu0 0.0
    %2960 = vmatprep.subr.mxu0 0.0
    %2961 = vmatpush1.msra.mxu0 0.0
    %2962 = vmatprep.subr.mxu0 0.0
    %2963 = vmatpush1.msra.mxu0 0.0
    %2964 = vmatprep.mubr.f32.mxu0 0.0
    %v2965 = vand.u32 %v2400, 4294901760
    %2966 = vmatmul.mubr.f32.gmra.mrb[0].mxu0 %v2965
    %v2967 = vpop.f32.mrb[0].mxu0
    %v2968 = vadd.f32 %v2849, %v2967
    %v2969 = vpop.f32.mrb[0].mxu0
    %2970 = vdwg.mxu0
    %2971 = vmatprep.subr.mxu0 0.0
    %v2972 = vand.u32 %v2401, 4294901760
    %2973 = vmatpush1.msra.mxu0 %v2972
    %2974 = vmatprep.subr.mxu0 0.0
    %v2975 = vand.u32 %v2402, 4294901760
    %2976 = vmatpush1.msra.mxu0 %v2975
    %2977 = vmatprep.subr.mxu0 0.0
    %v2978 = vand.u32 %v2403, 4294901760
    %2979 = vmatpush1.msra.mxu0 %v2978
    %2980 = vmatprep.subr.mxu0 0.0
    %v2981 = vand.u32 %v2404, 4294901760
    %2982 = vmatpush1.msra.mxu0 %v2981
    %2983 = vmatprep.subr.mxu0 0.0
    %v2984 = vand.u32 %v2405, 4294901760
    %2985 = vmatpush1.msra.mxu0 %v2984
    %2986 = vmatprep.subr.mxu0 0.0
    %v2987 = vand.u32 %v2406, 4294901760
    %2988 = vmatpush1.msra.mxu0 %v2987
    %2989 = vmatprep.subr.mxu0 0.0
    %v2990 = vand.u32 %v2407, 4294901760
    %2991 = vmatpush1.msra.mxu0 %v2990
    %2992 = vmatprep.subr.mxu0 0.0
    %v2993 = vand.u32 %v2408, 4294901760
    %2994 = vmatpush1.msra.mxu0 %v2993
    %2995 = vmatprep.subr.mxu0 0.0
    %v2996 = vand.u32 %v2409, 4294901760
    %2997 = vmatpush1.msra.mxu0 %v2996
    %2998 = vmatprep.subr.mxu0 0.0
    %v2999 = vand.u32 %v2410, 4294901760
    %3000 = vmatpush1.msra.mxu0 %v2999
    %3001 = vmatprep.subr.mxu0 0.0
    %v3002 = vand.u32 %v2411, 4294901760
    %3003 = vmatpush1.msra.mxu0 %v3002
    %3004 = vmatprep.subr.mxu0 0.0
    %v3005 = vand.u32 %v2412, 4294901760
    %3006 = vmatpush1.msra.mxu0 %v3005
    %3007 = vmatprep.subr.mxu0 0.0
    %v3008 = vand.u32 %v2413, 4294901760
    %3009 = vmatpush1.msra.mxu0 %v3008
    %3010 = vmatprep.subr.mxu0 0.0
    %v3011 = vand.u32 %v2414, 4294901760
    %3012 = vmatpush1.msra.mxu0 %v3011
    %3013 = vmatprep.subr.mxu0 0.0
    %v3014 = vand.u32 %v2415, 4294901760
    %3015 = vmatpush1.msra.mxu0 %v3014
    %3016 = vmatprep.subr.mxu0 0.0
    %v3017 = vand.u32 %v2416, 4294901760
    %3018 = vmatpush1.msra.mxu0 %v3017
    %3019 = vmatprep.subr.mxu0 0.0
    %3020 = vmatpush1.msra.mxu0 0.0
    %3021 = vmatprep.subr.mxu0 0.0
    %3022 = vmatpush1.msra.mxu0 0.0
    %3023 = vmatprep.subr.mxu0 0.0
    %3024 = vmatpush1.msra.mxu0 0.0
    %3025 = vmatprep.subr.mxu0 0.0
    %3026 = vmatpush1.msra.mxu0 0.0
    %3027 = vmatprep.subr.mxu0 0.0
    %3028 = vmatpush1.msra.mxu0 0.0
    %3029 = vmatprep.subr.mxu0 0.0
    %3030 = vmatpush1.msra.mxu0 0.0
    %3031 = vmatprep.subr.mxu0 0.0
    %3032 = vmatpush1.msra.mxu0 0.0
    %3033 = vmatprep.subr.mxu0 0.0
    %3034 = vmatpush1.msra.mxu0 0.0
    %3035 = vmatprep.subr.mxu0 0.0
    %3036 = vmatpush1.msra.mxu0 0.0
    %3037 = vmatprep.subr.mxu0 0.0
    %3038 = vmatpush1.msra.mxu0 0.0
    %3039 = vmatprep.subr.mxu0 0.0
    %3040 = vmatpush1.msra.mxu0 0.0
    %3041 = vmatprep.subr.mxu0 0.0
    %3042 = vmatpush1.msra.mxu0 0.0
    %3043 = vmatprep.subr.mxu0 0.0
    %3044 = vmatpush1.msra.mxu0 0.0
    %3045 = vmatprep.subr.mxu0 0.0
    %3046 = vmatpush1.msra.mxu0 0.0
    %3047 = vmatprep.subr.mxu0 0.0
    %3048 = vmatpush1.msra.mxu0 0.0
    %3049 = vmatprep.subr.mxu0 0.0
    %3050 = vmatpush1.msra.mxu0 0.0
    %3051 = vmatprep.mubr.f32.mxu0 0.0
    %v3052 = vand.u32 %v2400, 4294901760
    %3053 = vmatmul.mubr.f32.gmra.mrb[0].mxu0 %v3052
    %v3054 = vpop.f32.mrb[0].mxu0
    %v3055 = vadd.f32 %v2968, %v3054
    %v3056 = vpop.f32.mrb[0].mxu0
    %3057 = vdwg.mxu0
    %v3058 = vadd.f32 %v1066, %v3055
    %3059 = vst [vmem:[%s8] sm:$0xff] %v3058
    // Predicated region
    $region58: #{flnssm_forward.1} parent=1 // pred_check
      _
    $region59: #{flnssm_forward.1} parent=1 // pred_check_branch
      %3061 = sbr.rel (0) target = $region61
    $region60: #{flnssm_forward.1} parent=1 // pred_region
      _
    $region61: #{flnssm_forward.1} parent=1 // pred_fallthru
      _
    // Predicated region
    $region62: #{flnssm_forward.1} parent=1 // pred_check
      _
    $region63: #{flnssm_forward.1} parent=1 // pred_check_branch
      %3063 = sbr.rel (0) target = $region65
    $region64: #{flnssm_forward.1} parent=1 // pred_region
      _
    $region65: #{flnssm_forward.1} parent=1 // pred_fallthru
      _
    %3064 = vsyncpa [#allocation3], 1
    %3065 = vsyncpa [#allocation5], 1
    %3066 = vsyncpa [#allocation8], 1
    %3067 = vsyncpa [#allocation11], 1

</llo_original>
